<compile_context>
chip_gen: v7x
topology: tpu7x:2x2x1
jax: 0.10.0
libtpu: 0.0.40
codegen_flags: <defaults>
</compile_context>

<pallas_src>
import jax
import jax.numpy as jnp
from jax.experimental import pallas as pl
from jax.experimental.pallas import tpu as pltpu

HIDDEN = 2000
IN_SIZE = 1024
OUT_SIZE = 1024
HIDDEN_PAD = 2048          # next multiple of 128 >= HIDDEN
NUM_LAYERS = 7
TN = 1024                  # output-column block width (multiple of 128)


# ----------------------------------------------------------------------------
# Fused 7-layer kernel.  One grid step = (layer l, output-column block j).
# ----------------------------------------------------------------------------
def _net_kernel(x_ref, q_ref, s_ref, b_ref, o_ref, act_ref):
    """Refs:
      x_ref   : (B, K)      f32   padded network input (resident)
      q_ref   : (1, K, TN)  int8  layer-l weight columns [j*TN,(j+1)*TN)
      s_ref   : (1, 1, TN)  f32   per-output-channel dequant scales
      b_ref   : (1, 1, TN)  f32   bias
      o_ref   : (B, TN)     f32   final-layer output columns
      act_ref : (2*NJ,B,TN) f32   ping-pong activation banks (bank = l % 2)
    """
    Bp, tn = o_ref.shape
    K = q_ref.shape[1]
    NJ = K // tn

    l = pl.program_id(0)
    j = pl.program_id(1)
    last = pl.num_programs(0) - 1

    # Load the (padded) network input into activation bank 0, exactly once.
    @pl.when((l == 0) & (j == 0))
    def _():
        for jj in range(NJ):                       # static unroll
            act_ref[jj] = x_ref[:, jj * tn:(jj + 1) * tn]

    rd = (l % 2) * NJ          # bank holding layer-l input activation
    wr = ((l + 1) % 2) * NJ    # bank receiving layer-l output activation

    # y[:, j*tn:(j+1)*tn] = act @ W_l[:, j*tn:(j+1)*tn]
    # int8 weights dequantized to bf16 on-core; MXU dot in bf16, f32 accum.
    acc = None
    for jj in range(NJ):                           # static unrolled K chunks
        a = act_ref[rd + jj].astype(jnp.bfloat16)                     # (B, tn)
        w = q_ref[0, jj * tn:(jj + 1) * tn, :].astype(jnp.bfloat16)   # (tn, tn)
        d = jnp.dot(a, w, preferred_element_type=jnp.float32)
        acc = d if acc is None else acc + d

    r = acc * s_ref[0] + b_ref[0]                  # dequant scale + bias (f32)

    # Next-layer activation always gets tanh; at l == last it is never read,
    # so no conditional select is needed.
    act_ref[wr + j] = jnp.tanh(r)

    # Final layer: no tanh, write straight to HBM output block.
    @pl.when(l == last)
    def _():
        o_ref[...] = r


def _net_pallas(x_pad, qstack, sstack, bstack, *, tn=TN):
    """x_pad: [Bp, K] f32; qstack: [L, K, K] int8; sstack/bstack: [L, 1, K] f32."""
    Bp, K = x_pad.shape
    L = qstack.shape[0]
    assert qstack.shape[1] == qstack.shape[2] == K and K % tn == 0
    NJ = K // tn

    cost = pl.CostEstimate(
        flops=2 * Bp * K * K * L,
        transcendentals=Bp * K * L,
        bytes_accessed=(qstack.size                       # int8 weights
                        + 4 * (sstack.size + bstack.size) # scales + biases
                        + 4 * x_pad.size + 4 * Bp * K),   # input + output
    )

    return pl.pallas_call(
        _net_kernel,
        out_shape=jax.ShapeDtypeStruct((Bp, K), jnp.float32),
        grid_spec=pltpu.PrefetchScalarGridSpec(
            num_scalar_prefetch=0,
            grid=(L, NJ),
            in_specs=[
                pl.BlockSpec((Bp, K), lambda l, j: (0, 0)),        # input: resident
                pl.BlockSpec((1, K, tn), lambda l, j: (l, 0, j)),  # int8 weights
                pl.BlockSpec((1, 1, tn), lambda l, j: (l, 0, j)),  # scales
                pl.BlockSpec((1, 1, tn), lambda l, j: (l, 0, j)),  # biases
            ],
            out_specs=pl.BlockSpec((Bp, tn), lambda l, j: (0, j)),
            scratch_shapes=[pltpu.VMEM((2 * NJ, Bp, tn), jnp.float32)],
        ),
        # Layers are sequential and the j blocks share the activation scratch,
        # so both axes must stay on one core.
        compiler_params=pltpu.CompilerParams(
            dimension_semantics=("arbitrary", "arbitrary"),
        ),
        cost_estimate=cost,
    )(x_pad, qstack, sstack, bstack)


# ----------------------------------------------------------------------------
# Parameter init (mirrors the PyTorch module), padding and int8 quantization.
# ----------------------------------------------------------------------------
def _xavier_uniform(key, fan_in, fan_out, dtype=jnp.float32):
    a = jnp.sqrt(6.0 / (fan_in + fan_out))
    # stored as [in_features, out_features] (transposed vs. PyTorch's [out, in])
    return jax.random.uniform(key, (fan_in, fan_out), dtype, minval=-a, maxval=a)


def _bias_init(key, fan_in, fan_out, dtype=jnp.float32):
    bound = 1.0 / jnp.sqrt(fan_in)
    return jax.random.uniform(key, (fan_out,), dtype, minval=-bound, maxval=bound)


def init_net_params(key):
    layer_dims = [
        (IN_SIZE, HIDDEN),   # il
        (HIDDEN, HIDDEN),    # hidden1..hidden5
        (HIDDEN, HIDDEN),
        (HIDDEN, HIDDEN),
        (HIDDEN, HIDDEN),
        (HIDDEN, HIDDEN),
        (HIDDEN, OUT_SIZE),  # ol
    ]
    params = []
    for fan_in, fan_out in layer_dims:
        key, kw, kb = jax.random.split(key, 3)
        params.append(
            (_xavier_uniform(kw, fan_in, fan_out), _bias_init(kb, fan_in, fan_out))
        )
    return params


def _pad_to(x, axis, target):
    pad = target - x.shape[axis]
    if pad == 0:
        return x
    widths = [(0, 0)] * x.ndim
    widths[axis] = (0, pad)
    return jnp.pad(x, widths)


def _quantize_per_channel(w):
    """Symmetric per-output-channel int8 quantization.  w: [K, N] f32."""
    amax = jnp.max(jnp.abs(w), axis=0, keepdims=True)          # [1, N]
    scale = jnp.where(amax > 0, amax / 127.0, 1.0)             # avoid /0 on padded cols
    q = jnp.clip(jnp.round(w / scale), -127, 127).astype(jnp.int8)
    return q, scale.astype(jnp.float32)


def prepare_params(params):
    """Pad every layer to 2048x2048, quantize to int8, stack for the fused kernel."""
    qs, ss, bs = [], [], []
    for w, b in params:
        w = _pad_to(_pad_to(w, 0, HIDDEN_PAD), 1, HIDDEN_PAD)   # [2048, 2048] f32
        b = _pad_to(b, 0, HIDDEN_PAD)                           # [2048] f32
        q, s = _quantize_per_channel(w)
        qs.append(q)
        ss.append(s)
        bs.append(b.reshape(1, HIDDEN_PAD))
    qstack = jnp.stack(qs)                                      # [7, 2048, 2048] int8
    sstack = jnp.stack(ss)                                      # [7, 1, 2048] f32
    bstack = jnp.stack(bs)                                      # [7, 1, 2048] f32
    return qstack, sstack, bstack


# ----------------------------------------------------------------------------
# Forward pass: a single pallas_call for the whole network.
# ----------------------------------------------------------------------------
@jax.jit
def net_forward(x, qstack, sstack, bstack):
    B, F = x.shape
    Bp = ((B + 7) // 8) * 8                                     # sublane-align batch
    xp = jnp.pad(x, ((0, Bp - B), (0, HIDDEN_PAD - F)))         # zero-pad features
    out = _net_pallas(xp, qstack, sstack, bstack)
    return out[:B, :OUT_SIZE]


# Matched-precision reference (same int8 weights, same bf16 casts, f32 accum).
@jax.jit
def reference_forward(x, qstack, sstack, bstack):
    B, F = x.shape
    h = jnp.pad(x, ((0, 0), (0, HIDDEN_PAD - F)))
    L = qstack.shape[0]
    for i in range(L):
        acc = jnp.dot(h.astype(jnp.bfloat16),
                      qstack[i].astype(jnp.bfloat16),
                      preferred_element_type=jnp.float32)
        r = acc * sstack[i] + bstack[i]
        h = jnp.tanh(r) if i < L - 1 else r
    return h[:, :OUT_SIZE]


if __name__ == "__main__":
    key = jax.random.PRNGKey(0)
    k_params, k_x = jax.random.split(key)

    params = init_net_params(k_params)
    qstack, sstack, bstack = prepare_params(params)

    B = 8  # small batch; feature dims are fixed by the module (1024 / 2000 / 1024)
    x = jax.random.normal(k_x, (B, IN_SIZE), jnp.float32)

    out = net_forward(x, qstack, sstack, bstack)
    jax.block_until_ready(out)
    assert out.shape == (B, OUT_SIZE), out.shape

    ref = reference_forward(x, qstack, sstack, bstack)
    jax.block_until_ready(ref)
    assert jnp.allclose(out, ref, atol=1e-2, rtol=1e-2), float(
        jnp.max(jnp.abs(out - ref))
    )

    print("KERNEL_OK")
</pallas_src>

<mosaic_0001>
module attributes {stable_mosaic.version = 11 : i64} {
  func.func @_net_kernel(%arg0: i32, %arg1: i32, %arg2: memref<8x2048xf32, #tpu.memory_space<vmem>>, %arg3: memref<1x2048x1024xi8, #tpu.memory_space<vmem>>, %arg4: memref<1x1x1024xf32, #tpu.memory_space<vmem>>, %arg5: memref<1x1x1024xf32, #tpu.memory_space<vmem>>, %arg6: memref<8x1024xf32, #tpu.memory_space<vmem>>, %arg7: memref<4x8x1024xf32, #tpu.memory_space<vmem>>) attributes {dimension_semantics = [#tpu.dimension_semantics<arbitrary>, #tpu.dimension_semantics<arbitrary>], iteration_bounds = array<i64: 7, 2>, scalar_prefetch = 0 : i64, scratch_operands = 1 : i64, tpu.core_type = #tpu.core_type<tc>, window_params = [{pipeline_mode = #tpu.pipeline_mode<synchronous>, transform_indices = @transform_0, window_bounds = array<i64: 8, 2048>}, {transform_indices = @transform_1, window_bounds = array<i64: 1, 2048, 1024>}, {transform_indices = @transform_2, window_bounds = array<i64: 1, 1, 1024>}, {transform_indices = @transform_3, window_bounds = array<i64: 1, 1, 1024>}, {transform_indices = @transform_4, window_bounds = array<i64: 8, 1024>}]} {
    %c0_i32 = arith.constant 0 : i32
    %0 = arith.cmpi eq, %arg0, %c0_i32 : i32
    %c0_i32_0 = arith.constant 0 : i32
    %1 = arith.cmpi eq, %arg1, %c0_i32_0 : i32
    %2 = arith.andi %0, %1 : i1
    %3 = arith.extui %2 : i1 to i32
    %c0_i32_1 = arith.constant 0 : i32
    %4 = arith.cmpi ne, %3, %c0_i32_1 : i32
    scf.if %4 {
      %c0_35 = arith.constant 0 : index
      %c0_36 = arith.constant 0 : index
      %64 = vector.load %arg2[%c0_35, %c0_36] : memref<8x2048xf32, #tpu.memory_space<vmem>>, vector<8x1024xf32>
      %c0_37 = arith.constant 0 : index
      %c0_38 = arith.constant 0 : index
      %c0_39 = arith.constant 0 : index
      %65 = vector.load %arg7[%c0_37, %c0_38, %c0_39] : memref<4x8x1024xf32, #tpu.memory_space<vmem>>, vector<1x8x1024xf32>
      %66 = vector.shape_cast %65 : vector<1x8x1024xf32> to vector<8x1024xf32>
      %67 = vector.shape_cast %64 : vector<8x1024xf32> to vector<1x8x1024xf32>
      tpu.vector_store %arg7[%c0_37, %c0_38, %c0_39], %67 {strides = array<i32>} : memref<4x8x1024xf32, #tpu.memory_space<vmem>>, vector<1x8x1024xf32>,
      %c0_40 = arith.constant 0 : index
      %c1024_41 = arith.constant 1024 : index
      %68 = vector.load %arg2[%c0_40, %c1024_41] : memref<8x2048xf32, #tpu.memory_space<vmem>>, vector<8x1024xf32>
      %c1 = arith.constant 1 : index
      %c0_42 = arith.constant 0 : index
      %c0_43 = arith.constant 0 : index
      %69 = vector.load %arg7[%c1, %c0_42, %c0_43] : memref<4x8x1024xf32, #tpu.memory_space<vmem>>, vector<1x8x1024xf32>
      %70 = vector.shape_cast %69 : vector<1x8x1024xf32> to vector<8x1024xf32>
      %71 = vector.shape_cast %68 : vector<8x1024xf32> to vector<1x8x1024xf32>
      tpu.vector_store %arg7[%c1, %c0_42, %c0_43], %71 {strides = array<i32>} : memref<4x8x1024xf32, #tpu.memory_space<vmem>>, vector<1x8x1024xf32>,
    } else {
    }
    %c2_i32 = arith.constant 2 : i32
    %c0_i32_2 = arith.constant 0 : i32
    %5 = arith.cmpi eq, %c2_i32, %c0_i32_2 : i32
    %c1_i32 = arith.constant 1 : i32
    %6 = arith.select %5, %c1_i32, %c2_i32 : i32
    %7 = arith.remsi %arg0, %6 : i32
    %c0_i32_3 = arith.constant 0 : i32
    %8 = arith.cmpi ne, %7, %c0_i32_3 : i32
    %c0_i32_4 = arith.constant 0 : i32
    %9 = arith.cmpi slt, %7, %c0_i32_4 : i32
    %c0_i32_5 = arith.constant 0 : i32
    %10 = arith.cmpi slt, %6, %c0_i32_5 : i32
    %11 = arith.xori %9, %10 : i1
    %12 = arith.andi %11, %8 : i1
    %13 = arith.addi %7, %6 : i32
    %14 = arith.select %12, %13, %7 : i32
    %c2_i32_6 = arith.constant 2 : i32
    %15 = arith.muli %14, %c2_i32_6 : i32
    %c1_i32_7 = arith.constant 1 : i32
    %16 = arith.addi %arg0, %c1_i32_7 : i32
    %c2_i32_8 = arith.constant 2 : i32
    %c0_i32_9 = arith.constant 0 : i32
    %17 = arith.cmpi eq, %c2_i32_8, %c0_i32_9 : i32
    %c1_i32_10 = arith.constant 1 : i32
    %18 = arith.select %17, %c1_i32_10, %c2_i32_8 : i32
    %19 = arith.remsi %16, %18 : i32
    %c0_i32_11 = arith.constant 0 : i32
    %20 = arith.cmpi ne, %19, %c0_i32_11 : i32
    %c0_i32_12 = arith.constant 0 : i32
    %21 = arith.cmpi slt, %19, %c0_i32_12 : i32
    %c0_i32_13 = arith.constant 0 : i32
    %22 = arith.cmpi slt, %18, %c0_i32_13 : i32
    %23 = arith.xori %21, %22 : i1
    %24 = arith.andi %23, %20 : i1
    %25 = arith.addi %19, %18 : i32
    %26 = arith.select %24, %25, %19 : i32
    %c2_i32_14 = arith.constant 2 : i32
    %27 = arith.muli %26, %c2_i32_14 : i32
    %c0_i32_15 = arith.constant 0 : i32
    %28 = arith.addi %15, %c0_i32_15 : i32
    %29 = arith.index_cast %28 : i32 to index
    %c0 = arith.constant 0 : index
    %c0_16 = arith.constant 0 : index
    %30 = vector.load %arg7[%29, %c0, %c0_16] : memref<4x8x1024xf32, #tpu.memory_space<vmem>>, vector<1x8x1024xf32>
    %31 = vector.shape_cast %30 : vector<1x8x1024xf32> to vector<8x1024xf32>
    %32 = arith.truncf %31 : vector<8x1024xf32> to vector<8x1024xbf16>
    %c0_17 = arith.constant 0 : index
    %c0_18 = arith.constant 0 : index
    %c0_19 = arith.constant 0 : index
    %33 = vector.load %arg3[%c0_17, %c0_18, %c0_19] : memref<1x2048x1024xi8, #tpu.memory_space<vmem>>, vector<1x1024x1024xi8>
    %34 = vector.shape_cast %33 : vector<1x1024x1024xi8> to vector<1024x1024xi8>
    %35 = arith.sitofp %34 : vector<1024x1024xi8> to vector<1024x1024xbf16>
    %cst = arith.constant dense<0.000000e+00> : vector<8x1024xf32>
    %36 = tpu.matmul %32, %35, %cst {dimension_numbers = #tpu.dot_dimension_numbers<[1], [0], [0], [1], [0, 0, 1, 1], [], []>} : vector<8x1024xbf16>, vector<1024x1024xbf16>, vector<8x1024xf32> -> vector<8x1024xf32>
    %c1_i32_20 = arith.constant 1 : i32
    %37 = arith.addi %15, %c1_i32_20 : i32
    %38 = arith.index_cast %37 : i32 to index
    %c0_21 = arith.constant 0 : index
    %c0_22 = arith.constant 0 : index
    %39 = vector.load %arg7[%38, %c0_21, %c0_22] : memref<4x8x1024xf32, #tpu.memory_space<vmem>>, vector<1x8x1024xf32>
    %40 = vector.shape_cast %39 : vector<1x8x1024xf32> to vector<8x1024xf32>
    %41 = arith.truncf %40 : vector<8x1024xf32> to vector<8x1024xbf16>
    %c0_23 = arith.constant 0 : index
    %c1024 = arith.constant 1024 : index
    %c0_24 = arith.constant 0 : index
    %42 = vector.load %arg3[%c0_23, %c1024, %c0_24] : memref<1x2048x1024xi8, #tpu.memory_space<vmem>>, vector<1x1024x1024xi8>
    %43 = vector.shape_cast %42 : vector<1x1024x1024xi8> to vector<1024x1024xi8>
    %44 = arith.sitofp %43 : vector<1024x1024xi8> to vector<1024x1024xbf16>
    %cst_25 = arith.constant dense<0.000000e+00> : vector<8x1024xf32>
    %45 = tpu.matmul %41, %44, %cst_25 {dimension_numbers = #tpu.dot_dimension_numbers<[1], [0], [0], [1], [0, 0, 1, 1], [], []>} : vector<8x1024xbf16>, vector<1024x1024xbf16>, vector<8x1024xf32> -> vector<8x1024xf32>
    %46 = arith.addf %36, %45 : vector<8x1024xf32>
    %c0_26 = arith.constant 0 : index
    %c0_27 = arith.constant 0 : index
    %c0_28 = arith.constant 0 : index
    %47 = vector.load %arg4[%c0_26, %c0_27, %c0_28] : memref<1x1x1024xf32, #tpu.memory_space<vmem>>, vector<1x1x1024xf32>
    %48 = vector.shape_cast %47 : vector<1x1x1024xf32> to vector<1x1024xf32>
    %49 = vector.broadcast %48 : vector<1x1024xf32> to vector<8x1024xf32>
    %50 = arith.mulf %46, %49 : vector<8x1024xf32>
    %c0_29 = arith.constant 0 : index
    %c0_30 = arith.constant 0 : index
    %c0_31 = arith.constant 0 : index
    %51 = vector.load %arg5[%c0_29, %c0_30, %c0_31] : memref<1x1x1024xf32, #tpu.memory_space<vmem>>, vector<1x1x1024xf32>
    %52 = vector.shape_cast %51 : vector<1x1x1024xf32> to vector<1x1024xf32>
    %53 = vector.broadcast %52 : vector<1x1024xf32> to vector<8x1024xf32>
    %54 = arith.addf %50, %53 : vector<8x1024xf32>
    %55 = math.tanh %54 : vector<8x1024xf32>
    %56 = arith.addi %27, %arg1 : i32
    %57 = arith.index_cast %56 : i32 to index
    %c0_32 = arith.constant 0 : index
    %c0_33 = arith.constant 0 : index
    %58 = vector.load %arg7[%57, %c0_32, %c0_33] : memref<4x8x1024xf32, #tpu.memory_space<vmem>>, vector<1x8x1024xf32>
    %59 = vector.shape_cast %58 : vector<1x8x1024xf32> to vector<8x1024xf32>
    %60 = vector.shape_cast %55 : vector<8x1024xf32> to vector<1x8x1024xf32>
    tpu.vector_store %arg7[%57, %c0_32, %c0_33], %60 {strides = array<i32>} : memref<4x8x1024xf32, #tpu.memory_space<vmem>>, vector<1x8x1024xf32>,
    %c6_i32 = arith.constant 6 : i32
    %61 = arith.cmpi eq, %arg0, %c6_i32 : i32
    %62 = arith.extui %61 : i1 to i32
    %c0_i32_34 = arith.constant 0 : i32
    %63 = arith.cmpi ne, %62, %c0_i32_34 : i32
    scf.if %63 {
      %c0_35 = arith.constant 0 : index
      %c0_36 = arith.constant 0 : index
      %64 = vector.load %arg6[%c0_35, %c0_36] : memref<8x1024xf32, #tpu.memory_space<vmem>>, vector<8x1024xf32>
      tpu.vector_store %arg6[%c0_35, %c0_36], %54 {strides = array<i32>} : memref<8x1024xf32, #tpu.memory_space<vmem>>, vector<8x1024xf32>,
    } else {
    }
    return
  }
  func.func @transform_0(%arg0: i32, %arg1: i32) -> (i32, i32) {
    %c0_i32 = arith.constant 0 : i32
    %c0_i32_0 = arith.constant 0 : i32
    %c0_i32_1 = arith.constant 0 : i32
    return %c0_i32, %c0_i32_0 : i32, i32
  }
  func.func @transform_1(%arg0: i32, %arg1: i32) -> (i32, i32, i32) {
    %c0_i32 = arith.constant 0 : i32
    %c0_i32_0 = arith.constant 0 : i32
    return %arg0, %c0_i32, %arg1 : i32, i32, i32
  }
  func.func @transform_2(%arg0: i32, %arg1: i32) -> (i32, i32, i32) {
    %c0_i32 = arith.constant 0 : i32
    %c0_i32_0 = arith.constant 0 : i32
    return %arg0, %c0_i32, %arg1 : i32, i32, i32
  }
  func.func @transform_3(%arg0: i32, %arg1: i32) -> (i32, i32, i32) {
    %c0_i32 = arith.constant 0 : i32
    %c0_i32_0 = arith.constant 0 : i32
    return %arg0, %c0_i32, %arg1 : i32, i32, i32
  }
  func.func @transform_4(%arg0: i32, %arg1: i32) -> (i32, i32) {
    %c0_i32 = arith.constant 0 : i32
    %c0_i32_0 = arith.constant 0 : i32
    return %c0_i32, %arg1 : i32, i32
  }
}

</mosaic_0001>

<llo_original>
// kernel: net_forward.1
$region0: #{net_forward.1}
  #allocation0 [shape = 'u32[]', space=smem, size = 0x4, offset = 0x4, fixed_abs, tag = 'smem constant byte address 0x4 - core index']
  #allocation1 [shape = 'u32[144,128]{1,0:T(1,128)}', space=vmem, size = 0x12000, scoped, tag = 'internal scratch']
  #allocation2 [shape = 'f32[4,8,1024]{2,1,0:T(8,128)}', space=vmem, size = 0x20000, scoped, tag = 'scratch operand']
  %s0 = inlined_call_operand.vmem [shape: f32[8,2048], index: 0, kind: input, shape index: {}]
  %s1 = inlined_call_operand.hbm [shape: s8[7,2048,2048], index: 1, kind: input, shape index: {}]
  %s2 = inlined_call_operand.hbm [shape: f32[7,1,2048], index: 2, kind: input, shape index: {}]
  %s3 = inlined_call_operand.hbm [shape: f32[7,1,2048], index: 3, kind: input, shape index: {}]
  %s4 = inlined_call_operand.vmem [shape: f32[8,2048], index: 4, kind: output, shape index: {}]
  %s5 = sld [smem:[#allocation0]]
  $region69: #{net_forward.1} parent=0
    _
  %s7 = ssub.s32 1, %s5
  %s8 = scalar_select 0, %s7, %s5
  $region1: #{net_forward.1} parent=0
    #allocation3 [shape = 'u8[4194304]{0}', space=vmem, size = 0x400000, scoped, tag = 'input window, operand 1']
    #allocation4 [shape = 's32[2]{0}', space=sflag, size = 0x8, scoped, tag = 'scoped memory for net_forward.1']
    #allocation5 [shape = 'u8[8192]{0}', space=vmem, size = 0x2000, scoped, tag = 'input window, operand 2']
    #allocation6 [shape = 's32[2]{0}', space=sflag, size = 0x8, scoped, tag = 'scoped memory for net_forward.1']
    #allocation7 [shape = 'u8[8192]{0}', space=vmem, size = 0x2000, scoped, tag = 'input window, operand 3']
    %9 = vsyncpa [#allocation4], 0
    %s10 = scalar_lea.sflag [#allocation4], 1
    %11 = vsyncpa %s10, 0
    %12 = vsyncpa [#allocation6], 0
    %s13 = scalar_lea.sflag [#allocation6], 1
    %14 = vsyncpa %s13, 0
    loop: start=0, step=1, limit=16
    $region2: #{net_forward.1} parent=1 // loop_pre_header
      _
    $region3: #{net_forward.1} parent=1 // loop_header
      %s16 = sphi 0, %s20
      %p17 = scmp.ge.s32.totalorder %s16, 16
      %s23 = sphi 0, %s35
      %s24 = sphi 0, %s31
      %s25 = sphi 0, %s23
      %s26 = sphi 0, %s24
      %s27 = sphi 0, %s25
      %s28 = sphi 0, %s26
      %s36 = sphi 0, %s36
      %s38 = sphi 0, %s36
      %s39 = sphi 0, %s38
      %s53 = sphi 0, %s39
      %s61 = sphi 0, %s63
      %s64 = sphi 0, %s61
      %s65 = sphi 0, %s64
      %s81 = sphi 0, %s65
      %s89 = sphi 0, %s91
      %s92 = sphi 0, %s89
      %s93 = sphi 0, %s92
      %s109 = sphi 0, %s93
      %s117 = sphi 0, %s119
      %s120 = sphi 0, %s117
      %s121 = sphi 0, %s120
      %s137 = sphi 0, %s121
      %s143 = sphi 0, %s145
      %s146 = sphi 0, %s143
      %s147 = sphi 0, %s146
      %s163 = sphi 0, %s147
    $region4: #{net_forward.1} parent=1 // loop_header_branch
      %19 = sbr.rel (%p17) target = $region8
    $region5: #{net_forward.1} parent=1 // loop_body
      %s21 = ssub.s32 %s16, 1
      %s22 = ssub.s32 %s16, 2
      %s29 = sadd.s32 1, %s24
      %p30 = scmp.ge.s32.totalorder %s29, 2
      %s31 = scalar_select %p30, 0, %s29
      %s32 = sadd.s32 1, %s23
      %s33 = scalar_select %p30, %s32, %s23
      %p34 = scmp.ge.s32.totalorder %s33, 7
      %s35 = scalar_select %p34, 0, %s33
      %s37 = sadd.s32 %s36, 1
      %p40 = scmp.eq.s32.totalorder %s16, 13
      %p41 = scmp.ne.s32.totalorder %s36, %s38
      %p42 = scmp.eq.s32.totalorder %s16, 0
      %p43 = por %p41, %p42
      %p44 = scmp.ne.s32.totalorder %s36, %s38
      %p45 = scmp.eq.s32.totalorder %s21, 13
      %p46 = por %p44, %p45
      %p47 = scmp.ne.s32.totalorder %s38, %s39
      %p48 = scmp.eq.s32.totalorder %s21, 0
      %p49 = por %p47, %p48
      %p50 = scmp.ne.s32.totalorder %s38, %s39
      %p51 = scmp.eq.s32.totalorder %s22, 13
      %p52 = por %p50, %p51
      %p54 = scmp.ne.s32.totalorder %s39, %s53
      %p55 = scmp.eq.s32.totalorder %s22, 0
      %p56 = por %p54, %p55
      %s57 = ssub.s32 %s23, %s35
      %s58 = ssub.s32 %s24, %s31
      %s59 = sor.u32 %s57, %s58
      %p60 = scmp.eq.s32.totalorder %s59, 0
      %s62 = sadd.s32 %s61, 1
      %s63 = scalar_select %p60, %s61, %s62
      %p66 = pneg %p60
      %p67 = scmp.eq.s32.totalorder %s16, 13
      %p68 = por %p66, %p67
      %p69 = scmp.ne.s32.totalorder %s61, %s64
      %p70 = scmp.eq.s32.totalorder %s16, 0
      %p71 = por %p69, %p70
      %p72 = scmp.ne.s32.totalorder %s61, %s64
      %p73 = scmp.eq.s32.totalorder %s21, 13
      %p74 = por %p72, %p73
      %p75 = scmp.ne.s32.totalorder %s64, %s65
      %p76 = scmp.eq.s32.totalorder %s21, 0
      %p77 = por %p75, %p76
      %p78 = scmp.ne.s32.totalorder %s64, %s65
      %p79 = scmp.eq.s32.totalorder %s22, 13
      %p80 = por %p78, %p79
      %p82 = scmp.ne.s32.totalorder %s65, %s81
      %p83 = scmp.eq.s32.totalorder %s22, 0
      %p84 = por %p82, %p83
      %s85 = ssub.s32 %s23, %s35
      %s86 = ssub.s32 %s24, %s31
      %s87 = sor.u32 %s85, %s86
      %p88 = scmp.eq.s32.totalorder %s87, 0
      %s90 = sadd.s32 %s89, 1
      %s91 = scalar_select %p88, %s89, %s90
      %p94 = pneg %p88
      %p95 = scmp.eq.s32.totalorder %s16, 13
      %p96 = por %p94, %p95
      %p97 = scmp.ne.s32.totalorder %s89, %s92
      %p98 = scmp.eq.s32.totalorder %s16, 0
      %p99 = por %p97, %p98
      %p100 = scmp.ne.s32.totalorder %s89, %s92
      %p101 = scmp.eq.s32.totalorder %s21, 13
      %p102 = por %p100, %p101
      %p103 = scmp.ne.s32.totalorder %s92, %s93
      %p104 = scmp.eq.s32.totalorder %s21, 0
      %p105 = por %p103, %p104
      %p106 = scmp.ne.s32.totalorder %s92, %s93
      %p107 = scmp.eq.s32.totalorder %s22, 13
      %p108 = por %p106, %p107
      %p110 = scmp.ne.s32.totalorder %s93, %s109
      %p111 = scmp.eq.s32.totalorder %s22, 0
      %p112 = por %p110, %p111
      %s113 = ssub.s32 %s23, %s35
      %s114 = ssub.s32 %s24, %s31
      %s115 = sor.u32 %s113, %s114
      %p116 = scmp.eq.s32.totalorder %s115, 0
      %s118 = sadd.s32 %s117, 1
      %s119 = scalar_select %p116, %s117, %s118
      %p122 = pneg %p116
      %p123 = scmp.eq.s32.totalorder %s16, 13
      %p124 = por %p122, %p123
      %p125 = scmp.ne.s32.totalorder %s117, %s120
      %p126 = scmp.eq.s32.totalorder %s16, 0
      %p127 = por %p125, %p126
      %p128 = scmp.ne.s32.totalorder %s117, %s120
      %p129 = scmp.eq.s32.totalorder %s21, 13
      %p130 = por %p128, %p129
      %p131 = scmp.ne.s32.totalorder %s120, %s121
      %p132 = scmp.eq.s32.totalorder %s21, 0
      %p133 = por %p131, %p132
      %p134 = scmp.ne.s32.totalorder %s120, %s121
      %p135 = scmp.eq.s32.totalorder %s22, 13
      %p136 = por %p134, %p135
      %p138 = scmp.ne.s32.totalorder %s121, %s137
      %p139 = scmp.eq.s32.totalorder %s22, 0
      %p140 = por %p138, %p139
      %s141 = ssub.s32 %s24, %s31
      %p142 = scmp.eq.s32.totalorder %s141, 0
      %s144 = sadd.s32 %s143, 1
      %s145 = scalar_select %p142, %s143, %s144
      %p148 = pneg %p142
      %p149 = scmp.eq.s32.totalorder %s16, 13
      %p150 = por %p148, %p149
      %p151 = scmp.ne.s32.totalorder %s143, %s146
      %p152 = scmp.eq.s32.totalorder %s16, 0
      %p153 = por %p151, %p152
      %p154 = scmp.ne.s32.totalorder %s143, %s146
      %p155 = scmp.eq.s32.totalorder %s21, 13
      %p156 = por %p154, %p155
      %p157 = scmp.ne.s32.totalorder %s146, %s147
      %p158 = scmp.eq.s32.totalorder %s21, 0
      %p159 = por %p157, %p158
      %p160 = scmp.ne.s32.totalorder %s146, %s147
      %p161 = scmp.eq.s32.totalorder %s22, 13
      %p162 = por %p160, %p161
      %p164 = scmp.ne.s32.totalorder %s147, %s163
      %p165 = scmp.eq.s32.totalorder %s22, 0
      %p166 = por %p164, %p165
      %p167 = scmp.le.s32.totalorder 1, %s16
      %p168 = scmp.lt.s32.totalorder %s16, 15
      %p169 = pnand %p167, %p168
      %p170 = pneg %p169
      // Predicated region
      $region9: #{net_forward.1} parent=5 // pred_check
        _
      $region10: #{net_forward.1} parent=5 // pred_check_branch
        %172 = sbr.rel (%p169) target = $region12
      $region11: #{net_forward.1} parent=5 // pred_region
        %s173 = ssub.s32 %s16, 1
        // Predicated region
        $region13: #{net_forward.1} parent=11 // pred_check
          %p174 = pneg %p49
        $region14: #{net_forward.1} parent=11 // pred_check_branch
          %176 = sbr.rel (%p174) target = $region16
        $region15: #{net_forward.1} parent=11 // pred_region
          _
        $region16: #{net_forward.1} parent=11 // pred_fallthru
          _
      $region12: #{net_forward.1} parent=5 // pred_fallthru
        _
      %p177 = scmp.lt.s32.totalorder %s16, 14
      // Predicated region
      $region17: #{net_forward.1} parent=5 // pred_check
        %p178 = pneg %p177
      $region18: #{net_forward.1} parent=5 // pred_check_branch
        %180 = sbr.rel (%p178) target = $region20
      $region19: #{net_forward.1} parent=5 // pred_region
        // Predicated region
        $region21: #{net_forward.1} parent=19 // pred_check
          %p181 = pneg %p71
        $region22: #{net_forward.1} parent=19 // pred_check_branch
          %183 = sbr.rel (%p181) target = $region24
        $region23: #{net_forward.1} parent=19 // pred_region
          %s184 = sand.u32 %s61, 1
          %s185 = scalar_lea.sflag [#allocation4], %s184
          %s186 = sand.u32 %s61, 1
          %s187 = smul.addr %s186, 4096
          %s188 = scalar_lea.vmem [#allocation3], %s187
          %s189 = smul.u32 8, %s24
          %s191 = ssub.s32 65536, 65536
          %192 = vsyncadd %s185, %s191
          %s193 = smul.addr %s23, 1024
          %s194 = sadd.s32 %s189, %s193
          %s195 = smul.addr %s194, 128
          %s196 = scalar_lea.hbm %s1, %s195
          %s197 = sshll.u32 %s188, 4
          %s198 = int_to_ptr.vmem [resolvable:$true] %s197
          %203 = dma.hbm_to_vmem [thread:$0]  %s196, 65536, %s198, %s185, 2048, 1024, 64
        $region24: #{net_forward.1} parent=19 // pred_fallthru
          _
        // Predicated region
        $region25: #{net_forward.1} parent=19 // pred_check
          %p204 = pneg %p99
        $region26: #{net_forward.1} parent=19 // pred_check_branch
          %206 = sbr.rel (%p204) target = $region28
        $region27: #{net_forward.1} parent=19 // pred_region
          %s207 = sand.u32 %s16, 1
          %s208 = scalar_lea.sflag [#allocation6], %s207
          %s209 = sand.u32 %s89, 1
          %s210 = smul.addr %s209, 8
          %s211 = scalar_lea.vmem [#allocation5], %s210
          %s212 = smul.u32 8, %s24
          %s214 = ssub.s32 128, 128
          %215 = vsyncadd %s208, %s214
          %s216 = smul.addr %s23, 16
          %s217 = sadd.s32 %s212, %s216
          %s218 = smul.addr %s217, 16
          %s219 = scalar_lea.hbm %s2, %s218
          %s221 = sshll.u32 %s211, 4
          %s222 = int_to_ptr.vmem [resolvable:$true] %s221
          %224 = dma.hbm_to_vmem [thread:$0]  %s219, 128, %s222, %s208
        $region28: #{net_forward.1} parent=19 // pred_fallthru
          _
        // Predicated region
        $region29: #{net_forward.1} parent=19 // pred_check
          %p225 = pneg %p127
        $region30: #{net_forward.1} parent=19 // pred_check_branch
          %227 = sbr.rel (%p225) target = $region32
        $region31: #{net_forward.1} parent=19 // pred_region
          %s228 = sand.u32 %s16, 1
          %s229 = scalar_lea.sflag [#allocation6], %s228
          %s230 = sand.u32 %s117, 1
          %s231 = smul.addr %s230, 8
          %s232 = scalar_lea.vmem [#allocation7], %s231
          %s233 = smul.u32 8, %s24
          %s235 = ssub.s32 128, 128
          %236 = vsyncadd %s229, %s235
          %s237 = smul.addr %s23, 16
          %s238 = sadd.s32 %s233, %s237
          %s239 = smul.addr %s238, 16
          %s240 = scalar_lea.hbm %s3, %s239
          %s242 = sshll.u32 %s232, 4
          %s243 = int_to_ptr.vmem [resolvable:$true] %s242
          %245 = dma.hbm_to_vmem [thread:$0]  %s240, 128, %s243, %s229
        $region32: #{net_forward.1} parent=19 // pred_fallthru
          _
      $region20: #{net_forward.1} parent=5 // pred_fallthru
        _
      %p246 = scmp.le.s32.totalorder 1, %s16
      %p247 = scmp.lt.s32.totalorder %s16, 15
      %p248 = pnand %p246, %p247
      %p249 = pneg %p248
      // Predicated region
      $region33: #{net_forward.1} parent=5 // pred_check
        _
      $region34: #{net_forward.1} parent=5 // pred_check_branch
        %251 = sbr.rel (%p248) target = $region36
      $region35: #{net_forward.1} parent=5 // pred_region
        %s252 = ssub.s32 %s16, 1
        %s253 = sand.u32 %s64, 1
        %s254 = scalar_lea.sflag [#allocation4], %s253
        %s255 = sand.u32 %s64, 1
        %s256 = smul.addr %s255, 4096
        %s257 = scalar_lea.vmem [#allocation3], %s256
        // Predicated region
        $region37: #{net_forward.1} parent=35 // pred_check
          %p258 = pneg %p77
        $region38: #{net_forward.1} parent=35 // pred_check_branch
          %260 = sbr.rel (%p258) target = $region40
        $region39: #{net_forward.1} parent=35 // pred_region
          %261 = dma.done %s254, 65536
        $region40: #{net_forward.1} parent=35 // pred_fallthru
          _
        %s262 = sand.u32 %s21, 1
        %s263 = scalar_lea.sflag [#allocation6], %s262
        %s264 = sand.u32 %s92, 1
        %s265 = smul.addr %s264, 8
        %s266 = scalar_lea.vmem [#allocation5], %s265
        // Predicated region
        $region41: #{net_forward.1} parent=35 // pred_check
          %p267 = pneg %p105
        $region42: #{net_forward.1} parent=35 // pred_check_branch
          %269 = sbr.rel (%p267) target = $region44
        $region43: #{net_forward.1} parent=35 // pred_region
          %270 = dma.done %s263, 128
        $region44: #{net_forward.1} parent=35 // pred_fallthru
          _
        %s271 = sand.u32 %s21, 1
        %s272 = scalar_lea.sflag [#allocation6], %s271
        %s273 = sand.u32 %s120, 1
        %s274 = smul.addr %s273, 8
        %s275 = scalar_lea.vmem [#allocation7], %s274
        // Predicated region
        $region45: #{net_forward.1} parent=35 // pred_check
          %p276 = pneg %p133
        $region46: #{net_forward.1} parent=35 // pred_check_branch
          %278 = sbr.rel (%p276) target = $region48
        $region47: #{net_forward.1} parent=35 // pred_region
          %279 = dma.done %s272, 128
        $region48: #{net_forward.1} parent=35 // pred_fallthru
          _
        %p280 = pneg %p49
        %p281 = pneg %p46
        %s282 = sand.u32 %s64, 1
        %s283 = scalar_lea.sflag [#allocation4], %s282
        %s284 = sand.u32 %s64, 1
        %s285 = smul.addr %s284, 4096
        %s286 = scalar_lea.vmem [#allocation3], %s285
        %p287 = pneg %p77
        %p288 = pneg %p74
        %s289 = sand.u32 %s21, 1
        %s290 = scalar_lea.sflag [#allocation6], %s289
        %s291 = sand.u32 %s92, 1
        %s292 = smul.addr %s291, 8
        %s293 = scalar_lea.vmem [#allocation5], %s292
        %p294 = pneg %p105
        %p295 = pneg %p102
        %s296 = sand.u32 %s21, 1
        %s297 = scalar_lea.sflag [#allocation6], %s296
        %s298 = sand.u32 %s120, 1
        %s299 = smul.addr %s298, 8
        %s300 = scalar_lea.vmem [#allocation7], %s299
        %p301 = pneg %p133
        %p302 = pneg %p130
        %p303 = pneg %p159
        %p304 = pneg %p156
        %s305 = smul.u32 8, %s26
        %p306 = scmp.lt.s32.totalorder %s305, 15
        %s307 = scalar_select %p306, %s305, 15
        %s308 = smul.addr %s307, 8
        %s309 = scalar_lea.vmem %s4, %s308
        %s310 = smul.u32 8, %s26
        %s311 = smul.u32 8, %s26
        %s312 = smul.u32 8, %s26
        %s313 = smul.u32 8, %s26
        %p314 = scmp.lt.s32.totalorder %s313, 15
        %s315 = scalar_select %p314, %s313, 15
        %s316 = smul.addr %s315, 8
        %s317 = scalar_lea.vmem %s4, %s316
        %s318 = smul.u32 8, %s26
        %p319 = scmp.eq.s32.totalorder %s25, 0
        %p320 = scmp.eq.s32.totalorder %s26, 0
        %p321 = pnand %p319, %p320
        %p322 = pneg %p321
        // Predicated region
        $region49: #{net_forward.1} parent=35 // pred_check
          _
        $region50: #{net_forward.1} parent=35 // pred_check_branch
          %324 = sbr.rel (%p321) target = $region52
        $region51: #{net_forward.1} parent=35 // pred_region
          %v325 = vld [vmem:[%s0] sm:$0xff]
          %v326 = vld [vmem:[%s0 + $0x8] sm:$0xff]
          %v327 = vld [vmem:[%s0 + $0x10] sm:$0xff]
          %v328 = vld [vmem:[%s0 + $0x18] sm:$0xff]
          %v329 = vld [vmem:[%s0 + $0x20] sm:$0xff]
          %v330 = vld [vmem:[%s0 + $0x28] sm:$0xff]
          %v331 = vld [vmem:[%s0 + $0x30] sm:$0xff]
          %v332 = vld [vmem:[%s0 + $0x38] sm:$0xff]
          %333 = vst [vmem:[#allocation2] sm:$0xff] %v325
          %334 = vst [vmem:[#allocation2 + $0x8] sm:$0xff] %v326
          %335 = vst [vmem:[#allocation2 + $0x10] sm:$0xff] %v327
          %336 = vst [vmem:[#allocation2 + $0x18] sm:$0xff] %v328
          %337 = vst [vmem:[#allocation2 + $0x20] sm:$0xff] %v329
          %338 = vst [vmem:[#allocation2 + $0x28] sm:$0xff] %v330
          %339 = vst [vmem:[#allocation2 + $0x30] sm:$0xff] %v331
          %340 = vst [vmem:[#allocation2 + $0x38] sm:$0xff] %v332
          %v341 = vld [vmem:[%s0 + $0x40] sm:$0xff]
          %v342 = vld [vmem:[%s0 + $0x48] sm:$0xff]
          %v343 = vld [vmem:[%s0 + $0x50] sm:$0xff]
          %v344 = vld [vmem:[%s0 + $0x58] sm:$0xff]
          %v345 = vld [vmem:[%s0 + $0x60] sm:$0xff]
          %v346 = vld [vmem:[%s0 + $0x68] sm:$0xff]
          %v347 = vld [vmem:[%s0 + $0x70] sm:$0xff]
          %v348 = vld [vmem:[%s0 + $0x78] sm:$0xff]
          %s349 = scalar_lea.vmem [#allocation2], 64
          %350 = vst [vmem:[%s349] sm:$0xff] %v341
          %351 = vst [vmem:[%s349 + $0x8] sm:$0xff] %v342
          %352 = vst [vmem:[%s349 + $0x10] sm:$0xff] %v343
          %353 = vst [vmem:[%s349 + $0x18] sm:$0xff] %v344
          %354 = vst [vmem:[%s349 + $0x20] sm:$0xff] %v345
          %355 = vst [vmem:[%s349 + $0x28] sm:$0xff] %v346
          %356 = vst [vmem:[%s349 + $0x30] sm:$0xff] %v347
          %357 = vst [vmem:[%s349 + $0x38] sm:$0xff] %v348
        $region52: #{net_forward.1} parent=35 // pred_fallthru
          _
        %p358 = scmp.lt.s32.totalorder %s25, 0
        %s359 = ssub.s32 0, %s25
        %s360 = scalar_select %p358, %s359, %s25
        %s361 = sand.u32 %s360, 1
        %s362 = ssub.s32 0, %s361
        %s363 = scalar_select %p358, %s362, %s361
        %p364 = scmp.ne.s32.totalorder %s363, 0
        %p365 = scmp.lt.s32.totalorder %s363, 0
        %p366 = pnand %p365, %p364
        %p367 = pneg %p366
        %s368 = sadd.s32 %s363, 2
        %s369 = scalar_select %p367, %s368, %s363
        %s370 = smul.u32 %s369, 2
        %s371 = sadd.s32 %s25, 1
        %p372 = scmp.lt.s32.totalorder %s371, 0
        %s373 = ssub.s32 0, %s371
        %s374 = scalar_select %p372, %s373, %s371
        %s375 = sand.u32 %s374, 1
        %s376 = ssub.s32 0, %s375
        %s377 = scalar_select %p372, %s376, %s375
        %p378 = scmp.ne.s32.totalorder %s377, 0
        %p379 = scmp.lt.s32.totalorder %s377, 0
        %p380 = pnand %p379, %p378
        %p381 = pneg %p380
        %s382 = sadd.s32 %s377, 2
        %s383 = scalar_select %p381, %s382, %s377
        %s384 = smul.u32 %s383, 2
        %s385 = smul.u32 %s370, 8
        %s386 = smul.addr %s385, 8
        %s387 = scalar_lea.vmem [#allocation2], %s386
        %v388 = vld [vmem:[%s387] sm:$0xff]
        %v389 = vld [vmem:[%s387 + $0x8] sm:$0xff]
        %v390 = vld [vmem:[%s387 + $0x10] sm:$0xff]
        %v391 = vld [vmem:[%s387 + $0x18] sm:$0xff]
        %v392 = vld [vmem:[%s387 + $0x20] sm:$0xff]
        %v393 = vld [vmem:[%s387 + $0x28] sm:$0xff]
        %v394 = vld [vmem:[%s387 + $0x30] sm:$0xff]
        %v395 = vld [vmem:[%s387 + $0x38] sm:$0xff]
        %v396 = vpack.c.bf16 %v388, %v388
        %v397 = vpack.c.bf16 %v389, %v389
        %v398 = vpack.c.bf16 %v390, %v390
        %v399 = vpack.c.bf16 %v391, %v391
        %v400 = vpack.c.bf16 %v392, %v392
        %v401 = vpack.c.bf16 %v393, %v393
        %v402 = vpack.c.bf16 %v394, %v394
        %v403 = vpack.c.bf16 %v395, %v395
        %v404 = vld [vmem:[%s257] sm:$0xff]
        %v405 = vld [vmem:[%s257 + $0x8] sm:$0xff]
        %v406 = vld [vmem:[%s257 + $0x10] sm:$0xff]
        %v407 = vld [vmem:[%s257 + $0x18] sm:$0xff]
        %v408 = vld [vmem:[%s257 + $0x20] sm:$0xff]
        %v409 = vld [vmem:[%s257 + $0x28] sm:$0xff]
        %v410 = vld [vmem:[%s257 + $0x30] sm:$0xff]
        %v411 = vld [vmem:[%s257 + $0x38] sm:$0xff]
        %v412 = vld [vmem:[%s257 + $0x40] sm:$0xff]
        %v413 = vld [vmem:[%s257 + $0x48] sm:$0xff]
        %v414 = vld [vmem:[%s257 + $0x50] sm:$0xff]
        %v415 = vld [vmem:[%s257 + $0x58] sm:$0xff]
        %v416 = vld [vmem:[%s257 + $0x60] sm:$0xff]
        %v417 = vld [vmem:[%s257 + $0x68] sm:$0xff]
        %v418 = vld [vmem:[%s257 + $0x70] sm:$0xff]
        %v419 = vld [vmem:[%s257 + $0x78] sm:$0xff]
        %v420 = vld [vmem:[%s257 + $0x80] sm:$0xff]
        %v421 = vld [vmem:[%s257 + $0x88] sm:$0xff]
        %v422 = vld [vmem:[%s257 + $0x90] sm:$0xff]
        %v423 = vld [vmem:[%s257 + $0x98] sm:$0xff]
        %v424 = vld [vmem:[%s257 + $0xa0] sm:$0xff]
        %v425 = vld [vmem:[%s257 + $0xa8] sm:$0xff]
        %v426 = vld [vmem:[%s257 + $0xb0] sm:$0xff]
        %v427 = vld [vmem:[%s257 + $0xb8] sm:$0xff]
        %v428 = vld [vmem:[%s257 + $0xc0] sm:$0xff]
        %v429 = vld [vmem:[%s257 + $0xc8] sm:$0xff]
        %v430 = vld [vmem:[%s257 + $0xd0] sm:$0xff]
        %v431 = vld [vmem:[%s257 + $0xd8] sm:$0xff]
        %v432 = vld [vmem:[%s257 + $0xe0] sm:$0xff]
        %v433 = vld [vmem:[%s257 + $0xe8] sm:$0xff]
        %v434 = vld [vmem:[%s257 + $0xf0] sm:$0xff]
        %v435 = vld [vmem:[%s257 + $0xf8] sm:$0xff]
        %v436 = vld [vmem:[%s257 + $0x100] sm:$0xff]
        %v437 = vld [vmem:[%s257 + $0x108] sm:$0xff]
        %v438 = vld [vmem:[%s257 + $0x110] sm:$0xff]
        %v439 = vld [vmem:[%s257 + $0x118] sm:$0xff]
        %v440 = vld [vmem:[%s257 + $0x120] sm:$0xff]
        %v441 = vld [vmem:[%s257 + $0x128] sm:$0xff]
        %v442 = vld [vmem:[%s257 + $0x130] sm:$0xff]
        %v443 = vld [vmem:[%s257 + $0x138] sm:$0xff]
        %v444 = vld [vmem:[%s257 + $0x140] sm:$0xff]
        %v445 = vld [vmem:[%s257 + $0x148] sm:$0xff]
        %v446 = vld [vmem:[%s257 + $0x150] sm:$0xff]
        %v447 = vld [vmem:[%s257 + $0x158] sm:$0xff]
        %v448 = vld [vmem:[%s257 + $0x160] sm:$0xff]
        %v449 = vld [vmem:[%s257 + $0x168] sm:$0xff]
        %v450 = vld [vmem:[%s257 + $0x170] sm:$0xff]
        %v451 = vld [vmem:[%s257 + $0x178] sm:$0xff]
        %v452 = vld [vmem:[%s257 + $0x180] sm:$0xff]
        %v453 = vld [vmem:[%s257 + $0x188] sm:$0xff]
        %v454 = vld [vmem:[%s257 + $0x190] sm:$0xff]
        %v455 = vld [vmem:[%s257 + $0x198] sm:$0xff]
        %v456 = vld [vmem:[%s257 + $0x1a0] sm:$0xff]
        %v457 = vld [vmem:[%s257 + $0x1a8] sm:$0xff]
        %v458 = vld [vmem:[%s257 + $0x1b0] sm:$0xff]
        %v459 = vld [vmem:[%s257 + $0x1b8] sm:$0xff]
        %v460 = vld [vmem:[%s257 + $0x1c0] sm:$0xff]
        %v461 = vld [vmem:[%s257 + $0x1c8] sm:$0xff]
        %v462 = vld [vmem:[%s257 + $0x1d0] sm:$0xff]
        %v463 = vld [vmem:[%s257 + $0x1d8] sm:$0xff]
        %v464 = vld [vmem:[%s257 + $0x1e0] sm:$0xff]
        %v465 = vld [vmem:[%s257 + $0x1e8] sm:$0xff]
        %v466 = vld [vmem:[%s257 + $0x1f0] sm:$0xff]
        %v467 = vld [vmem:[%s257 + $0x1f8] sm:$0xff]
        %v468 = vld [vmem:[%s257 + $0x200] sm:$0xff]
        %v469 = vld [vmem:[%s257 + $0x208] sm:$0xff]
        %v470 = vld [vmem:[%s257 + $0x210] sm:$0xff]
        %v471 = vld [vmem:[%s257 + $0x218] sm:$0xff]
        %v472 = vld [vmem:[%s257 + $0x220] sm:$0xff]
        %v473 = vld [vmem:[%s257 + $0x228] sm:$0xff]
        %v474 = vld [vmem:[%s257 + $0x230] sm:$0xff]
        %v475 = vld [vmem:[%s257 + $0x238] sm:$0xff]
        %v476 = vld [vmem:[%s257 + $0x240] sm:$0xff]
        %v477 = vld [vmem:[%s257 + $0x248] sm:$0xff]
        %v478 = vld [vmem:[%s257 + $0x250] sm:$0xff]
        %v479 = vld [vmem:[%s257 + $0x258] sm:$0xff]
        %v480 = vld [vmem:[%s257 + $0x260] sm:$0xff]
        %v481 = vld [vmem:[%s257 + $0x268] sm:$0xff]
        %v482 = vld [vmem:[%s257 + $0x270] sm:$0xff]
        %v483 = vld [vmem:[%s257 + $0x278] sm:$0xff]
        %v484 = vld [vmem:[%s257 + $0x280] sm:$0xff]
        %v485 = vld [vmem:[%s257 + $0x288] sm:$0xff]
        %v486 = vld [vmem:[%s257 + $0x290] sm:$0xff]
        %v487 = vld [vmem:[%s257 + $0x298] sm:$0xff]
        %v488 = vld [vmem:[%s257 + $0x2a0] sm:$0xff]
        %v489 = vld [vmem:[%s257 + $0x2a8] sm:$0xff]
        %v490 = vld [vmem:[%s257 + $0x2b0] sm:$0xff]
        %v491 = vld [vmem:[%s257 + $0x2b8] sm:$0xff]
        %v492 = vld [vmem:[%s257 + $0x2c0] sm:$0xff]
        %v493 = vld [vmem:[%s257 + $0x2c8] sm:$0xff]
        %v494 = vld [vmem:[%s257 + $0x2d0] sm:$0xff]
        %v495 = vld [vmem:[%s257 + $0x2d8] sm:$0xff]
        %v496 = vld [vmem:[%s257 + $0x2e0] sm:$0xff]
        %v497 = vld [vmem:[%s257 + $0x2e8] sm:$0xff]
        %v498 = vld [vmem:[%s257 + $0x2f0] sm:$0xff]
        %v499 = vld [vmem:[%s257 + $0x2f8] sm:$0xff]
        %v500 = vld [vmem:[%s257 + $0x300] sm:$0xff]
        %v501 = vld [vmem:[%s257 + $0x308] sm:$0xff]
        %v502 = vld [vmem:[%s257 + $0x310] sm:$0xff]
        %v503 = vld [vmem:[%s257 + $0x318] sm:$0xff]
        %v504 = vld [vmem:[%s257 + $0x320] sm:$0xff]
        %v505 = vld [vmem:[%s257 + $0x328] sm:$0xff]
        %v506 = vld [vmem:[%s257 + $0x330] sm:$0xff]
        %v507 = vld [vmem:[%s257 + $0x338] sm:$0xff]
        %v508 = vld [vmem:[%s257 + $0x340] sm:$0xff]
        %v509 = vld [vmem:[%s257 + $0x348] sm:$0xff]
        %v510 = vld [vmem:[%s257 + $0x350] sm:$0xff]
        %v511 = vld [vmem:[%s257 + $0x358] sm:$0xff]
        %v512 = vld [vmem:[%s257 + $0x360] sm:$0xff]
        %v513 = vld [vmem:[%s257 + $0x368] sm:$0xff]
        %v514 = vld [vmem:[%s257 + $0x370] sm:$0xff]
        %v515 = vld [vmem:[%s257 + $0x378] sm:$0xff]
        %v516 = vld [vmem:[%s257 + $0x380] sm:$0xff]
        %v517 = vld [vmem:[%s257 + $0x388] sm:$0xff]
        %v518 = vld [vmem:[%s257 + $0x390] sm:$0xff]
        %v519 = vld [vmem:[%s257 + $0x398] sm:$0xff]
        %v520 = vld [vmem:[%s257 + $0x3a0] sm:$0xff]
        %v521 = vld [vmem:[%s257 + $0x3a8] sm:$0xff]
        %v522 = vld [vmem:[%s257 + $0x3b0] sm:$0xff]
        %v523 = vld [vmem:[%s257 + $0x3b8] sm:$0xff]
        %v524 = vld [vmem:[%s257 + $0x3c0] sm:$0xff]
        %v525 = vld [vmem:[%s257 + $0x3c8] sm:$0xff]
        %v526 = vld [vmem:[%s257 + $0x3d0] sm:$0xff]
        %v527 = vld [vmem:[%s257 + $0x3d8] sm:$0xff]
        %v528 = vld [vmem:[%s257 + $0x3e0] sm:$0xff]
        %v529 = vld [vmem:[%s257 + $0x3e8] sm:$0xff]
        %v530 = vld [vmem:[%s257 + $0x3f0] sm:$0xff]
        %v531 = vld [vmem:[%s257 + $0x3f8] sm:$0xff]
        %v532 = vld [vmem:[%s257 + $0x400] sm:$0xff]
        %v533 = vld [vmem:[%s257 + $0x408] sm:$0xff]
        %v534 = vld [vmem:[%s257 + $0x410] sm:$0xff]
        %v535 = vld [vmem:[%s257 + $0x418] sm:$0xff]
        %v536 = vld [vmem:[%s257 + $0x420] sm:$0xff]
        %v537 = vld [vmem:[%s257 + $0x428] sm:$0xff]
        %v538 = vld [vmem:[%s257 + $0x430] sm:$0xff]
        %v539 = vld [vmem:[%s257 + $0x438] sm:$0xff]
        %v540 = vld [vmem:[%s257 + $0x440] sm:$0xff]
        %v541 = vld [vmem:[%s257 + $0x448] sm:$0xff]
        %v542 = vld [vmem:[%s257 + $0x450] sm:$0xff]
        %v543 = vld [vmem:[%s257 + $0x458] sm:$0xff]
        %v544 = vld [vmem:[%s257 + $0x460] sm:$0xff]
        %v545 = vld [vmem:[%s257 + $0x468] sm:$0xff]
        %v546 = vld [vmem:[%s257 + $0x470] sm:$0xff]
        %v547 = vld [vmem:[%s257 + $0x478] sm:$0xff]
        %v548 = vld [vmem:[%s257 + $0x480] sm:$0xff]
        %v549 = vld [vmem:[%s257 + $0x488] sm:$0xff]
        %v550 = vld [vmem:[%s257 + $0x490] sm:$0xff]
        %v551 = vld [vmem:[%s257 + $0x498] sm:$0xff]
        %v552 = vld [vmem:[%s257 + $0x4a0] sm:$0xff]
        %v553 = vld [vmem:[%s257 + $0x4a8] sm:$0xff]
        %v554 = vld [vmem:[%s257 + $0x4b0] sm:$0xff]
        %v555 = vld [vmem:[%s257 + $0x4b8] sm:$0xff]
        %v556 = vld [vmem:[%s257 + $0x4c0] sm:$0xff]
        %v557 = vld [vmem:[%s257 + $0x4c8] sm:$0xff]
        %v558 = vld [vmem:[%s257 + $0x4d0] sm:$0xff]
        %v559 = vld [vmem:[%s257 + $0x4d8] sm:$0xff]
        %v560 = vld [vmem:[%s257 + $0x4e0] sm:$0xff]
        %v561 = vld [vmem:[%s257 + $0x4e8] sm:$0xff]
        %v562 = vld [vmem:[%s257 + $0x4f0] sm:$0xff]
        %v563 = vld [vmem:[%s257 + $0x4f8] sm:$0xff]
        %v564 = vld [vmem:[%s257 + $0x500] sm:$0xff]
        %v565 = vld [vmem:[%s257 + $0x508] sm:$0xff]
        %v566 = vld [vmem:[%s257 + $0x510] sm:$0xff]
        %v567 = vld [vmem:[%s257 + $0x518] sm:$0xff]
        %v568 = vld [vmem:[%s257 + $0x520] sm:$0xff]
        %v569 = vld [vmem:[%s257 + $0x528] sm:$0xff]
        %v570 = vld [vmem:[%s257 + $0x530] sm:$0xff]
        %v571 = vld [vmem:[%s257 + $0x538] sm:$0xff]
        %v572 = vld [vmem:[%s257 + $0x540] sm:$0xff]
        %v573 = vld [vmem:[%s257 + $0x548] sm:$0xff]
        %v574 = vld [vmem:[%s257 + $0x550] sm:$0xff]
        %v575 = vld [vmem:[%s257 + $0x558] sm:$0xff]
        %v576 = vld [vmem:[%s257 + $0x560] sm:$0xff]
        %v577 = vld [vmem:[%s257 + $0x568] sm:$0xff]
        %v578 = vld [vmem:[%s257 + $0x570] sm:$0xff]
        %v579 = vld [vmem:[%s257 + $0x578] sm:$0xff]
        %v580 = vld [vmem:[%s257 + $0x580] sm:$0xff]
        %v581 = vld [vmem:[%s257 + $0x588] sm:$0xff]
        %v582 = vld [vmem:[%s257 + $0x590] sm:$0xff]
        %v583 = vld [vmem:[%s257 + $0x598] sm:$0xff]
        %v584 = vld [vmem:[%s257 + $0x5a0] sm:$0xff]
        %v585 = vld [vmem:[%s257 + $0x5a8] sm:$0xff]
        %v586 = vld [vmem:[%s257 + $0x5b0] sm:$0xff]
        %v587 = vld [vmem:[%s257 + $0x5b8] sm:$0xff]
        %v588 = vld [vmem:[%s257 + $0x5c0] sm:$0xff]
        %v589 = vld [vmem:[%s257 + $0x5c8] sm:$0xff]
        %v590 = vld [vmem:[%s257 + $0x5d0] sm:$0xff]
        %v591 = vld [vmem:[%s257 + $0x5d8] sm:$0xff]
        %v592 = vld [vmem:[%s257 + $0x5e0] sm:$0xff]
        %v593 = vld [vmem:[%s257 + $0x5e8] sm:$0xff]
        %v594 = vld [vmem:[%s257 + $0x5f0] sm:$0xff]
        %v595 = vld [vmem:[%s257 + $0x5f8] sm:$0xff]
        %v596 = vld [vmem:[%s257 + $0x600] sm:$0xff]
        %v597 = vld [vmem:[%s257 + $0x608] sm:$0xff]
        %v598 = vld [vmem:[%s257 + $0x610] sm:$0xff]
        %v599 = vld [vmem:[%s257 + $0x618] sm:$0xff]
        %v600 = vld [vmem:[%s257 + $0x620] sm:$0xff]
        %v601 = vld [vmem:[%s257 + $0x628] sm:$0xff]
        %v602 = vld [vmem:[%s257 + $0x630] sm:$0xff]
        %v603 = vld [vmem:[%s257 + $0x638] sm:$0xff]
        %v604 = vld [vmem:[%s257 + $0x640] sm:$0xff]
        %v605 = vld [vmem:[%s257 + $0x648] sm:$0xff]
        %v606 = vld [vmem:[%s257 + $0x650] sm:$0xff]
        %v607 = vld [vmem:[%s257 + $0x658] sm:$0xff]
        %v608 = vld [vmem:[%s257 + $0x660] sm:$0xff]
        %v609 = vld [vmem:[%s257 + $0x668] sm:$0xff]
        %v610 = vld [vmem:[%s257 + $0x670] sm:$0xff]
        %v611 = vld [vmem:[%s257 + $0x678] sm:$0xff]
        %v612 = vld [vmem:[%s257 + $0x680] sm:$0xff]
        %v613 = vld [vmem:[%s257 + $0x688] sm:$0xff]
        %v614 = vld [vmem:[%s257 + $0x690] sm:$0xff]
        %v615 = vld [vmem:[%s257 + $0x698] sm:$0xff]
        %v616 = vld [vmem:[%s257 + $0x6a0] sm:$0xff]
        %v617 = vld [vmem:[%s257 + $0x6a8] sm:$0xff]
        %v618 = vld [vmem:[%s257 + $0x6b0] sm:$0xff]
        %v619 = vld [vmem:[%s257 + $0x6b8] sm:$0xff]
        %v620 = vld [vmem:[%s257 + $0x6c0] sm:$0xff]
        %v621 = vld [vmem:[%s257 + $0x6c8] sm:$0xff]
        %v622 = vld [vmem:[%s257 + $0x6d0] sm:$0xff]
        %v623 = vld [vmem:[%s257 + $0x6d8] sm:$0xff]
        %v624 = vld [vmem:[%s257 + $0x6e0] sm:$0xff]
        %v625 = vld [vmem:[%s257 + $0x6e8] sm:$0xff]
        %v626 = vld [vmem:[%s257 + $0x6f0] sm:$0xff]
        %v627 = vld [vmem:[%s257 + $0x6f8] sm:$0xff]
        %v628 = vld [vmem:[%s257 + $0x700] sm:$0xff]
        %v629 = vld [vmem:[%s257 + $0x708] sm:$0xff]
        %v630 = vld [vmem:[%s257 + $0x710] sm:$0xff]
        %v631 = vld [vmem:[%s257 + $0x718] sm:$0xff]
        %v632 = vld [vmem:[%s257 + $0x720] sm:$0xff]
        %v633 = vld [vmem:[%s257 + $0x728] sm:$0xff]
        %v634 = vld [vmem:[%s257 + $0x730] sm:$0xff]
        %v635 = vld [vmem:[%s257 + $0x738] sm:$0xff]
        %v636 = vld [vmem:[%s257 + $0x740] sm:$0xff]
        %v637 = vld [vmem:[%s257 + $0x748] sm:$0xff]
        %v638 = vld [vmem:[%s257 + $0x750] sm:$0xff]
        %v639 = vld [vmem:[%s257 + $0x758] sm:$0xff]
        %v640 = vld [vmem:[%s257 + $0x760] sm:$0xff]
        %v641 = vld [vmem:[%s257 + $0x768] sm:$0xff]
        %v642 = vld [vmem:[%s257 + $0x770] sm:$0xff]
        %v643 = vld [vmem:[%s257 + $0x778] sm:$0xff]
        %v644 = vld [vmem:[%s257 + $0x780] sm:$0xff]
        %v645 = vld [vmem:[%s257 + $0x788] sm:$0xff]
        %v646 = vld [vmem:[%s257 + $0x790] sm:$0xff]
        %v647 = vld [vmem:[%s257 + $0x798] sm:$0xff]
        %v648 = vld [vmem:[%s257 + $0x7a0] sm:$0xff]
        %v649 = vld [vmem:[%s257 + $0x7a8] sm:$0xff]
        %v650 = vld [vmem:[%s257 + $0x7b0] sm:$0xff]
        %v651 = vld [vmem:[%s257 + $0x7b8] sm:$0xff]
        %v652 = vld [vmem:[%s257 + $0x7c0] sm:$0xff]
        %v653 = vld [vmem:[%s257 + $0x7c8] sm:$0xff]
        %v654 = vld [vmem:[%s257 + $0x7d0] sm:$0xff]
        %v655 = vld [vmem:[%s257 + $0x7d8] sm:$0xff]
        %v656 = vld [vmem:[%s257 + $0x7e0] sm:$0xff]
        %v657 = vld [vmem:[%s257 + $0x7e8] sm:$0xff]
        %v658 = vld [vmem:[%s257 + $0x7f0] sm:$0xff]
        %v659 = vld [vmem:[%s257 + $0x7f8] sm:$0xff]
        %v660 = vunpack.c.l.s8.bf16 %v404
        %v661 = vunpack.c.l.s8.bf16 %v405
        %v662 = vunpack.c.l.s8.bf16 %v406
        %v663 = vunpack.c.l.s8.bf16 %v407
        %v664 = vunpack.c.l.s8.bf16 %v408
        %v665 = vunpack.c.l.s8.bf16 %v409
        %v666 = vunpack.c.l.s8.bf16 %v410
        %v667 = vunpack.c.l.s8.bf16 %v411
        %v668 = vunpack.c.h.s8.bf16 %v404
        %v669 = vunpack.c.h.s8.bf16 %v405
        %v670 = vunpack.c.h.s8.bf16 %v406
        %v671 = vunpack.c.h.s8.bf16 %v407
        %v672 = vunpack.c.h.s8.bf16 %v408
        %v673 = vunpack.c.h.s8.bf16 %v409
        %v674 = vunpack.c.h.s8.bf16 %v410
        %v675 = vunpack.c.h.s8.bf16 %v411
        %v676 = vunpack.c.l.s8.bf16 %v412
        %v677 = vunpack.c.l.s8.bf16 %v413
        %v678 = vunpack.c.l.s8.bf16 %v414
        %v679 = vunpack.c.l.s8.bf16 %v415
        %v680 = vunpack.c.l.s8.bf16 %v416
        %v681 = vunpack.c.l.s8.bf16 %v417
        %v682 = vunpack.c.l.s8.bf16 %v418
        %v683 = vunpack.c.l.s8.bf16 %v419
        %v684 = vunpack.c.h.s8.bf16 %v412
        %v685 = vunpack.c.h.s8.bf16 %v413
        %v686 = vunpack.c.h.s8.bf16 %v414
        %v687 = vunpack.c.h.s8.bf16 %v415
        %v688 = vunpack.c.h.s8.bf16 %v416
        %v689 = vunpack.c.h.s8.bf16 %v417
        %v690 = vunpack.c.h.s8.bf16 %v418
        %v691 = vunpack.c.h.s8.bf16 %v419
        %v692 = vunpack.c.l.s8.bf16 %v420
        %v693 = vunpack.c.l.s8.bf16 %v421
        %v694 = vunpack.c.l.s8.bf16 %v422
        %v695 = vunpack.c.l.s8.bf16 %v423
        %v696 = vunpack.c.l.s8.bf16 %v424
        %v697 = vunpack.c.l.s8.bf16 %v425
        %v698 = vunpack.c.l.s8.bf16 %v426
        %v699 = vunpack.c.l.s8.bf16 %v427
        %v700 = vunpack.c.h.s8.bf16 %v420
        %v701 = vunpack.c.h.s8.bf16 %v421
        %v702 = vunpack.c.h.s8.bf16 %v422
        %v703 = vunpack.c.h.s8.bf16 %v423
        %v704 = vunpack.c.h.s8.bf16 %v424
        %v705 = vunpack.c.h.s8.bf16 %v425
        %v706 = vunpack.c.h.s8.bf16 %v426
        %v707 = vunpack.c.h.s8.bf16 %v427
        %v708 = vunpack.c.l.s8.bf16 %v428
        %v709 = vunpack.c.l.s8.bf16 %v429
        %v710 = vunpack.c.l.s8.bf16 %v430
        %v711 = vunpack.c.l.s8.bf16 %v431
        %v712 = vunpack.c.l.s8.bf16 %v432
        %v713 = vunpack.c.l.s8.bf16 %v433
        %v714 = vunpack.c.l.s8.bf16 %v434
        %v715 = vunpack.c.l.s8.bf16 %v435
        %v716 = vunpack.c.h.s8.bf16 %v428
        %v717 = vunpack.c.h.s8.bf16 %v429
        %v718 = vunpack.c.h.s8.bf16 %v430
        %v719 = vunpack.c.h.s8.bf16 %v431
        %v720 = vunpack.c.h.s8.bf16 %v432
        %v721 = vunpack.c.h.s8.bf16 %v433
        %v722 = vunpack.c.h.s8.bf16 %v434
        %v723 = vunpack.c.h.s8.bf16 %v435
        %v724 = vunpack.c.l.s8.bf16 %v436
        %v725 = vunpack.c.l.s8.bf16 %v437
        %v726 = vunpack.c.l.s8.bf16 %v438
        %v727 = vunpack.c.l.s8.bf16 %v439
        %v728 = vunpack.c.l.s8.bf16 %v440
        %v729 = vunpack.c.l.s8.bf16 %v441
        %v730 = vunpack.c.l.s8.bf16 %v442
        %v731 = vunpack.c.l.s8.bf16 %v443
        %v732 = vunpack.c.h.s8.bf16 %v436
        %v733 = vunpack.c.h.s8.bf16 %v437
        %v734 = vunpack.c.h.s8.bf16 %v438
        %v735 = vunpack.c.h.s8.bf16 %v439
        %v736 = vunpack.c.h.s8.bf16 %v440
        %v737 = vunpack.c.h.s8.bf16 %v441
        %v738 = vunpack.c.h.s8.bf16 %v442
        %v739 = vunpack.c.h.s8.bf16 %v443
        %v740 = vunpack.c.l.s8.bf16 %v444
        %v741 = vunpack.c.l.s8.bf16 %v445
        %v742 = vunpack.c.l.s8.bf16 %v446
        %v743 = vunpack.c.l.s8.bf16 %v447
        %v744 = vunpack.c.l.s8.bf16 %v448
        %v745 = vunpack.c.l.s8.bf16 %v449
        %v746 = vunpack.c.l.s8.bf16 %v450
        %v747 = vunpack.c.l.s8.bf16 %v451
        %v748 = vunpack.c.h.s8.bf16 %v444
        %v749 = vunpack.c.h.s8.bf16 %v445
        %v750 = vunpack.c.h.s8.bf16 %v446
        %v751 = vunpack.c.h.s8.bf16 %v447
        %v752 = vunpack.c.h.s8.bf16 %v448
        %v753 = vunpack.c.h.s8.bf16 %v449
        %v754 = vunpack.c.h.s8.bf16 %v450
        %v755 = vunpack.c.h.s8.bf16 %v451
        %v756 = vunpack.c.l.s8.bf16 %v452
        %v757 = vunpack.c.l.s8.bf16 %v453
        %v758 = vunpack.c.l.s8.bf16 %v454
        %v759 = vunpack.c.l.s8.bf16 %v455
        %v760 = vunpack.c.l.s8.bf16 %v456
        %v761 = vunpack.c.l.s8.bf16 %v457
        %v762 = vunpack.c.l.s8.bf16 %v458
        %v763 = vunpack.c.l.s8.bf16 %v459
        %v764 = vunpack.c.h.s8.bf16 %v452
        %v765 = vunpack.c.h.s8.bf16 %v453
        %v766 = vunpack.c.h.s8.bf16 %v454
        %v767 = vunpack.c.h.s8.bf16 %v455
        %v768 = vunpack.c.h.s8.bf16 %v456
        %v769 = vunpack.c.h.s8.bf16 %v457
        %v770 = vunpack.c.h.s8.bf16 %v458
        %v771 = vunpack.c.h.s8.bf16 %v459
        %v772 = vunpack.c.l.s8.bf16 %v460
        %v773 = vunpack.c.l.s8.bf16 %v461
        %v774 = vunpack.c.l.s8.bf16 %v462
        %v775 = vunpack.c.l.s8.bf16 %v463
        %v776 = vunpack.c.l.s8.bf16 %v464
        %v777 = vunpack.c.l.s8.bf16 %v465
        %v778 = vunpack.c.l.s8.bf16 %v466
        %v779 = vunpack.c.l.s8.bf16 %v467
        %v780 = vunpack.c.h.s8.bf16 %v460
        %v781 = vunpack.c.h.s8.bf16 %v461
        %v782 = vunpack.c.h.s8.bf16 %v462
        %v783 = vunpack.c.h.s8.bf16 %v463
        %v784 = vunpack.c.h.s8.bf16 %v464
        %v785 = vunpack.c.h.s8.bf16 %v465
        %v786 = vunpack.c.h.s8.bf16 %v466
        %v787 = vunpack.c.h.s8.bf16 %v467
        %v788 = vunpack.c.l.s8.bf16 %v468
        %v789 = vunpack.c.l.s8.bf16 %v469
        %v790 = vunpack.c.l.s8.bf16 %v470
        %v791 = vunpack.c.l.s8.bf16 %v471
        %v792 = vunpack.c.l.s8.bf16 %v472
        %v793 = vunpack.c.l.s8.bf16 %v473
        %v794 = vunpack.c.l.s8.bf16 %v474
        %v795 = vunpack.c.l.s8.bf16 %v475
        %v796 = vunpack.c.h.s8.bf16 %v468
        %v797 = vunpack.c.h.s8.bf16 %v469
        %v798 = vunpack.c.h.s8.bf16 %v470
        %v799 = vunpack.c.h.s8.bf16 %v471
        %v800 = vunpack.c.h.s8.bf16 %v472
        %v801 = vunpack.c.h.s8.bf16 %v473
        %v802 = vunpack.c.h.s8.bf16 %v474
        %v803 = vunpack.c.h.s8.bf16 %v475
        %v804 = vunpack.c.l.s8.bf16 %v476
        %v805 = vunpack.c.l.s8.bf16 %v477
        %v806 = vunpack.c.l.s8.bf16 %v478
        %v807 = vunpack.c.l.s8.bf16 %v479
        %v808 = vunpack.c.l.s8.bf16 %v480
        %v809 = vunpack.c.l.s8.bf16 %v481
        %v810 = vunpack.c.l.s8.bf16 %v482
        %v811 = vunpack.c.l.s8.bf16 %v483
        %v812 = vunpack.c.h.s8.bf16 %v476
        %v813 = vunpack.c.h.s8.bf16 %v477
        %v814 = vunpack.c.h.s8.bf16 %v478
        %v815 = vunpack.c.h.s8.bf16 %v479
        %v816 = vunpack.c.h.s8.bf16 %v480
        %v817 = vunpack.c.h.s8.bf16 %v481
        %v818 = vunpack.c.h.s8.bf16 %v482
        %v819 = vunpack.c.h.s8.bf16 %v483
        %v820 = vunpack.c.l.s8.bf16 %v484
        %v821 = vunpack.c.l.s8.bf16 %v485
        %v822 = vunpack.c.l.s8.bf16 %v486
        %v823 = vunpack.c.l.s8.bf16 %v487
        %v824 = vunpack.c.l.s8.bf16 %v488
        %v825 = vunpack.c.l.s8.bf16 %v489
        %v826 = vunpack.c.l.s8.bf16 %v490
        %v827 = vunpack.c.l.s8.bf16 %v491
        %v828 = vunpack.c.h.s8.bf16 %v484
        %v829 = vunpack.c.h.s8.bf16 %v485
        %v830 = vunpack.c.h.s8.bf16 %v486
        %v831 = vunpack.c.h.s8.bf16 %v487
        %v832 = vunpack.c.h.s8.bf16 %v488
        %v833 = vunpack.c.h.s8.bf16 %v489
        %v834 = vunpack.c.h.s8.bf16 %v490
        %v835 = vunpack.c.h.s8.bf16 %v491
        %v836 = vunpack.c.l.s8.bf16 %v492
        %v837 = vunpack.c.l.s8.bf16 %v493
        %v838 = vunpack.c.l.s8.bf16 %v494
        %v839 = vunpack.c.l.s8.bf16 %v495
        %v840 = vunpack.c.l.s8.bf16 %v496
        %v841 = vunpack.c.l.s8.bf16 %v497
        %v842 = vunpack.c.l.s8.bf16 %v498
        %v843 = vunpack.c.l.s8.bf16 %v499
        %v844 = vunpack.c.h.s8.bf16 %v492
        %v845 = vunpack.c.h.s8.bf16 %v493
        %v846 = vunpack.c.h.s8.bf16 %v494
        %v847 = vunpack.c.h.s8.bf16 %v495
        %v848 = vunpack.c.h.s8.bf16 %v496
        %v849 = vunpack.c.h.s8.bf16 %v497
        %v850 = vunpack.c.h.s8.bf16 %v498
        %v851 = vunpack.c.h.s8.bf16 %v499
        %v852 = vunpack.c.l.s8.bf16 %v500
        %v853 = vunpack.c.l.s8.bf16 %v501
        %v854 = vunpack.c.l.s8.bf16 %v502
        %v855 = vunpack.c.l.s8.bf16 %v503
        %v856 = vunpack.c.l.s8.bf16 %v504
        %v857 = vunpack.c.l.s8.bf16 %v505
        %v858 = vunpack.c.l.s8.bf16 %v506
        %v859 = vunpack.c.l.s8.bf16 %v507
        %v860 = vunpack.c.h.s8.bf16 %v500
        %v861 = vunpack.c.h.s8.bf16 %v501
        %v862 = vunpack.c.h.s8.bf16 %v502
        %v863 = vunpack.c.h.s8.bf16 %v503
        %v864 = vunpack.c.h.s8.bf16 %v504
        %v865 = vunpack.c.h.s8.bf16 %v505
        %v866 = vunpack.c.h.s8.bf16 %v506
        %v867 = vunpack.c.h.s8.bf16 %v507
        %v868 = vunpack.c.l.s8.bf16 %v508
        %v869 = vunpack.c.l.s8.bf16 %v509
        %v870 = vunpack.c.l.s8.bf16 %v510
        %v871 = vunpack.c.l.s8.bf16 %v511
        %v872 = vunpack.c.l.s8.bf16 %v512
        %v873 = vunpack.c.l.s8.bf16 %v513
        %v874 = vunpack.c.l.s8.bf16 %v514
        %v875 = vunpack.c.l.s8.bf16 %v515
        %v876 = vunpack.c.h.s8.bf16 %v508
        %v877 = vunpack.c.h.s8.bf16 %v509
        %v878 = vunpack.c.h.s8.bf16 %v510
        %v879 = vunpack.c.h.s8.bf16 %v511
        %v880 = vunpack.c.h.s8.bf16 %v512
        %v881 = vunpack.c.h.s8.bf16 %v513
        %v882 = vunpack.c.h.s8.bf16 %v514
        %v883 = vunpack.c.h.s8.bf16 %v515
        %v884 = vunpack.c.l.s8.bf16 %v516
        %v885 = vunpack.c.l.s8.bf16 %v517
        %v886 = vunpack.c.l.s8.bf16 %v518
        %v887 = vunpack.c.l.s8.bf16 %v519
        %v888 = vunpack.c.l.s8.bf16 %v520
        %v889 = vunpack.c.l.s8.bf16 %v521
        %v890 = vunpack.c.l.s8.bf16 %v522
        %v891 = vunpack.c.l.s8.bf16 %v523
        %v892 = vunpack.c.h.s8.bf16 %v516
        %v893 = vunpack.c.h.s8.bf16 %v517
        %v894 = vunpack.c.h.s8.bf16 %v518
        %v895 = vunpack.c.h.s8.bf16 %v519
        %v896 = vunpack.c.h.s8.bf16 %v520
        %v897 = vunpack.c.h.s8.bf16 %v521
        %v898 = vunpack.c.h.s8.bf16 %v522
        %v899 = vunpack.c.h.s8.bf16 %v523
        %v900 = vunpack.c.l.s8.bf16 %v524
        %v901 = vunpack.c.l.s8.bf16 %v525
        %v902 = vunpack.c.l.s8.bf16 %v526
        %v903 = vunpack.c.l.s8.bf16 %v527
        %v904 = vunpack.c.l.s8.bf16 %v528
        %v905 = vunpack.c.l.s8.bf16 %v529
        %v906 = vunpack.c.l.s8.bf16 %v530
        %v907 = vunpack.c.l.s8.bf16 %v531
        %v908 = vunpack.c.h.s8.bf16 %v524
        %v909 = vunpack.c.h.s8.bf16 %v525
        %v910 = vunpack.c.h.s8.bf16 %v526
        %v911 = vunpack.c.h.s8.bf16 %v527
        %v912 = vunpack.c.h.s8.bf16 %v528
        %v913 = vunpack.c.h.s8.bf16 %v529
        %v914 = vunpack.c.h.s8.bf16 %v530
        %v915 = vunpack.c.h.s8.bf16 %v531
        %v916 = vunpack.c.l.s8.bf16 %v532
        %v917 = vunpack.c.l.s8.bf16 %v533
        %v918 = vunpack.c.l.s8.bf16 %v534
        %v919 = vunpack.c.l.s8.bf16 %v535
        %v920 = vunpack.c.l.s8.bf16 %v536
        %v921 = vunpack.c.l.s8.bf16 %v537
        %v922 = vunpack.c.l.s8.bf16 %v538
        %v923 = vunpack.c.l.s8.bf16 %v539
        %v924 = vunpack.c.h.s8.bf16 %v532
        %v925 = vunpack.c.h.s8.bf16 %v533
        %v926 = vunpack.c.h.s8.bf16 %v534
        %v927 = vunpack.c.h.s8.bf16 %v535
        %v928 = vunpack.c.h.s8.bf16 %v536
        %v929 = vunpack.c.h.s8.bf16 %v537
        %v930 = vunpack.c.h.s8.bf16 %v538
        %v931 = vunpack.c.h.s8.bf16 %v539
        %v932 = vunpack.c.l.s8.bf16 %v540
        %v933 = vunpack.c.l.s8.bf16 %v541
        %v934 = vunpack.c.l.s8.bf16 %v542
        %v935 = vunpack.c.l.s8.bf16 %v543
        %v936 = vunpack.c.l.s8.bf16 %v544
        %v937 = vunpack.c.l.s8.bf16 %v545
        %v938 = vunpack.c.l.s8.bf16 %v546
        %v939 = vunpack.c.l.s8.bf16 %v547
        %v940 = vunpack.c.h.s8.bf16 %v540
        %v941 = vunpack.c.h.s8.bf16 %v541
        %v942 = vunpack.c.h.s8.bf16 %v542
        %v943 = vunpack.c.h.s8.bf16 %v543
        %v944 = vunpack.c.h.s8.bf16 %v544
        %v945 = vunpack.c.h.s8.bf16 %v545
        %v946 = vunpack.c.h.s8.bf16 %v546
        %v947 = vunpack.c.h.s8.bf16 %v547
        %v948 = vunpack.c.l.s8.bf16 %v548
        %v949 = vunpack.c.l.s8.bf16 %v549
        %v950 = vunpack.c.l.s8.bf16 %v550
        %v951 = vunpack.c.l.s8.bf16 %v551
        %v952 = vunpack.c.l.s8.bf16 %v552
        %v953 = vunpack.c.l.s8.bf16 %v553
        %v954 = vunpack.c.l.s8.bf16 %v554
        %v955 = vunpack.c.l.s8.bf16 %v555
        %v956 = vunpack.c.h.s8.bf16 %v548
        %v957 = vunpack.c.h.s8.bf16 %v549
        %v958 = vunpack.c.h.s8.bf16 %v550
        %v959 = vunpack.c.h.s8.bf16 %v551
        %v960 = vunpack.c.h.s8.bf16 %v552
        %v961 = vunpack.c.h.s8.bf16 %v553
        %v962 = vunpack.c.h.s8.bf16 %v554
        %v963 = vunpack.c.h.s8.bf16 %v555
        %v964 = vunpack.c.l.s8.bf16 %v556
        %v965 = vunpack.c.l.s8.bf16 %v557
        %v966 = vunpack.c.l.s8.bf16 %v558
        %v967 = vunpack.c.l.s8.bf16 %v559
        %v968 = vunpack.c.l.s8.bf16 %v560
        %v969 = vunpack.c.l.s8.bf16 %v561
        %v970 = vunpack.c.l.s8.bf16 %v562
        %v971 = vunpack.c.l.s8.bf16 %v563
        %v972 = vunpack.c.h.s8.bf16 %v556
        %v973 = vunpack.c.h.s8.bf16 %v557
        %v974 = vunpack.c.h.s8.bf16 %v558
        %v975 = vunpack.c.h.s8.bf16 %v559
        %v976 = vunpack.c.h.s8.bf16 %v560
        %v977 = vunpack.c.h.s8.bf16 %v561
        %v978 = vunpack.c.h.s8.bf16 %v562
        %v979 = vunpack.c.h.s8.bf16 %v563
        %v980 = vunpack.c.l.s8.bf16 %v564
        %v981 = vunpack.c.l.s8.bf16 %v565
        %v982 = vunpack.c.l.s8.bf16 %v566
        %v983 = vunpack.c.l.s8.bf16 %v567
        %v984 = vunpack.c.l.s8.bf16 %v568
        %v985 = vunpack.c.l.s8.bf16 %v569
        %v986 = vunpack.c.l.s8.bf16 %v570
        %v987 = vunpack.c.l.s8.bf16 %v571
        %v988 = vunpack.c.h.s8.bf16 %v564
        %v989 = vunpack.c.h.s8.bf16 %v565
        %v990 = vunpack.c.h.s8.bf16 %v566
        %v991 = vunpack.c.h.s8.bf16 %v567
        %v992 = vunpack.c.h.s8.bf16 %v568
        %v993 = vunpack.c.h.s8.bf16 %v569
        %v994 = vunpack.c.h.s8.bf16 %v570
        %v995 = vunpack.c.h.s8.bf16 %v571
        %v996 = vunpack.c.l.s8.bf16 %v572
        %v997 = vunpack.c.l.s8.bf16 %v573
        %v998 = vunpack.c.l.s8.bf16 %v574
        %v999 = vunpack.c.l.s8.bf16 %v575
        %v1000 = vunpack.c.l.s8.bf16 %v576
        %v1001 = vunpack.c.l.s8.bf16 %v577
        %v1002 = vunpack.c.l.s8.bf16 %v578
        %v1003 = vunpack.c.l.s8.bf16 %v579
        %v1004 = vunpack.c.h.s8.bf16 %v572
        %v1005 = vunpack.c.h.s8.bf16 %v573
        %v1006 = vunpack.c.h.s8.bf16 %v574
        %v1007 = vunpack.c.h.s8.bf16 %v575
        %v1008 = vunpack.c.h.s8.bf16 %v576
        %v1009 = vunpack.c.h.s8.bf16 %v577
        %v1010 = vunpack.c.h.s8.bf16 %v578
        %v1011 = vunpack.c.h.s8.bf16 %v579
        %v1012 = vunpack.c.l.s8.bf16 %v580
        %v1013 = vunpack.c.l.s8.bf16 %v581
        %v1014 = vunpack.c.l.s8.bf16 %v582
        %v1015 = vunpack.c.l.s8.bf16 %v583
        %v1016 = vunpack.c.l.s8.bf16 %v584
        %v1017 = vunpack.c.l.s8.bf16 %v585
        %v1018 = vunpack.c.l.s8.bf16 %v586
        %v1019 = vunpack.c.l.s8.bf16 %v587
        %v1020 = vunpack.c.h.s8.bf16 %v580
        %v1021 = vunpack.c.h.s8.bf16 %v581
        %v1022 = vunpack.c.h.s8.bf16 %v582
        %v1023 = vunpack.c.h.s8.bf16 %v583
        %v1024 = vunpack.c.h.s8.bf16 %v584
        %v1025 = vunpack.c.h.s8.bf16 %v585
        %v1026 = vunpack.c.h.s8.bf16 %v586
        %v1027 = vunpack.c.h.s8.bf16 %v587
        %v1028 = vunpack.c.l.s8.bf16 %v588
        %v1029 = vunpack.c.l.s8.bf16 %v589
        %v1030 = vunpack.c.l.s8.bf16 %v590
        %v1031 = vunpack.c.l.s8.bf16 %v591
        %v1032 = vunpack.c.l.s8.bf16 %v592
        %v1033 = vunpack.c.l.s8.bf16 %v593
        %v1034 = vunpack.c.l.s8.bf16 %v594
        %v1035 = vunpack.c.l.s8.bf16 %v595
        %v1036 = vunpack.c.h.s8.bf16 %v588
        %v1037 = vunpack.c.h.s8.bf16 %v589
        %v1038 = vunpack.c.h.s8.bf16 %v590
        %v1039 = vunpack.c.h.s8.bf16 %v591
        %v1040 = vunpack.c.h.s8.bf16 %v592
        %v1041 = vunpack.c.h.s8.bf16 %v593
        %v1042 = vunpack.c.h.s8.bf16 %v594
        %v1043 = vunpack.c.h.s8.bf16 %v595
        %v1044 = vunpack.c.l.s8.bf16 %v596
        %v1045 = vunpack.c.l.s8.bf16 %v597
        %v1046 = vunpack.c.l.s8.bf16 %v598
        %v1047 = vunpack.c.l.s8.bf16 %v599
        %v1048 = vunpack.c.l.s8.bf16 %v600
        %v1049 = vunpack.c.l.s8.bf16 %v601
        %v1050 = vunpack.c.l.s8.bf16 %v602
        %v1051 = vunpack.c.l.s8.bf16 %v603
        %v1052 = vunpack.c.h.s8.bf16 %v596
        %v1053 = vunpack.c.h.s8.bf16 %v597
        %v1054 = vunpack.c.h.s8.bf16 %v598
        %v1055 = vunpack.c.h.s8.bf16 %v599
        %v1056 = vunpack.c.h.s8.bf16 %v600
        %v1057 = vunpack.c.h.s8.bf16 %v601
        %v1058 = vunpack.c.h.s8.bf16 %v602
        %v1059 = vunpack.c.h.s8.bf16 %v603
        %v1060 = vunpack.c.l.s8.bf16 %v604
        %v1061 = vunpack.c.l.s8.bf16 %v605
        %v1062 = vunpack.c.l.s8.bf16 %v606
        %v1063 = vunpack.c.l.s8.bf16 %v607
        %v1064 = vunpack.c.l.s8.bf16 %v608
        %v1065 = vunpack.c.l.s8.bf16 %v609
        %v1066 = vunpack.c.l.s8.bf16 %v610
        %v1067 = vunpack.c.l.s8.bf16 %v611
        %v1068 = vunpack.c.h.s8.bf16 %v604
        %v1069 = vunpack.c.h.s8.bf16 %v605
        %v1070 = vunpack.c.h.s8.bf16 %v606
        %v1071 = vunpack.c.h.s8.bf16 %v607
        %v1072 = vunpack.c.h.s8.bf16 %v608
        %v1073 = vunpack.c.h.s8.bf16 %v609
        %v1074 = vunpack.c.h.s8.bf16 %v610
        %v1075 = vunpack.c.h.s8.bf16 %v611
        %v1076 = vunpack.c.l.s8.bf16 %v612
        %v1077 = vunpack.c.l.s8.bf16 %v613
        %v1078 = vunpack.c.l.s8.bf16 %v614
        %v1079 = vunpack.c.l.s8.bf16 %v615
        %v1080 = vunpack.c.l.s8.bf16 %v616
        %v1081 = vunpack.c.l.s8.bf16 %v617
        %v1082 = vunpack.c.l.s8.bf16 %v618
        %v1083 = vunpack.c.l.s8.bf16 %v619
        %v1084 = vunpack.c.h.s8.bf16 %v612
        %v1085 = vunpack.c.h.s8.bf16 %v613
        %v1086 = vunpack.c.h.s8.bf16 %v614
        %v1087 = vunpack.c.h.s8.bf16 %v615
        %v1088 = vunpack.c.h.s8.bf16 %v616
        %v1089 = vunpack.c.h.s8.bf16 %v617
        %v1090 = vunpack.c.h.s8.bf16 %v618
        %v1091 = vunpack.c.h.s8.bf16 %v619
        %v1092 = vunpack.c.l.s8.bf16 %v620
        %v1093 = vunpack.c.l.s8.bf16 %v621
        %v1094 = vunpack.c.l.s8.bf16 %v622
        %v1095 = vunpack.c.l.s8.bf16 %v623
        %v1096 = vunpack.c.l.s8.bf16 %v624
        %v1097 = vunpack.c.l.s8.bf16 %v625
        %v1098 = vunpack.c.l.s8.bf16 %v626
        %v1099 = vunpack.c.l.s8.bf16 %v627
        %v1100 = vunpack.c.h.s8.bf16 %v620
        %v1101 = vunpack.c.h.s8.bf16 %v621
        %v1102 = vunpack.c.h.s8.bf16 %v622
        %v1103 = vunpack.c.h.s8.bf16 %v623
        %v1104 = vunpack.c.h.s8.bf16 %v624
        %v1105 = vunpack.c.h.s8.bf16 %v625
        %v1106 = vunpack.c.h.s8.bf16 %v626
        %v1107 = vunpack.c.h.s8.bf16 %v627
        %v1108 = vunpack.c.l.s8.bf16 %v628
        %v1109 = vunpack.c.l.s8.bf16 %v629
        %v1110 = vunpack.c.l.s8.bf16 %v630
        %v1111 = vunpack.c.l.s8.bf16 %v631
        %v1112 = vunpack.c.l.s8.bf16 %v632
        %v1113 = vunpack.c.l.s8.bf16 %v633
        %v1114 = vunpack.c.l.s8.bf16 %v634
        %v1115 = vunpack.c.l.s8.bf16 %v635
        %v1116 = vunpack.c.h.s8.bf16 %v628
        %v1117 = vunpack.c.h.s8.bf16 %v629
        %v1118 = vunpack.c.h.s8.bf16 %v630
        %v1119 = vunpack.c.h.s8.bf16 %v631
        %v1120 = vunpack.c.h.s8.bf16 %v632
        %v1121 = vunpack.c.h.s8.bf16 %v633
        %v1122 = vunpack.c.h.s8.bf16 %v634
        %v1123 = vunpack.c.h.s8.bf16 %v635
        %v1124 = vunpack.c.l.s8.bf16 %v636
        %v1125 = vunpack.c.l.s8.bf16 %v637
        %v1126 = vunpack.c.l.s8.bf16 %v638
        %v1127 = vunpack.c.l.s8.bf16 %v639
        %v1128 = vunpack.c.l.s8.bf16 %v640
        %v1129 = vunpack.c.l.s8.bf16 %v641
        %v1130 = vunpack.c.l.s8.bf16 %v642
        %v1131 = vunpack.c.l.s8.bf16 %v643
        %v1132 = vunpack.c.h.s8.bf16 %v636
        %v1133 = vunpack.c.h.s8.bf16 %v637
        %v1134 = vunpack.c.h.s8.bf16 %v638
        %v1135 = vunpack.c.h.s8.bf16 %v639
        %v1136 = vunpack.c.h.s8.bf16 %v640
        %v1137 = vunpack.c.h.s8.bf16 %v641
        %v1138 = vunpack.c.h.s8.bf16 %v642
        %v1139 = vunpack.c.h.s8.bf16 %v643
        %v1140 = vunpack.c.l.s8.bf16 %v644
        %v1141 = vunpack.c.l.s8.bf16 %v645
        %v1142 = vunpack.c.l.s8.bf16 %v646
        %v1143 = vunpack.c.l.s8.bf16 %v647
        %v1144 = vunpack.c.l.s8.bf16 %v648
        %v1145 = vunpack.c.l.s8.bf16 %v649
        %v1146 = vunpack.c.l.s8.bf16 %v650
        %v1147 = vunpack.c.l.s8.bf16 %v651
        %v1148 = vunpack.c.h.s8.bf16 %v644
        %v1149 = vunpack.c.h.s8.bf16 %v645
        %v1150 = vunpack.c.h.s8.bf16 %v646
        %v1151 = vunpack.c.h.s8.bf16 %v647
        %v1152 = vunpack.c.h.s8.bf16 %v648
        %v1153 = vunpack.c.h.s8.bf16 %v649
        %v1154 = vunpack.c.h.s8.bf16 %v650
        %v1155 = vunpack.c.h.s8.bf16 %v651
        %v1156 = vunpack.c.l.s8.bf16 %v652
        %v1157 = vunpack.c.l.s8.bf16 %v653
        %v1158 = vunpack.c.l.s8.bf16 %v654
        %v1159 = vunpack.c.l.s8.bf16 %v655
        %v1160 = vunpack.c.l.s8.bf16 %v656
        %v1161 = vunpack.c.l.s8.bf16 %v657
        %v1162 = vunpack.c.l.s8.bf16 %v658
        %v1163 = vunpack.c.l.s8.bf16 %v659
        %v1164 = vunpack.c.h.s8.bf16 %v652
        %v1165 = vunpack.c.h.s8.bf16 %v653
        %v1166 = vunpack.c.h.s8.bf16 %v654
        %v1167 = vunpack.c.h.s8.bf16 %v655
        %v1168 = vunpack.c.h.s8.bf16 %v656
        %v1169 = vunpack.c.h.s8.bf16 %v657
        %v1170 = vunpack.c.h.s8.bf16 %v658
        %v1171 = vunpack.c.h.s8.bf16 %v659
        %s1172 = sadd.s32 %s370, 1
        %s1173 = smul.u32 %s1172, 8
        %s1174 = smul.addr %s1173, 8
        %s1175 = scalar_lea.vmem [#allocation2], %s1174
        %v1176 = vld [vmem:[%s1175] sm:$0xff]
        %v1177 = vld [vmem:[%s1175 + $0x8] sm:$0xff]
        %v1178 = vld [vmem:[%s1175 + $0x10] sm:$0xff]
        %v1179 = vld [vmem:[%s1175 + $0x18] sm:$0xff]
        %v1180 = vld [vmem:[%s1175 + $0x20] sm:$0xff]
        %v1181 = vld [vmem:[%s1175 + $0x28] sm:$0xff]
        %v1182 = vld [vmem:[%s1175 + $0x30] sm:$0xff]
        %v1183 = vld [vmem:[%s1175 + $0x38] sm:$0xff]
        %v1184 = vpack.c.bf16 %v1176, %v1176
        %v1185 = vpack.c.bf16 %v1177, %v1177
        %v1186 = vpack.c.bf16 %v1178, %v1178
        %v1187 = vpack.c.bf16 %v1179, %v1179
        %v1188 = vpack.c.bf16 %v1180, %v1180
        %v1189 = vpack.c.bf16 %v1181, %v1181
        %v1190 = vpack.c.bf16 %v1182, %v1182
        %v1191 = vpack.c.bf16 %v1183, %v1183
        %v1192 = vld [vmem:[%s257 + $0x800] sm:$0xff]
        %v1193 = vld [vmem:[%s257 + $0x808] sm:$0xff]
        %v1194 = vld [vmem:[%s257 + $0x810] sm:$0xff]
        %v1195 = vld [vmem:[%s257 + $0x818] sm:$0xff]
        %v1196 = vld [vmem:[%s257 + $0x820] sm:$0xff]
        %v1197 = vld [vmem:[%s257 + $0x828] sm:$0xff]
        %v1198 = vld [vmem:[%s257 + $0x830] sm:$0xff]
        %v1199 = vld [vmem:[%s257 + $0x838] sm:$0xff]
        %v1200 = vld [vmem:[%s257 + $0x840] sm:$0xff]
        %v1201 = vld [vmem:[%s257 + $0x848] sm:$0xff]
        %v1202 = vld [vmem:[%s257 + $0x850] sm:$0xff]
        %v1203 = vld [vmem:[%s257 + $0x858] sm:$0xff]
        %v1204 = vld [vmem:[%s257 + $0x860] sm:$0xff]
        %v1205 = vld [vmem:[%s257 + $0x868] sm:$0xff]
        %v1206 = vld [vmem:[%s257 + $0x870] sm:$0xff]
        %v1207 = vld [vmem:[%s257 + $0x878] sm:$0xff]
        %v1208 = vld [vmem:[%s257 + $0x880] sm:$0xff]
        %v1209 = vld [vmem:[%s257 + $0x888] sm:$0xff]
        %v1210 = vld [vmem:[%s257 + $0x890] sm:$0xff]
        %v1211 = vld [vmem:[%s257 + $0x898] sm:$0xff]
        %v1212 = vld [vmem:[%s257 + $0x8a0] sm:$0xff]
        %v1213 = vld [vmem:[%s257 + $0x8a8] sm:$0xff]
        %v1214 = vld [vmem:[%s257 + $0x8b0] sm:$0xff]
        %v1215 = vld [vmem:[%s257 + $0x8b8] sm:$0xff]
        %v1216 = vld [vmem:[%s257 + $0x8c0] sm:$0xff]
        %v1217 = vld [vmem:[%s257 + $0x8c8] sm:$0xff]
        %v1218 = vld [vmem:[%s257 + $0x8d0] sm:$0xff]
        %v1219 = vld [vmem:[%s257 + $0x8d8] sm:$0xff]
        %v1220 = vld [vmem:[%s257 + $0x8e0] sm:$0xff]
        %v1221 = vld [vmem:[%s257 + $0x8e8] sm:$0xff]
        %v1222 = vld [vmem:[%s257 + $0x8f0] sm:$0xff]
        %v1223 = vld [vmem:[%s257 + $0x8f8] sm:$0xff]
        %v1224 = vld [vmem:[%s257 + $0x900] sm:$0xff]
        %v1225 = vld [vmem:[%s257 + $0x908] sm:$0xff]
        %v1226 = vld [vmem:[%s257 + $0x910] sm:$0xff]
        %v1227 = vld [vmem:[%s257 + $0x918] sm:$0xff]
        %v1228 = vld [vmem:[%s257 + $0x920] sm:$0xff]
        %v1229 = vld [vmem:[%s257 + $0x928] sm:$0xff]
        %v1230 = vld [vmem:[%s257 + $0x930] sm:$0xff]
        %v1231 = vld [vmem:[%s257 + $0x938] sm:$0xff]
        %v1232 = vld [vmem:[%s257 + $0x940] sm:$0xff]
        %v1233 = vld [vmem:[%s257 + $0x948] sm:$0xff]
        %v1234 = vld [vmem:[%s257 + $0x950] sm:$0xff]
        %v1235 = vld [vmem:[%s257 + $0x958] sm:$0xff]
        %v1236 = vld [vmem:[%s257 + $0x960] sm:$0xff]
        %v1237 = vld [vmem:[%s257 + $0x968] sm:$0xff]
        %v1238 = vld [vmem:[%s257 + $0x970] sm:$0xff]
        %v1239 = vld [vmem:[%s257 + $0x978] sm:$0xff]
        %v1240 = vld [vmem:[%s257 + $0x980] sm:$0xff]
        %v1241 = vld [vmem:[%s257 + $0x988] sm:$0xff]
        %v1242 = vld [vmem:[%s257 + $0x990] sm:$0xff]
        %v1243 = vld [vmem:[%s257 + $0x998] sm:$0xff]
        %v1244 = vld [vmem:[%s257 + $0x9a0] sm:$0xff]
        %v1245 = vld [vmem:[%s257 + $0x9a8] sm:$0xff]
        %v1246 = vld [vmem:[%s257 + $0x9b0] sm:$0xff]
        %v1247 = vld [vmem:[%s257 + $0x9b8] sm:$0xff]
        %v1248 = vld [vmem:[%s257 + $0x9c0] sm:$0xff]
        %v1249 = vld [vmem:[%s257 + $0x9c8] sm:$0xff]
        %v1250 = vld [vmem:[%s257 + $0x9d0] sm:$0xff]
        %v1251 = vld [vmem:[%s257 + $0x9d8] sm:$0xff]
        %v1252 = vld [vmem:[%s257 + $0x9e0] sm:$0xff]
        %v1253 = vld [vmem:[%s257 + $0x9e8] sm:$0xff]
        %v1254 = vld [vmem:[%s257 + $0x9f0] sm:$0xff]
        %v1255 = vld [vmem:[%s257 + $0x9f8] sm:$0xff]
        %v1256 = vld [vmem:[%s257 + $0xa00] sm:$0xff]
        %v1257 = vld [vmem:[%s257 + $0xa08] sm:$0xff]
        %v1258 = vld [vmem:[%s257 + $0xa10] sm:$0xff]
        %v1259 = vld [vmem:[%s257 + $0xa18] sm:$0xff]
        %v1260 = vld [vmem:[%s257 + $0xa20] sm:$0xff]
        %v1261 = vld [vmem:[%s257 + $0xa28] sm:$0xff]
        %v1262 = vld [vmem:[%s257 + $0xa30] sm:$0xff]
        %v1263 = vld [vmem:[%s257 + $0xa38] sm:$0xff]
        %v1264 = vld [vmem:[%s257 + $0xa40] sm:$0xff]
        %v1265 = vld [vmem:[%s257 + $0xa48] sm:$0xff]
        %v1266 = vld [vmem:[%s257 + $0xa50] sm:$0xff]
        %v1267 = vld [vmem:[%s257 + $0xa58] sm:$0xff]
        %v1268 = vld [vmem:[%s257 + $0xa60] sm:$0xff]
        %v1269 = vld [vmem:[%s257 + $0xa68] sm:$0xff]
        %v1270 = vld [vmem:[%s257 + $0xa70] sm:$0xff]
        %v1271 = vld [vmem:[%s257 + $0xa78] sm:$0xff]
        %v1272 = vld [vmem:[%s257 + $0xa80] sm:$0xff]
        %v1273 = vld [vmem:[%s257 + $0xa88] sm:$0xff]
        %v1274 = vld [vmem:[%s257 + $0xa90] sm:$0xff]
        %v1275 = vld [vmem:[%s257 + $0xa98] sm:$0xff]
        %v1276 = vld [vmem:[%s257 + $0xaa0] sm:$0xff]
        %v1277 = vld [vmem:[%s257 + $0xaa8] sm:$0xff]
        %v1278 = vld [vmem:[%s257 + $0xab0] sm:$0xff]
        %v1279 = vld [vmem:[%s257 + $0xab8] sm:$0xff]
        %v1280 = vld [vmem:[%s257 + $0xac0] sm:$0xff]
        %v1281 = vld [vmem:[%s257 + $0xac8] sm:$0xff]
        %v1282 = vld [vmem:[%s257 + $0xad0] sm:$0xff]
        %v1283 = vld [vmem:[%s257 + $0xad8] sm:$0xff]
        %v1284 = vld [vmem:[%s257 + $0xae0] sm:$0xff]
        %v1285 = vld [vmem:[%s257 + $0xae8] sm:$0xff]
        %v1286 = vld [vmem:[%s257 + $0xaf0] sm:$0xff]
        %v1287 = vld [vmem:[%s257 + $0xaf8] sm:$0xff]
        %v1288 = vld [vmem:[%s257 + $0xb00] sm:$0xff]
        %v1289 = vld [vmem:[%s257 + $0xb08] sm:$0xff]
        %v1290 = vld [vmem:[%s257 + $0xb10] sm:$0xff]
        %v1291 = vld [vmem:[%s257 + $0xb18] sm:$0xff]
        %v1292 = vld [vmem:[%s257 + $0xb20] sm:$0xff]
        %v1293 = vld [vmem:[%s257 + $0xb28] sm:$0xff]
        %v1294 = vld [vmem:[%s257 + $0xb30] sm:$0xff]
        %v1295 = vld [vmem:[%s257 + $0xb38] sm:$0xff]
        %v1296 = vld [vmem:[%s257 + $0xb40] sm:$0xff]
        %v1297 = vld [vmem:[%s257 + $0xb48] sm:$0xff]
        %v1298 = vld [vmem:[%s257 + $0xb50] sm:$0xff]
        %v1299 = vld [vmem:[%s257 + $0xb58] sm:$0xff]
        %v1300 = vld [vmem:[%s257 + $0xb60] sm:$0xff]
        %v1301 = vld [vmem:[%s257 + $0xb68] sm:$0xff]
        %v1302 = vld [vmem:[%s257 + $0xb70] sm:$0xff]
        %v1303 = vld [vmem:[%s257 + $0xb78] sm:$0xff]
        %v1304 = vld [vmem:[%s257 + $0xb80] sm:$0xff]
        %v1305 = vld [vmem:[%s257 + $0xb88] sm:$0xff]
        %v1306 = vld [vmem:[%s257 + $0xb90] sm:$0xff]
        %v1307 = vld [vmem:[%s257 + $0xb98] sm:$0xff]
        %v1308 = vld [vmem:[%s257 + $0xba0] sm:$0xff]
        %v1309 = vld [vmem:[%s257 + $0xba8] sm:$0xff]
        %v1310 = vld [vmem:[%s257 + $0xbb0] sm:$0xff]
        %v1311 = vld [vmem:[%s257 + $0xbb8] sm:$0xff]
        %v1312 = vld [vmem:[%s257 + $0xbc0] sm:$0xff]
        %v1313 = vld [vmem:[%s257 + $0xbc8] sm:$0xff]
        %v1314 = vld [vmem:[%s257 + $0xbd0] sm:$0xff]
        %v1315 = vld [vmem:[%s257 + $0xbd8] sm:$0xff]
        %v1316 = vld [vmem:[%s257 + $0xbe0] sm:$0xff]
        %v1317 = vld [vmem:[%s257 + $0xbe8] sm:$0xff]
        %v1318 = vld [vmem:[%s257 + $0xbf0] sm:$0xff]
        %v1319 = vld [vmem:[%s257 + $0xbf8] sm:$0xff]
        %v1320 = vld [vmem:[%s257 + $0xc00] sm:$0xff]
        %v1321 = vld [vmem:[%s257 + $0xc08] sm:$0xff]
        %v1322 = vld [vmem:[%s257 + $0xc10] sm:$0xff]
        %v1323 = vld [vmem:[%s257 + $0xc18] sm:$0xff]
        %v1324 = vld [vmem:[%s257 + $0xc20] sm:$0xff]
        %v1325 = vld [vmem:[%s257 + $0xc28] sm:$0xff]
        %v1326 = vld [vmem:[%s257 + $0xc30] sm:$0xff]
        %v1327 = vld [vmem:[%s257 + $0xc38] sm:$0xff]
        %v1328 = vld [vmem:[%s257 + $0xc40] sm:$0xff]
        %v1329 = vld [vmem:[%s257 + $0xc48] sm:$0xff]
        %v1330 = vld [vmem:[%s257 + $0xc50] sm:$0xff]
        %v1331 = vld [vmem:[%s257 + $0xc58] sm:$0xff]
        %v1332 = vld [vmem:[%s257 + $0xc60] sm:$0xff]
        %v1333 = vld [vmem:[%s257 + $0xc68] sm:$0xff]
        %v1334 = vld [vmem:[%s257 + $0xc70] sm:$0xff]
        %v1335 = vld [vmem:[%s257 + $0xc78] sm:$0xff]
        %v1336 = vld [vmem:[%s257 + $0xc80] sm:$0xff]
        %v1337 = vld [vmem:[%s257 + $0xc88] sm:$0xff]
        %v1338 = vld [vmem:[%s257 + $0xc90] sm:$0xff]
        %v1339 = vld [vmem:[%s257 + $0xc98] sm:$0xff]
        %v1340 = vld [vmem:[%s257 + $0xca0] sm:$0xff]
        %v1341 = vld [vmem:[%s257 + $0xca8] sm:$0xff]
        %v1342 = vld [vmem:[%s257 + $0xcb0] sm:$0xff]
        %v1343 = vld [vmem:[%s257 + $0xcb8] sm:$0xff]
        %v1344 = vld [vmem:[%s257 + $0xcc0] sm:$0xff]
        %v1345 = vld [vmem:[%s257 + $0xcc8] sm:$0xff]
        %v1346 = vld [vmem:[%s257 + $0xcd0] sm:$0xff]
        %v1347 = vld [vmem:[%s257 + $0xcd8] sm:$0xff]
        %v1348 = vld [vmem:[%s257 + $0xce0] sm:$0xff]
        %v1349 = vld [vmem:[%s257 + $0xce8] sm:$0xff]
        %v1350 = vld [vmem:[%s257 + $0xcf0] sm:$0xff]
        %v1351 = vld [vmem:[%s257 + $0xcf8] sm:$0xff]
        %v1352 = vld [vmem:[%s257 + $0xd00] sm:$0xff]
        %v1353 = vld [vmem:[%s257 + $0xd08] sm:$0xff]
        %v1354 = vld [vmem:[%s257 + $0xd10] sm:$0xff]
        %v1355 = vld [vmem:[%s257 + $0xd18] sm:$0xff]
        %v1356 = vld [vmem:[%s257 + $0xd20] sm:$0xff]
        %v1357 = vld [vmem:[%s257 + $0xd28] sm:$0xff]
        %v1358 = vld [vmem:[%s257 + $0xd30] sm:$0xff]
        %v1359 = vld [vmem:[%s257 + $0xd38] sm:$0xff]
        %v1360 = vld [vmem:[%s257 + $0xd40] sm:$0xff]
        %v1361 = vld [vmem:[%s257 + $0xd48] sm:$0xff]
        %v1362 = vld [vmem:[%s257 + $0xd50] sm:$0xff]
        %v1363 = vld [vmem:[%s257 + $0xd58] sm:$0xff]
        %v1364 = vld [vmem:[%s257 + $0xd60] sm:$0xff]
        %v1365 = vld [vmem:[%s257 + $0xd68] sm:$0xff]
        %v1366 = vld [vmem:[%s257 + $0xd70] sm:$0xff]
        %v1367 = vld [vmem:[%s257 + $0xd78] sm:$0xff]
        %v1368 = vld [vmem:[%s257 + $0xd80] sm:$0xff]
        %v1369 = vld [vmem:[%s257 + $0xd88] sm:$0xff]
        %v1370 = vld [vmem:[%s257 + $0xd90] sm:$0xff]
        %v1371 = vld [vmem:[%s257 + $0xd98] sm:$0xff]
        %v1372 = vld [vmem:[%s257 + $0xda0] sm:$0xff]
        %v1373 = vld [vmem:[%s257 + $0xda8] sm:$0xff]
        %v1374 = vld [vmem:[%s257 + $0xdb0] sm:$0xff]
        %v1375 = vld [vmem:[%s257 + $0xdb8] sm:$0xff]
        %v1376 = vld [vmem:[%s257 + $0xdc0] sm:$0xff]
        %v1377 = vld [vmem:[%s257 + $0xdc8] sm:$0xff]
        %v1378 = vld [vmem:[%s257 + $0xdd0] sm:$0xff]
        %v1379 = vld [vmem:[%s257 + $0xdd8] sm:$0xff]
        %v1380 = vld [vmem:[%s257 + $0xde0] sm:$0xff]
        %v1381 = vld [vmem:[%s257 + $0xde8] sm:$0xff]
        %v1382 = vld [vmem:[%s257 + $0xdf0] sm:$0xff]
        %v1383 = vld [vmem:[%s257 + $0xdf8] sm:$0xff]
        %v1384 = vld [vmem:[%s257 + $0xe00] sm:$0xff]
        %v1385 = vld [vmem:[%s257 + $0xe08] sm:$0xff]
        %v1386 = vld [vmem:[%s257 + $0xe10] sm:$0xff]
        %v1387 = vld [vmem:[%s257 + $0xe18] sm:$0xff]
        %v1388 = vld [vmem:[%s257 + $0xe20] sm:$0xff]
        %v1389 = vld [vmem:[%s257 + $0xe28] sm:$0xff]
        %v1390 = vld [vmem:[%s257 + $0xe30] sm:$0xff]
        %v1391 = vld [vmem:[%s257 + $0xe38] sm:$0xff]
        %v1392 = vld [vmem:[%s257 + $0xe40] sm:$0xff]
        %v1393 = vld [vmem:[%s257 + $0xe48] sm:$0xff]
        %v1394 = vld [vmem:[%s257 + $0xe50] sm:$0xff]
        %v1395 = vld [vmem:[%s257 + $0xe58] sm:$0xff]
        %v1396 = vld [vmem:[%s257 + $0xe60] sm:$0xff]
        %v1397 = vld [vmem:[%s257 + $0xe68] sm:$0xff]
        %v1398 = vld [vmem:[%s257 + $0xe70] sm:$0xff]
        %v1399 = vld [vmem:[%s257 + $0xe78] sm:$0xff]
        %v1400 = vld [vmem:[%s257 + $0xe80] sm:$0xff]
        %v1401 = vld [vmem:[%s257 + $0xe88] sm:$0xff]
        %v1402 = vld [vmem:[%s257 + $0xe90] sm:$0xff]
        %v1403 = vld [vmem:[%s257 + $0xe98] sm:$0xff]
        %v1404 = vld [vmem:[%s257 + $0xea0] sm:$0xff]
        %v1405 = vld [vmem:[%s257 + $0xea8] sm:$0xff]
        %v1406 = vld [vmem:[%s257 + $0xeb0] sm:$0xff]
        %v1407 = vld [vmem:[%s257 + $0xeb8] sm:$0xff]
        %v1408 = vld [vmem:[%s257 + $0xec0] sm:$0xff]
        %v1409 = vld [vmem:[%s257 + $0xec8] sm:$0xff]
        %v1410 = vld [vmem:[%s257 + $0xed0] sm:$0xff]
        %v1411 = vld [vmem:[%s257 + $0xed8] sm:$0xff]
        %v1412 = vld [vmem:[%s257 + $0xee0] sm:$0xff]
        %v1413 = vld [vmem:[%s257 + $0xee8] sm:$0xff]
        %v1414 = vld [vmem:[%s257 + $0xef0] sm:$0xff]
        %v1415 = vld [vmem:[%s257 + $0xef8] sm:$0xff]
        %v1416 = vld [vmem:[%s257 + $0xf00] sm:$0xff]
        %v1417 = vld [vmem:[%s257 + $0xf08] sm:$0xff]
        %v1418 = vld [vmem:[%s257 + $0xf10] sm:$0xff]
        %v1419 = vld [vmem:[%s257 + $0xf18] sm:$0xff]
        %v1420 = vld [vmem:[%s257 + $0xf20] sm:$0xff]
        %v1421 = vld [vmem:[%s257 + $0xf28] sm:$0xff]
        %v1422 = vld [vmem:[%s257 + $0xf30] sm:$0xff]
        %v1423 = vld [vmem:[%s257 + $0xf38] sm:$0xff]
        %v1424 = vld [vmem:[%s257 + $0xf40] sm:$0xff]
        %v1425 = vld [vmem:[%s257 + $0xf48] sm:$0xff]
        %v1426 = vld [vmem:[%s257 + $0xf50] sm:$0xff]
        %v1427 = vld [vmem:[%s257 + $0xf58] sm:$0xff]
        %v1428 = vld [vmem:[%s257 + $0xf60] sm:$0xff]
        %v1429 = vld [vmem:[%s257 + $0xf68] sm:$0xff]
        %v1430 = vld [vmem:[%s257 + $0xf70] sm:$0xff]
        %v1431 = vld [vmem:[%s257 + $0xf78] sm:$0xff]
        %v1432 = vld [vmem:[%s257 + $0xf80] sm:$0xff]
        %v1433 = vld [vmem:[%s257 + $0xf88] sm:$0xff]
        %v1434 = vld [vmem:[%s257 + $0xf90] sm:$0xff]
        %v1435 = vld [vmem:[%s257 + $0xf98] sm:$0xff]
        %v1436 = vld [vmem:[%s257 + $0xfa0] sm:$0xff]
        %v1437 = vld [vmem:[%s257 + $0xfa8] sm:$0xff]
        %v1438 = vld [vmem:[%s257 + $0xfb0] sm:$0xff]
        %v1439 = vld [vmem:[%s257 + $0xfb8] sm:$0xff]
        %v1440 = vld [vmem:[%s257 + $0xfc0] sm:$0xff]
        %v1441 = vld [vmem:[%s257 + $0xfc8] sm:$0xff]
        %v1442 = vld [vmem:[%s257 + $0xfd0] sm:$0xff]
        %v1443 = vld [vmem:[%s257 + $0xfd8] sm:$0xff]
        %v1444 = vld [vmem:[%s257 + $0xfe0] sm:$0xff]
        %v1445 = vld [vmem:[%s257 + $0xfe8] sm:$0xff]
        %v1446 = vld [vmem:[%s257 + $0xff0] sm:$0xff]
        %v1447 = vld [vmem:[%s257 + $0xff8] sm:$0xff]
        %v1448 = vunpack.c.l.s8.bf16 %v1192
        %v1449 = vunpack.c.l.s8.bf16 %v1193
        %v1450 = vunpack.c.l.s8.bf16 %v1194
        %v1451 = vunpack.c.l.s8.bf16 %v1195
        %v1452 = vunpack.c.l.s8.bf16 %v1196
        %v1453 = vunpack.c.l.s8.bf16 %v1197
        %v1454 = vunpack.c.l.s8.bf16 %v1198
        %v1455 = vunpack.c.l.s8.bf16 %v1199
        %v1456 = vunpack.c.h.s8.bf16 %v1192
        %v1457 = vunpack.c.h.s8.bf16 %v1193
        %v1458 = vunpack.c.h.s8.bf16 %v1194
        %v1459 = vunpack.c.h.s8.bf16 %v1195
        %v1460 = vunpack.c.h.s8.bf16 %v1196
        %v1461 = vunpack.c.h.s8.bf16 %v1197
        %v1462 = vunpack.c.h.s8.bf16 %v1198
        %v1463 = vunpack.c.h.s8.bf16 %v1199
        %v1464 = vunpack.c.l.s8.bf16 %v1200
        %v1465 = vunpack.c.l.s8.bf16 %v1201
        %v1466 = vunpack.c.l.s8.bf16 %v1202
        %v1467 = vunpack.c.l.s8.bf16 %v1203
        %v1468 = vunpack.c.l.s8.bf16 %v1204
        %v1469 = vunpack.c.l.s8.bf16 %v1205
        %v1470 = vunpack.c.l.s8.bf16 %v1206
        %v1471 = vunpack.c.l.s8.bf16 %v1207
        %v1472 = vunpack.c.h.s8.bf16 %v1200
        %v1473 = vunpack.c.h.s8.bf16 %v1201
        %v1474 = vunpack.c.h.s8.bf16 %v1202
        %v1475 = vunpack.c.h.s8.bf16 %v1203
        %v1476 = vunpack.c.h.s8.bf16 %v1204
        %v1477 = vunpack.c.h.s8.bf16 %v1205
        %v1478 = vunpack.c.h.s8.bf16 %v1206
        %v1479 = vunpack.c.h.s8.bf16 %v1207
        %v1480 = vunpack.c.l.s8.bf16 %v1208
        %v1481 = vunpack.c.l.s8.bf16 %v1209
        %v1482 = vunpack.c.l.s8.bf16 %v1210
        %v1483 = vunpack.c.l.s8.bf16 %v1211
        %v1484 = vunpack.c.l.s8.bf16 %v1212
        %v1485 = vunpack.c.l.s8.bf16 %v1213
        %v1486 = vunpack.c.l.s8.bf16 %v1214
        %v1487 = vunpack.c.l.s8.bf16 %v1215
        %v1488 = vunpack.c.h.s8.bf16 %v1208
        %v1489 = vunpack.c.h.s8.bf16 %v1209
        %v1490 = vunpack.c.h.s8.bf16 %v1210
        %v1491 = vunpack.c.h.s8.bf16 %v1211
        %v1492 = vunpack.c.h.s8.bf16 %v1212
        %v1493 = vunpack.c.h.s8.bf16 %v1213
        %v1494 = vunpack.c.h.s8.bf16 %v1214
        %v1495 = vunpack.c.h.s8.bf16 %v1215
        %v1496 = vunpack.c.l.s8.bf16 %v1216
        %v1497 = vunpack.c.l.s8.bf16 %v1217
        %v1498 = vunpack.c.l.s8.bf16 %v1218
        %v1499 = vunpack.c.l.s8.bf16 %v1219
        %v1500 = vunpack.c.l.s8.bf16 %v1220
        %v1501 = vunpack.c.l.s8.bf16 %v1221
        %v1502 = vunpack.c.l.s8.bf16 %v1222
        %v1503 = vunpack.c.l.s8.bf16 %v1223
        %v1504 = vunpack.c.h.s8.bf16 %v1216
        %v1505 = vunpack.c.h.s8.bf16 %v1217
        %v1506 = vunpack.c.h.s8.bf16 %v1218
        %v1507 = vunpack.c.h.s8.bf16 %v1219
        %v1508 = vunpack.c.h.s8.bf16 %v1220
        %v1509 = vunpack.c.h.s8.bf16 %v1221
        %v1510 = vunpack.c.h.s8.bf16 %v1222
        %v1511 = vunpack.c.h.s8.bf16 %v1223
        %v1512 = vunpack.c.l.s8.bf16 %v1224
        %v1513 = vunpack.c.l.s8.bf16 %v1225
        %v1514 = vunpack.c.l.s8.bf16 %v1226
        %v1515 = vunpack.c.l.s8.bf16 %v1227
        %v1516 = vunpack.c.l.s8.bf16 %v1228
        %v1517 = vunpack.c.l.s8.bf16 %v1229
        %v1518 = vunpack.c.l.s8.bf16 %v1230
        %v1519 = vunpack.c.l.s8.bf16 %v1231
        %v1520 = vunpack.c.h.s8.bf16 %v1224
        %v1521 = vunpack.c.h.s8.bf16 %v1225
        %v1522 = vunpack.c.h.s8.bf16 %v1226
        %v1523 = vunpack.c.h.s8.bf16 %v1227
        %v1524 = vunpack.c.h.s8.bf16 %v1228
        %v1525 = vunpack.c.h.s8.bf16 %v1229
        %v1526 = vunpack.c.h.s8.bf16 %v1230
        %v1527 = vunpack.c.h.s8.bf16 %v1231
        %v1528 = vunpack.c.l.s8.bf16 %v1232
        %v1529 = vunpack.c.l.s8.bf16 %v1233
        %v1530 = vunpack.c.l.s8.bf16 %v1234
        %v1531 = vunpack.c.l.s8.bf16 %v1235
        %v1532 = vunpack.c.l.s8.bf16 %v1236
        %v1533 = vunpack.c.l.s8.bf16 %v1237
        %v1534 = vunpack.c.l.s8.bf16 %v1238
        %v1535 = vunpack.c.l.s8.bf16 %v1239
        %v1536 = vunpack.c.h.s8.bf16 %v1232
        %v1537 = vunpack.c.h.s8.bf16 %v1233
        %v1538 = vunpack.c.h.s8.bf16 %v1234
        %v1539 = vunpack.c.h.s8.bf16 %v1235
        %v1540 = vunpack.c.h.s8.bf16 %v1236
        %v1541 = vunpack.c.h.s8.bf16 %v1237
        %v1542 = vunpack.c.h.s8.bf16 %v1238
        %v1543 = vunpack.c.h.s8.bf16 %v1239
        %v1544 = vunpack.c.l.s8.bf16 %v1240
        %v1545 = vunpack.c.l.s8.bf16 %v1241
        %v1546 = vunpack.c.l.s8.bf16 %v1242
        %v1547 = vunpack.c.l.s8.bf16 %v1243
        %v1548 = vunpack.c.l.s8.bf16 %v1244
        %v1549 = vunpack.c.l.s8.bf16 %v1245
        %v1550 = vunpack.c.l.s8.bf16 %v1246
        %v1551 = vunpack.c.l.s8.bf16 %v1247
        %v1552 = vunpack.c.h.s8.bf16 %v1240
        %v1553 = vunpack.c.h.s8.bf16 %v1241
        %v1554 = vunpack.c.h.s8.bf16 %v1242
        %v1555 = vunpack.c.h.s8.bf16 %v1243
        %v1556 = vunpack.c.h.s8.bf16 %v1244
        %v1557 = vunpack.c.h.s8.bf16 %v1245
        %v1558 = vunpack.c.h.s8.bf16 %v1246
        %v1559 = vunpack.c.h.s8.bf16 %v1247
        %v1560 = vunpack.c.l.s8.bf16 %v1248
        %v1561 = vunpack.c.l.s8.bf16 %v1249
        %v1562 = vunpack.c.l.s8.bf16 %v1250
        %v1563 = vunpack.c.l.s8.bf16 %v1251
        %v1564 = vunpack.c.l.s8.bf16 %v1252
        %v1565 = vunpack.c.l.s8.bf16 %v1253
        %v1566 = vunpack.c.l.s8.bf16 %v1254
        %v1567 = vunpack.c.l.s8.bf16 %v1255
        %v1568 = vunpack.c.h.s8.bf16 %v1248
        %v1569 = vunpack.c.h.s8.bf16 %v1249
        %v1570 = vunpack.c.h.s8.bf16 %v1250
        %v1571 = vunpack.c.h.s8.bf16 %v1251
        %v1572 = vunpack.c.h.s8.bf16 %v1252
        %v1573 = vunpack.c.h.s8.bf16 %v1253
        %v1574 = vunpack.c.h.s8.bf16 %v1254
        %v1575 = vunpack.c.h.s8.bf16 %v1255
        %v1576 = vunpack.c.l.s8.bf16 %v1256
        %v1577 = vunpack.c.l.s8.bf16 %v1257
        %v1578 = vunpack.c.l.s8.bf16 %v1258
        %v1579 = vunpack.c.l.s8.bf16 %v1259
        %v1580 = vunpack.c.l.s8.bf16 %v1260
        %v1581 = vunpack.c.l.s8.bf16 %v1261
        %v1582 = vunpack.c.l.s8.bf16 %v1262
        %v1583 = vunpack.c.l.s8.bf16 %v1263
        %v1584 = vunpack.c.h.s8.bf16 %v1256
        %v1585 = vunpack.c.h.s8.bf16 %v1257
        %v1586 = vunpack.c.h.s8.bf16 %v1258
        %v1587 = vunpack.c.h.s8.bf16 %v1259
        %v1588 = vunpack.c.h.s8.bf16 %v1260
        %v1589 = vunpack.c.h.s8.bf16 %v1261
        %v1590 = vunpack.c.h.s8.bf16 %v1262
        %v1591 = vunpack.c.h.s8.bf16 %v1263
        %v1592 = vunpack.c.l.s8.bf16 %v1264
        %v1593 = vunpack.c.l.s8.bf16 %v1265
        %v1594 = vunpack.c.l.s8.bf16 %v1266
        %v1595 = vunpack.c.l.s8.bf16 %v1267
        %v1596 = vunpack.c.l.s8.bf16 %v1268
        %v1597 = vunpack.c.l.s8.bf16 %v1269
        %v1598 = vunpack.c.l.s8.bf16 %v1270
        %v1599 = vunpack.c.l.s8.bf16 %v1271
        %v1600 = vunpack.c.h.s8.bf16 %v1264
        %v1601 = vunpack.c.h.s8.bf16 %v1265
        %v1602 = vunpack.c.h.s8.bf16 %v1266
        %v1603 = vunpack.c.h.s8.bf16 %v1267
        %v1604 = vunpack.c.h.s8.bf16 %v1268
        %v1605 = vunpack.c.h.s8.bf16 %v1269
        %v1606 = vunpack.c.h.s8.bf16 %v1270
        %v1607 = vunpack.c.h.s8.bf16 %v1271
        %v1608 = vunpack.c.l.s8.bf16 %v1272
        %v1609 = vunpack.c.l.s8.bf16 %v1273
        %v1610 = vunpack.c.l.s8.bf16 %v1274
        %v1611 = vunpack.c.l.s8.bf16 %v1275
        %v1612 = vunpack.c.l.s8.bf16 %v1276
        %v1613 = vunpack.c.l.s8.bf16 %v1277
        %v1614 = vunpack.c.l.s8.bf16 %v1278
        %v1615 = vunpack.c.l.s8.bf16 %v1279
        %v1616 = vunpack.c.h.s8.bf16 %v1272
        %v1617 = vunpack.c.h.s8.bf16 %v1273
        %v1618 = vunpack.c.h.s8.bf16 %v1274
        %v1619 = vunpack.c.h.s8.bf16 %v1275
        %v1620 = vunpack.c.h.s8.bf16 %v1276
        %v1621 = vunpack.c.h.s8.bf16 %v1277
        %v1622 = vunpack.c.h.s8.bf16 %v1278
        %v1623 = vunpack.c.h.s8.bf16 %v1279
        %v1624 = vunpack.c.l.s8.bf16 %v1280
        %v1625 = vunpack.c.l.s8.bf16 %v1281
        %v1626 = vunpack.c.l.s8.bf16 %v1282
        %v1627 = vunpack.c.l.s8.bf16 %v1283
        %v1628 = vunpack.c.l.s8.bf16 %v1284
        %v1629 = vunpack.c.l.s8.bf16 %v1285
        %v1630 = vunpack.c.l.s8.bf16 %v1286
        %v1631 = vunpack.c.l.s8.bf16 %v1287
        %v1632 = vunpack.c.h.s8.bf16 %v1280
        %v1633 = vunpack.c.h.s8.bf16 %v1281
        %v1634 = vunpack.c.h.s8.bf16 %v1282
        %v1635 = vunpack.c.h.s8.bf16 %v1283
        %v1636 = vunpack.c.h.s8.bf16 %v1284
        %v1637 = vunpack.c.h.s8.bf16 %v1285
        %v1638 = vunpack.c.h.s8.bf16 %v1286
        %v1639 = vunpack.c.h.s8.bf16 %v1287
        %v1640 = vunpack.c.l.s8.bf16 %v1288
        %v1641 = vunpack.c.l.s8.bf16 %v1289
        %v1642 = vunpack.c.l.s8.bf16 %v1290
        %v1643 = vunpack.c.l.s8.bf16 %v1291
        %v1644 = vunpack.c.l.s8.bf16 %v1292
        %v1645 = vunpack.c.l.s8.bf16 %v1293
        %v1646 = vunpack.c.l.s8.bf16 %v1294
        %v1647 = vunpack.c.l.s8.bf16 %v1295
        %v1648 = vunpack.c.h.s8.bf16 %v1288
        %v1649 = vunpack.c.h.s8.bf16 %v1289
        %v1650 = vunpack.c.h.s8.bf16 %v1290
        %v1651 = vunpack.c.h.s8.bf16 %v1291
        %v1652 = vunpack.c.h.s8.bf16 %v1292
        %v1653 = vunpack.c.h.s8.bf16 %v1293
        %v1654 = vunpack.c.h.s8.bf16 %v1294
        %v1655 = vunpack.c.h.s8.bf16 %v1295
        %v1656 = vunpack.c.l.s8.bf16 %v1296
        %v1657 = vunpack.c.l.s8.bf16 %v1297
        %v1658 = vunpack.c.l.s8.bf16 %v1298
        %v1659 = vunpack.c.l.s8.bf16 %v1299
        %v1660 = vunpack.c.l.s8.bf16 %v1300
        %v1661 = vunpack.c.l.s8.bf16 %v1301
        %v1662 = vunpack.c.l.s8.bf16 %v1302
        %v1663 = vunpack.c.l.s8.bf16 %v1303
        %v1664 = vunpack.c.h.s8.bf16 %v1296
        %v1665 = vunpack.c.h.s8.bf16 %v1297
        %v1666 = vunpack.c.h.s8.bf16 %v1298
        %v1667 = vunpack.c.h.s8.bf16 %v1299
        %v1668 = vunpack.c.h.s8.bf16 %v1300
        %v1669 = vunpack.c.h.s8.bf16 %v1301
        %v1670 = vunpack.c.h.s8.bf16 %v1302
        %v1671 = vunpack.c.h.s8.bf16 %v1303
        %v1672 = vunpack.c.l.s8.bf16 %v1304
        %v1673 = vunpack.c.l.s8.bf16 %v1305
        %v1674 = vunpack.c.l.s8.bf16 %v1306
        %v1675 = vunpack.c.l.s8.bf16 %v1307
        %v1676 = vunpack.c.l.s8.bf16 %v1308
        %v1677 = vunpack.c.l.s8.bf16 %v1309
        %v1678 = vunpack.c.l.s8.bf16 %v1310
        %v1679 = vunpack.c.l.s8.bf16 %v1311
        %v1680 = vunpack.c.h.s8.bf16 %v1304
        %v1681 = vunpack.c.h.s8.bf16 %v1305
        %v1682 = vunpack.c.h.s8.bf16 %v1306
        %v1683 = vunpack.c.h.s8.bf16 %v1307
        %v1684 = vunpack.c.h.s8.bf16 %v1308
        %v1685 = vunpack.c.h.s8.bf16 %v1309
        %v1686 = vunpack.c.h.s8.bf16 %v1310
        %v1687 = vunpack.c.h.s8.bf16 %v1311
        %v1688 = vunpack.c.l.s8.bf16 %v1312
        %v1689 = vunpack.c.l.s8.bf16 %v1313
        %v1690 = vunpack.c.l.s8.bf16 %v1314
        %v1691 = vunpack.c.l.s8.bf16 %v1315
        %v1692 = vunpack.c.l.s8.bf16 %v1316
        %v1693 = vunpack.c.l.s8.bf16 %v1317
        %v1694 = vunpack.c.l.s8.bf16 %v1318
        %v1695 = vunpack.c.l.s8.bf16 %v1319
        %v1696 = vunpack.c.h.s8.bf16 %v1312
        %v1697 = vunpack.c.h.s8.bf16 %v1313
        %v1698 = vunpack.c.h.s8.bf16 %v1314
        %v1699 = vunpack.c.h.s8.bf16 %v1315
        %v1700 = vunpack.c.h.s8.bf16 %v1316
        %v1701 = vunpack.c.h.s8.bf16 %v1317
        %v1702 = vunpack.c.h.s8.bf16 %v1318
        %v1703 = vunpack.c.h.s8.bf16 %v1319
        %v1704 = vunpack.c.l.s8.bf16 %v1320
        %v1705 = vunpack.c.l.s8.bf16 %v1321
        %v1706 = vunpack.c.l.s8.bf16 %v1322
        %v1707 = vunpack.c.l.s8.bf16 %v1323
        %v1708 = vunpack.c.l.s8.bf16 %v1324
        %v1709 = vunpack.c.l.s8.bf16 %v1325
        %v1710 = vunpack.c.l.s8.bf16 %v1326
        %v1711 = vunpack.c.l.s8.bf16 %v1327
        %v1712 = vunpack.c.h.s8.bf16 %v1320
        %v1713 = vunpack.c.h.s8.bf16 %v1321
        %v1714 = vunpack.c.h.s8.bf16 %v1322
        %v1715 = vunpack.c.h.s8.bf16 %v1323
        %v1716 = vunpack.c.h.s8.bf16 %v1324
        %v1717 = vunpack.c.h.s8.bf16 %v1325
        %v1718 = vunpack.c.h.s8.bf16 %v1326
        %v1719 = vunpack.c.h.s8.bf16 %v1327
        %v1720 = vunpack.c.l.s8.bf16 %v1328
        %v1721 = vunpack.c.l.s8.bf16 %v1329
        %v1722 = vunpack.c.l.s8.bf16 %v1330
        %v1723 = vunpack.c.l.s8.bf16 %v1331
        %v1724 = vunpack.c.l.s8.bf16 %v1332
        %v1725 = vunpack.c.l.s8.bf16 %v1333
        %v1726 = vunpack.c.l.s8.bf16 %v1334
        %v1727 = vunpack.c.l.s8.bf16 %v1335
        %v1728 = vunpack.c.h.s8.bf16 %v1328
        %v1729 = vunpack.c.h.s8.bf16 %v1329
        %v1730 = vunpack.c.h.s8.bf16 %v1330
        %v1731 = vunpack.c.h.s8.bf16 %v1331
        %v1732 = vunpack.c.h.s8.bf16 %v1332
        %v1733 = vunpack.c.h.s8.bf16 %v1333
        %v1734 = vunpack.c.h.s8.bf16 %v1334
        %v1735 = vunpack.c.h.s8.bf16 %v1335
        %v1736 = vunpack.c.l.s8.bf16 %v1336
        %v1737 = vunpack.c.l.s8.bf16 %v1337
        %v1738 = vunpack.c.l.s8.bf16 %v1338
        %v1739 = vunpack.c.l.s8.bf16 %v1339
        %v1740 = vunpack.c.l.s8.bf16 %v1340
        %v1741 = vunpack.c.l.s8.bf16 %v1341
        %v1742 = vunpack.c.l.s8.bf16 %v1342
        %v1743 = vunpack.c.l.s8.bf16 %v1343
        %v1744 = vunpack.c.h.s8.bf16 %v1336
        %v1745 = vunpack.c.h.s8.bf16 %v1337
        %v1746 = vunpack.c.h.s8.bf16 %v1338
        %v1747 = vunpack.c.h.s8.bf16 %v1339
        %v1748 = vunpack.c.h.s8.bf16 %v1340
        %v1749 = vunpack.c.h.s8.bf16 %v1341
        %v1750 = vunpack.c.h.s8.bf16 %v1342
        %v1751 = vunpack.c.h.s8.bf16 %v1343
        %v1752 = vunpack.c.l.s8.bf16 %v1344
        %v1753 = vunpack.c.l.s8.bf16 %v1345
        %v1754 = vunpack.c.l.s8.bf16 %v1346
        %v1755 = vunpack.c.l.s8.bf16 %v1347
        %v1756 = vunpack.c.l.s8.bf16 %v1348
        %v1757 = vunpack.c.l.s8.bf16 %v1349
        %v1758 = vunpack.c.l.s8.bf16 %v1350
        %v1759 = vunpack.c.l.s8.bf16 %v1351
        %v1760 = vunpack.c.h.s8.bf16 %v1344
        %v1761 = vunpack.c.h.s8.bf16 %v1345
        %v1762 = vunpack.c.h.s8.bf16 %v1346
        %v1763 = vunpack.c.h.s8.bf16 %v1347
        %v1764 = vunpack.c.h.s8.bf16 %v1348
        %v1765 = vunpack.c.h.s8.bf16 %v1349
        %v1766 = vunpack.c.h.s8.bf16 %v1350
        %v1767 = vunpack.c.h.s8.bf16 %v1351
        %v1768 = vunpack.c.l.s8.bf16 %v1352
        %v1769 = vunpack.c.l.s8.bf16 %v1353
        %v1770 = vunpack.c.l.s8.bf16 %v1354
        %v1771 = vunpack.c.l.s8.bf16 %v1355
        %v1772 = vunpack.c.l.s8.bf16 %v1356
        %v1773 = vunpack.c.l.s8.bf16 %v1357
        %v1774 = vunpack.c.l.s8.bf16 %v1358
        %v1775 = vunpack.c.l.s8.bf16 %v1359
        %v1776 = vunpack.c.h.s8.bf16 %v1352
        %v1777 = vunpack.c.h.s8.bf16 %v1353
        %v1778 = vunpack.c.h.s8.bf16 %v1354
        %v1779 = vunpack.c.h.s8.bf16 %v1355
        %v1780 = vunpack.c.h.s8.bf16 %v1356
        %v1781 = vunpack.c.h.s8.bf16 %v1357
        %v1782 = vunpack.c.h.s8.bf16 %v1358
        %v1783 = vunpack.c.h.s8.bf16 %v1359
        %v1784 = vunpack.c.l.s8.bf16 %v1360
        %v1785 = vunpack.c.l.s8.bf16 %v1361
        %v1786 = vunpack.c.l.s8.bf16 %v1362
        %v1787 = vunpack.c.l.s8.bf16 %v1363
        %v1788 = vunpack.c.l.s8.bf16 %v1364
        %v1789 = vunpack.c.l.s8.bf16 %v1365
        %v1790 = vunpack.c.l.s8.bf16 %v1366
        %v1791 = vunpack.c.l.s8.bf16 %v1367
        %v1792 = vunpack.c.h.s8.bf16 %v1360
        %v1793 = vunpack.c.h.s8.bf16 %v1361
        %v1794 = vunpack.c.h.s8.bf16 %v1362
        %v1795 = vunpack.c.h.s8.bf16 %v1363
        %v1796 = vunpack.c.h.s8.bf16 %v1364
        %v1797 = vunpack.c.h.s8.bf16 %v1365
        %v1798 = vunpack.c.h.s8.bf16 %v1366
        %v1799 = vunpack.c.h.s8.bf16 %v1367
        %v1800 = vunpack.c.l.s8.bf16 %v1368
        %v1801 = vunpack.c.l.s8.bf16 %v1369
        %v1802 = vunpack.c.l.s8.bf16 %v1370
        %v1803 = vunpack.c.l.s8.bf16 %v1371
        %v1804 = vunpack.c.l.s8.bf16 %v1372
        %v1805 = vunpack.c.l.s8.bf16 %v1373
        %v1806 = vunpack.c.l.s8.bf16 %v1374
        %v1807 = vunpack.c.l.s8.bf16 %v1375
        %v1808 = vunpack.c.h.s8.bf16 %v1368
        %v1809 = vunpack.c.h.s8.bf16 %v1369
        %v1810 = vunpack.c.h.s8.bf16 %v1370
        %v1811 = vunpack.c.h.s8.bf16 %v1371
        %v1812 = vunpack.c.h.s8.bf16 %v1372
        %v1813 = vunpack.c.h.s8.bf16 %v1373
        %v1814 = vunpack.c.h.s8.bf16 %v1374
        %v1815 = vunpack.c.h.s8.bf16 %v1375
        %v1816 = vunpack.c.l.s8.bf16 %v1376
        %v1817 = vunpack.c.l.s8.bf16 %v1377
        %v1818 = vunpack.c.l.s8.bf16 %v1378
        %v1819 = vunpack.c.l.s8.bf16 %v1379
        %v1820 = vunpack.c.l.s8.bf16 %v1380
        %v1821 = vunpack.c.l.s8.bf16 %v1381
        %v1822 = vunpack.c.l.s8.bf16 %v1382
        %v1823 = vunpack.c.l.s8.bf16 %v1383
        %v1824 = vunpack.c.h.s8.bf16 %v1376
        %v1825 = vunpack.c.h.s8.bf16 %v1377
        %v1826 = vunpack.c.h.s8.bf16 %v1378
        %v1827 = vunpack.c.h.s8.bf16 %v1379
        %v1828 = vunpack.c.h.s8.bf16 %v1380
        %v1829 = vunpack.c.h.s8.bf16 %v1381
        %v1830 = vunpack.c.h.s8.bf16 %v1382
        %v1831 = vunpack.c.h.s8.bf16 %v1383
        %v1832 = vunpack.c.l.s8.bf16 %v1384
        %v1833 = vunpack.c.l.s8.bf16 %v1385
        %v1834 = vunpack.c.l.s8.bf16 %v1386
        %v1835 = vunpack.c.l.s8.bf16 %v1387
        %v1836 = vunpack.c.l.s8.bf16 %v1388
        %v1837 = vunpack.c.l.s8.bf16 %v1389
        %v1838 = vunpack.c.l.s8.bf16 %v1390
        %v1839 = vunpack.c.l.s8.bf16 %v1391
        %v1840 = vunpack.c.h.s8.bf16 %v1384
        %v1841 = vunpack.c.h.s8.bf16 %v1385
        %v1842 = vunpack.c.h.s8.bf16 %v1386
        %v1843 = vunpack.c.h.s8.bf16 %v1387
        %v1844 = vunpack.c.h.s8.bf16 %v1388
        %v1845 = vunpack.c.h.s8.bf16 %v1389
        %v1846 = vunpack.c.h.s8.bf16 %v1390
        %v1847 = vunpack.c.h.s8.bf16 %v1391
        %v1848 = vunpack.c.l.s8.bf16 %v1392
        %v1849 = vunpack.c.l.s8.bf16 %v1393
        %v1850 = vunpack.c.l.s8.bf16 %v1394
        %v1851 = vunpack.c.l.s8.bf16 %v1395
        %v1852 = vunpack.c.l.s8.bf16 %v1396
        %v1853 = vunpack.c.l.s8.bf16 %v1397
        %v1854 = vunpack.c.l.s8.bf16 %v1398
        %v1855 = vunpack.c.l.s8.bf16 %v1399
        %v1856 = vunpack.c.h.s8.bf16 %v1392
        %v1857 = vunpack.c.h.s8.bf16 %v1393
        %v1858 = vunpack.c.h.s8.bf16 %v1394
        %v1859 = vunpack.c.h.s8.bf16 %v1395
        %v1860 = vunpack.c.h.s8.bf16 %v1396
        %v1861 = vunpack.c.h.s8.bf16 %v1397
        %v1862 = vunpack.c.h.s8.bf16 %v1398
        %v1863 = vunpack.c.h.s8.bf16 %v1399
        %v1864 = vunpack.c.l.s8.bf16 %v1400
        %v1865 = vunpack.c.l.s8.bf16 %v1401
        %v1866 = vunpack.c.l.s8.bf16 %v1402
        %v1867 = vunpack.c.l.s8.bf16 %v1403
        %v1868 = vunpack.c.l.s8.bf16 %v1404
        %v1869 = vunpack.c.l.s8.bf16 %v1405
        %v1870 = vunpack.c.l.s8.bf16 %v1406
        %v1871 = vunpack.c.l.s8.bf16 %v1407
        %v1872 = vunpack.c.h.s8.bf16 %v1400
        %v1873 = vunpack.c.h.s8.bf16 %v1401
        %v1874 = vunpack.c.h.s8.bf16 %v1402
        %v1875 = vunpack.c.h.s8.bf16 %v1403
        %v1876 = vunpack.c.h.s8.bf16 %v1404
        %v1877 = vunpack.c.h.s8.bf16 %v1405
        %v1878 = vunpack.c.h.s8.bf16 %v1406
        %v1879 = vunpack.c.h.s8.bf16 %v1407
        %v1880 = vunpack.c.l.s8.bf16 %v1408
        %v1881 = vunpack.c.l.s8.bf16 %v1409
        %v1882 = vunpack.c.l.s8.bf16 %v1410
        %v1883 = vunpack.c.l.s8.bf16 %v1411
        %v1884 = vunpack.c.l.s8.bf16 %v1412
        %v1885 = vunpack.c.l.s8.bf16 %v1413
        %v1886 = vunpack.c.l.s8.bf16 %v1414
        %v1887 = vunpack.c.l.s8.bf16 %v1415
        %v1888 = vunpack.c.h.s8.bf16 %v1408
        %v1889 = vunpack.c.h.s8.bf16 %v1409
        %v1890 = vunpack.c.h.s8.bf16 %v1410
        %v1891 = vunpack.c.h.s8.bf16 %v1411
        %v1892 = vunpack.c.h.s8.bf16 %v1412
        %v1893 = vunpack.c.h.s8.bf16 %v1413
        %v1894 = vunpack.c.h.s8.bf16 %v1414
        %v1895 = vunpack.c.h.s8.bf16 %v1415
        %v1896 = vunpack.c.l.s8.bf16 %v1416
        %v1897 = vunpack.c.l.s8.bf16 %v1417
        %v1898 = vunpack.c.l.s8.bf16 %v1418
        %v1899 = vunpack.c.l.s8.bf16 %v1419
        %v1900 = vunpack.c.l.s8.bf16 %v1420
        %v1901 = vunpack.c.l.s8.bf16 %v1421
        %v1902 = vunpack.c.l.s8.bf16 %v1422
        %v1903 = vunpack.c.l.s8.bf16 %v1423
        %v1904 = vunpack.c.h.s8.bf16 %v1416
        %v1905 = vunpack.c.h.s8.bf16 %v1417
        %v1906 = vunpack.c.h.s8.bf16 %v1418
        %v1907 = vunpack.c.h.s8.bf16 %v1419
        %v1908 = vunpack.c.h.s8.bf16 %v1420
        %v1909 = vunpack.c.h.s8.bf16 %v1421
        %v1910 = vunpack.c.h.s8.bf16 %v1422
        %v1911 = vunpack.c.h.s8.bf16 %v1423
        %v1912 = vunpack.c.l.s8.bf16 %v1424
        %v1913 = vunpack.c.l.s8.bf16 %v1425
        %v1914 = vunpack.c.l.s8.bf16 %v1426
        %v1915 = vunpack.c.l.s8.bf16 %v1427
        %v1916 = vunpack.c.l.s8.bf16 %v1428
        %v1917 = vunpack.c.l.s8.bf16 %v1429
        %v1918 = vunpack.c.l.s8.bf16 %v1430
        %v1919 = vunpack.c.l.s8.bf16 %v1431
        %v1920 = vunpack.c.h.s8.bf16 %v1424
        %v1921 = vunpack.c.h.s8.bf16 %v1425
        %v1922 = vunpack.c.h.s8.bf16 %v1426
        %v1923 = vunpack.c.h.s8.bf16 %v1427
        %v1924 = vunpack.c.h.s8.bf16 %v1428
        %v1925 = vunpack.c.h.s8.bf16 %v1429
        %v1926 = vunpack.c.h.s8.bf16 %v1430
        %v1927 = vunpack.c.h.s8.bf16 %v1431
        %v1928 = vunpack.c.l.s8.bf16 %v1432
        %v1929 = vunpack.c.l.s8.bf16 %v1433
        %v1930 = vunpack.c.l.s8.bf16 %v1434
        %v1931 = vunpack.c.l.s8.bf16 %v1435
        %v1932 = vunpack.c.l.s8.bf16 %v1436
        %v1933 = vunpack.c.l.s8.bf16 %v1437
        %v1934 = vunpack.c.l.s8.bf16 %v1438
        %v1935 = vunpack.c.l.s8.bf16 %v1439
        %v1936 = vunpack.c.h.s8.bf16 %v1432
        %v1937 = vunpack.c.h.s8.bf16 %v1433
        %v1938 = vunpack.c.h.s8.bf16 %v1434
        %v1939 = vunpack.c.h.s8.bf16 %v1435
        %v1940 = vunpack.c.h.s8.bf16 %v1436
        %v1941 = vunpack.c.h.s8.bf16 %v1437
        %v1942 = vunpack.c.h.s8.bf16 %v1438
        %v1943 = vunpack.c.h.s8.bf16 %v1439
        %v1944 = vunpack.c.l.s8.bf16 %v1440
        %v1945 = vunpack.c.l.s8.bf16 %v1441
        %v1946 = vunpack.c.l.s8.bf16 %v1442
        %v1947 = vunpack.c.l.s8.bf16 %v1443
        %v1948 = vunpack.c.l.s8.bf16 %v1444
        %v1949 = vunpack.c.l.s8.bf16 %v1445
        %v1950 = vunpack.c.l.s8.bf16 %v1446
        %v1951 = vunpack.c.l.s8.bf16 %v1447
        %v1952 = vunpack.c.h.s8.bf16 %v1440
        %v1953 = vunpack.c.h.s8.bf16 %v1441
        %v1954 = vunpack.c.h.s8.bf16 %v1442
        %v1955 = vunpack.c.h.s8.bf16 %v1443
        %v1956 = vunpack.c.h.s8.bf16 %v1444
        %v1957 = vunpack.c.h.s8.bf16 %v1445
        %v1958 = vunpack.c.h.s8.bf16 %v1446
        %v1959 = vunpack.c.h.s8.bf16 %v1447
        %1960 = vmatprep.subr.bf16.mxu0 %v1449
        %1961 = vmatpush1.bf16.msra.mxu0 %v1448
        %1962 = vmatprep.subr.bf16.mxu0 %v1457
        %1963 = vmatpush1.bf16.msra.mxu0 %v1456
        %1964 = vmatprep.subr.bf16.mxu0 %v1465
        %1965 = vmatpush1.bf16.msra.mxu0 %v1464
        %1966 = vmatprep.subr.bf16.mxu0 %v1473
        %1967 = vmatpush1.bf16.msra.mxu0 %v1472
        %1968 = vmatprep.subr.bf16.mxu0 %v1481
        %1969 = vmatpush1.bf16.msra.mxu0 %v1480
        %1970 = vmatprep.subr.bf16.mxu0 %v1489
        %1971 = vmatpush1.bf16.msra.mxu0 %v1488
        %1972 = vmatprep.subr.bf16.mxu0 %v1497
        %1973 = vmatpush1.bf16.msra.mxu0 %v1496
        %1974 = vmatprep.subr.bf16.mxu0 %v1505
        %1975 = vmatpush1.bf16.msra.mxu0 %v1504
        %1976 = vmatprep.subr.bf16.mxu0 %v1513
        %1977 = vmatpush1.bf16.msra.mxu0 %v1512
        %1978 = vmatprep.subr.bf16.mxu0 %v1521
        %1979 = vmatpush1.bf16.msra.mxu0 %v1520
        %1980 = vmatprep.subr.bf16.mxu0 %v1529
        %1981 = vmatpush1.bf16.msra.mxu0 %v1528
        %1982 = vmatprep.subr.bf16.mxu0 %v1537
        %1983 = vmatpush1.bf16.msra.mxu0 %v1536
        %1984 = vmatprep.subr.bf16.mxu0 %v1545
        %1985 = vmatpush1.bf16.msra.mxu0 %v1544
        %1986 = vmatprep.subr.bf16.mxu0 %v1553
        %1987 = vmatpush1.bf16.msra.mxu0 %v1552
        %1988 = vmatprep.subr.bf16.mxu0 %v1561
        %1989 = vmatpush1.bf16.msra.mxu0 %v1560
        %1990 = vmatprep.subr.bf16.mxu0 %v1569
        %1991 = vmatpush1.bf16.msra.mxu0 %v1568
        %1992 = vmatprep.mubr.bf16.mxu0 %v1185
        %1993 = vmatmul.mubr.bf16.gmra.mrb[0].mxu0 %v1184
        %v1994 = vpop.f32.mrb[0].mxu0
        %v1995 = vadd.f32 0.0, %v1994
        %v1996 = vpop.f32.mrb[0].mxu0
        %v1997 = vadd.f32 0.0, %v1996
        %v1998 = vpop.f32.mrb[0].mxu0
        %v1999 = vpop.f32.mrb[0].mxu0
        %2000 = vdwg.mxu0
        %2001 = vmatprep.subr.bf16.mxu0 %v1577
        %2002 = vmatpush1.bf16.msra.mxu0 %v1576
        %2003 = vmatprep.subr.bf16.mxu0 %v1585
        %2004 = vmatpush1.bf16.msra.mxu0 %v1584
        %2005 = vmatprep.subr.bf16.mxu0 %v1593
        %2006 = vmatpush1.bf16.msra.mxu0 %v1592
        %2007 = vmatprep.subr.bf16.mxu0 %v1601
        %2008 = vmatpush1.bf16.msra.mxu0 %v1600
        %2009 = vmatprep.subr.bf16.mxu0 %v1609
        %2010 = vmatpush1.bf16.msra.mxu0 %v1608
        %2011 = vmatprep.subr.bf16.mxu0 %v1617
        %2012 = vmatpush1.bf16.msra.mxu0 %v1616
        %2013 = vmatprep.subr.bf16.mxu0 %v1625
        %2014 = vmatpush1.bf16.msra.mxu0 %v1624
        %2015 = vmatprep.subr.bf16.mxu0 %v1633
        %2016 = vmatpush1.bf16.msra.mxu0 %v1632
        %2017 = vmatprep.subr.bf16.mxu0 %v1641
        %2018 = vmatpush1.bf16.msra.mxu0 %v1640
        %2019 = vmatprep.subr.bf16.mxu0 %v1649
        %2020 = vmatpush1.bf16.msra.mxu0 %v1648
        %2021 = vmatprep.subr.bf16.mxu0 %v1657
        %2022 = vmatpush1.bf16.msra.mxu0 %v1656
        %2023 = vmatprep.subr.bf16.mxu0 %v1665
        %2024 = vmatpush1.bf16.msra.mxu0 %v1664
        %2025 = vmatprep.subr.bf16.mxu0 %v1673
        %2026 = vmatpush1.bf16.msra.mxu0 %v1672
        %2027 = vmatprep.subr.bf16.mxu0 %v1681
        %2028 = vmatpush1.bf16.msra.mxu0 %v1680
        %2029 = vmatprep.subr.bf16.mxu0 %v1689
        %2030 = vmatpush1.bf16.msra.mxu0 %v1688
        %2031 = vmatprep.subr.bf16.mxu0 %v1697
        %2032 = vmatpush1.bf16.msra.mxu0 %v1696
        %2033 = vmatprep.mubr.bf16.mxu0 %v1187
        %2034 = vmatmul.mubr.bf16.gmra.mrb[0].mxu0 %v1186
        %v2035 = vpop.f32.mrb[0].mxu0
        %v2036 = vadd.f32 %v1995, %v2035
        %v2037 = vpop.f32.mrb[0].mxu0
        %v2038 = vadd.f32 %v1997, %v2037
        %v2039 = vpop.f32.mrb[0].mxu0
        %v2040 = vpop.f32.mrb[0].mxu0
        %2041 = vdwg.mxu0
        %2042 = vmatprep.subr.bf16.mxu0 %v1705
        %2043 = vmatpush1.bf16.msra.mxu0 %v1704
        %2044 = vmatprep.subr.bf16.mxu0 %v1713
        %2045 = vmatpush1.bf16.msra.mxu0 %v1712
        %2046 = vmatprep.subr.bf16.mxu0 %v1721
        %2047 = vmatpush1.bf16.msra.mxu0 %v1720
        %2048 = vmatprep.subr.bf16.mxu0 %v1729
        %2049 = vmatpush1.bf16.msra.mxu0 %v1728
        %2050 = vmatprep.subr.bf16.mxu0 %v1737
        %2051 = vmatpush1.bf16.msra.mxu0 %v1736
        %2052 = vmatprep.subr.bf16.mxu0 %v1745
        %2053 = vmatpush1.bf16.msra.mxu0 %v1744
        %2054 = vmatprep.subr.bf16.mxu0 %v1753
        %2055 = vmatpush1.bf16.msra.mxu0 %v1752
        %2056 = vmatprep.subr.bf16.mxu0 %v1761
        %2057 = vmatpush1.bf16.msra.mxu0 %v1760
        %2058 = vmatprep.subr.bf16.mxu0 %v1769
        %2059 = vmatpush1.bf16.msra.mxu0 %v1768
        %2060 = vmatprep.subr.bf16.mxu0 %v1777
        %2061 = vmatpush1.bf16.msra.mxu0 %v1776
        %2062 = vmatprep.subr.bf16.mxu0 %v1785
        %2063 = vmatpush1.bf16.msra.mxu0 %v1784
        %2064 = vmatprep.subr.bf16.mxu0 %v1793
        %2065 = vmatpush1.bf16.msra.mxu0 %v1792
        %2066 = vmatprep.subr.bf16.mxu0 %v1801
        %2067 = vmatpush1.bf16.msra.mxu0 %v1800
        %2068 = vmatprep.subr.bf16.mxu0 %v1809
        %2069 = vmatpush1.bf16.msra.mxu0 %v1808
        %2070 = vmatprep.subr.bf16.mxu0 %v1817
        %2071 = vmatpush1.bf16.msra.mxu0 %v1816
        %2072 = vmatprep.subr.bf16.mxu0 %v1825
        %2073 = vmatpush1.bf16.msra.mxu0 %v1824
        %2074 = vmatprep.mubr.bf16.mxu0 %v1189
        %2075 = vmatmul.mubr.bf16.gmra.mrb[0].mxu0 %v1188
        %v2076 = vpop.f32.mrb[0].mxu0
        %v2077 = vadd.f32 %v2036, %v2076
        %v2078 = vpop.f32.mrb[0].mxu0
        %v2079 = vadd.f32 %v2038, %v2078
        %v2080 = vpop.f32.mrb[0].mxu0
        %v2081 = vpop.f32.mrb[0].mxu0
        %2082 = vdwg.mxu0
        %2083 = vmatprep.subr.bf16.mxu0 %v1833
        %2084 = vmatpush1.bf16.msra.mxu0 %v1832
        %2085 = vmatprep.subr.bf16.mxu0 %v1841
        %2086 = vmatpush1.bf16.msra.mxu0 %v1840
        %2087 = vmatprep.subr.bf16.mxu0 %v1849
        %2088 = vmatpush1.bf16.msra.mxu0 %v1848
        %2089 = vmatprep.subr.bf16.mxu0 %v1857
        %2090 = vmatpush1.bf16.msra.mxu0 %v1856
        %2091 = vmatprep.subr.bf16.mxu0 %v1865
        %2092 = vmatpush1.bf16.msra.mxu0 %v1864
        %2093 = vmatprep.subr.bf16.mxu0 %v1873
        %2094 = vmatpush1.bf16.msra.mxu0 %v1872
        %2095 = vmatprep.subr.bf16.mxu0 %v1881
        %2096 = vmatpush1.bf16.msra.mxu0 %v1880
        %2097 = vmatprep.subr.bf16.mxu0 %v1889
        %2098 = vmatpush1.bf16.msra.mxu0 %v1888
        %2099 = vmatprep.subr.bf16.mxu0 %v1897
        %2100 = vmatpush1.bf16.msra.mxu0 %v1896
        %2101 = vmatprep.subr.bf16.mxu0 %v1905
        %2102 = vmatpush1.bf16.msra.mxu0 %v1904
        %2103 = vmatprep.subr.bf16.mxu0 %v1913
        %2104 = vmatpush1.bf16.msra.mxu0 %v1912
        %2105 = vmatprep.subr.bf16.mxu0 %v1921
        %2106 = vmatpush1.bf16.msra.mxu0 %v1920
        %2107 = vmatprep.subr.bf16.mxu0 %v1929
        %2108 = vmatpush1.bf16.msra.mxu0 %v1928
        %2109 = vmatprep.subr.bf16.mxu0 %v1937
        %2110 = vmatpush1.bf16.msra.mxu0 %v1936
        %2111 = vmatprep.subr.bf16.mxu0 %v1945
        %2112 = vmatpush1.bf16.msra.mxu0 %v1944
        %2113 = vmatprep.subr.bf16.mxu0 %v1953
        %2114 = vmatpush1.bf16.msra.mxu0 %v1952
        %2115 = vmatprep.mubr.bf16.mxu0 %v1191
        %2116 = vmatmul.mubr.bf16.gmra.mrb[0].mxu0 %v1190
        %v2117 = vpop.f32.mrb[0].mxu0
        %v2118 = vadd.f32 %v2077, %v2117
        %v2119 = vpop.f32.mrb[0].mxu0
        %v2120 = vadd.f32 %v2079, %v2119
        %v2121 = vpop.f32.mrb[0].mxu0
        %v2122 = vpop.f32.mrb[0].mxu0
        %2123 = vdwg.mxu0
        %2124 = vmatprep.subr.bf16.mxu0 %v1451
        %2125 = vmatpush1.bf16.msra.mxu0 %v1450
        %2126 = vmatprep.subr.bf16.mxu0 %v1459
        %2127 = vmatpush1.bf16.msra.mxu0 %v1458
        %2128 = vmatprep.subr.bf16.mxu0 %v1467
        %2129 = vmatpush1.bf16.msra.mxu0 %v1466
        %2130 = vmatprep.subr.bf16.mxu0 %v1475
        %2131 = vmatpush1.bf16.msra.mxu0 %v1474
        %2132 = vmatprep.subr.bf16.mxu0 %v1483
        %2133 = vmatpush1.bf16.msra.mxu0 %v1482
        %2134 = vmatprep.subr.bf16.mxu0 %v1491
        %2135 = vmatpush1.bf16.msra.mxu0 %v1490
        %2136 = vmatprep.subr.bf16.mxu0 %v1499
        %2137 = vmatpush1.bf16.msra.mxu0 %v1498
        %2138 = vmatprep.subr.bf16.mxu0 %v1507
        %2139 = vmatpush1.bf16.msra.mxu0 %v1506
        %2140 = vmatprep.subr.bf16.mxu0 %v1515
        %2141 = vmatpush1.bf16.msra.mxu0 %v1514
        %2142 = vmatprep.subr.bf16.mxu0 %v1523
        %2143 = vmatpush1.bf16.msra.mxu0 %v1522
        %2144 = vmatprep.subr.bf16.mxu0 %v1531
        %2145 = vmatpush1.bf16.msra.mxu0 %v1530
        %2146 = vmatprep.subr.bf16.mxu0 %v1539
        %2147 = vmatpush1.bf16.msra.mxu0 %v1538
        %2148 = vmatprep.subr.bf16.mxu0 %v1547
        %2149 = vmatpush1.bf16.msra.mxu0 %v1546
        %2150 = vmatprep.subr.bf16.mxu0 %v1555
        %2151 = vmatpush1.bf16.msra.mxu0 %v1554
        %2152 = vmatprep.subr.bf16.mxu0 %v1563
        %2153 = vmatpush1.bf16.msra.mxu0 %v1562
        %2154 = vmatprep.subr.bf16.mxu0 %v1571
        %2155 = vmatpush1.bf16.msra.mxu0 %v1570
        %2156 = vmatprep.mubr.bf16.mxu0 %v1185
        %2157 = vmatmul.mubr.bf16.gmra.mrb[0].mxu0 %v1184
        %v2158 = vpop.f32.mrb[0].mxu0
        %v2159 = vadd.f32 0.0, %v2158
        %v2160 = vpop.f32.mrb[0].mxu0
        %v2161 = vadd.f32 0.0, %v2160
        %v2162 = vpop.f32.mrb[0].mxu0
        %v2163 = vpop.f32.mrb[0].mxu0
        %2164 = vdwg.mxu0
        %2165 = vmatprep.subr.bf16.mxu0 %v1579
        %2166 = vmatpush1.bf16.msra.mxu0 %v1578
        %2167 = vmatprep.subr.bf16.mxu0 %v1587
        %2168 = vmatpush1.bf16.msra.mxu0 %v1586
        %2169 = vmatprep.subr.bf16.mxu0 %v1595
        %2170 = vmatpush1.bf16.msra.mxu0 %v1594
        %2171 = vmatprep.subr.bf16.mxu0 %v1603
        %2172 = vmatpush1.bf16.msra.mxu0 %v1602
        %2173 = vmatprep.subr.bf16.mxu0 %v1611
        %2174 = vmatpush1.bf16.msra.mxu0 %v1610
        %2175 = vmatprep.subr.bf16.mxu0 %v1619
        %2176 = vmatpush1.bf16.msra.mxu0 %v1618
        %2177 = vmatprep.subr.bf16.mxu0 %v1627
        %2178 = vmatpush1.bf16.msra.mxu0 %v1626
        %2179 = vmatprep.subr.bf16.mxu0 %v1635
        %2180 = vmatpush1.bf16.msra.mxu0 %v1634
        %2181 = vmatprep.subr.bf16.mxu0 %v1643
        %2182 = vmatpush1.bf16.msra.mxu0 %v1642
        %2183 = vmatprep.subr.bf16.mxu0 %v1651
        %2184 = vmatpush1.bf16.msra.mxu0 %v1650
        %2185 = vmatprep.subr.bf16.mxu0 %v1659
        %2186 = vmatpush1.bf16.msra.mxu0 %v1658
        %2187 = vmatprep.subr.bf16.mxu0 %v1667
        %2188 = vmatpush1.bf16.msra.mxu0 %v1666
        %2189 = vmatprep.subr.bf16.mxu0 %v1675
        %2190 = vmatpush1.bf16.msra.mxu0 %v1674
        %2191 = vmatprep.subr.bf16.mxu0 %v1683
        %2192 = vmatpush1.bf16.msra.mxu0 %v1682
        %2193 = vmatprep.subr.bf16.mxu0 %v1691
        %2194 = vmatpush1.bf16.msra.mxu0 %v1690
        %2195 = vmatprep.subr.bf16.mxu0 %v1699
        %2196 = vmatpush1.bf16.msra.mxu0 %v1698
        %2197 = vmatprep.mubr.bf16.mxu0 %v1187
        %2198 = vmatmul.mubr.bf16.gmra.mrb[0].mxu0 %v1186
        %v2199 = vpop.f32.mrb[0].mxu0
        %v2200 = vadd.f32 %v2159, %v2199
        %v2201 = vpop.f32.mrb[0].mxu0
        %v2202 = vadd.f32 %v2161, %v2201
        %v2203 = vpop.f32.mrb[0].mxu0
        %v2204 = vpop.f32.mrb[0].mxu0
        %2205 = vdwg.mxu0
        %2206 = vmatprep.subr.bf16.mxu0 %v1707
        %2207 = vmatpush1.bf16.msra.mxu0 %v1706
        %2208 = vmatprep.subr.bf16.mxu0 %v1715
        %2209 = vmatpush1.bf16.msra.mxu0 %v1714
        %2210 = vmatprep.subr.bf16.mxu0 %v1723
        %2211 = vmatpush1.bf16.msra.mxu0 %v1722
        %2212 = vmatprep.subr.bf16.mxu0 %v1731
        %2213 = vmatpush1.bf16.msra.mxu0 %v1730
        %2214 = vmatprep.subr.bf16.mxu0 %v1739
        %2215 = vmatpush1.bf16.msra.mxu0 %v1738
        %2216 = vmatprep.subr.bf16.mxu0 %v1747
        %2217 = vmatpush1.bf16.msra.mxu0 %v1746
        %2218 = vmatprep.subr.bf16.mxu0 %v1755
        %2219 = vmatpush1.bf16.msra.mxu0 %v1754
        %2220 = vmatprep.subr.bf16.mxu0 %v1763
        %2221 = vmatpush1.bf16.msra.mxu0 %v1762
        %2222 = vmatprep.subr.bf16.mxu0 %v1771
        %2223 = vmatpush1.bf16.msra.mxu0 %v1770
        %2224 = vmatprep.subr.bf16.mxu0 %v1779
        %2225 = vmatpush1.bf16.msra.mxu0 %v1778
        %2226 = vmatprep.subr.bf16.mxu0 %v1787
        %2227 = vmatpush1.bf16.msra.mxu0 %v1786
        %2228 = vmatprep.subr.bf16.mxu0 %v1795
        %2229 = vmatpush1.bf16.msra.mxu0 %v1794
        %2230 = vmatprep.subr.bf16.mxu0 %v1803
        %2231 = vmatpush1.bf16.msra.mxu0 %v1802
        %2232 = vmatprep.subr.bf16.mxu0 %v1811
        %2233 = vmatpush1.bf16.msra.mxu0 %v1810
        %2234 = vmatprep.subr.bf16.mxu0 %v1819
        %2235 = vmatpush1.bf16.msra.mxu0 %v1818
        %2236 = vmatprep.subr.bf16.mxu0 %v1827
        %2237 = vmatpush1.bf16.msra.mxu0 %v1826
        %2238 = vmatprep.mubr.bf16.mxu0 %v1189
        %2239 = vmatmul.mubr.bf16.gmra.mrb[0].mxu0 %v1188
        %v2240 = vpop.f32.mrb[0].mxu0
        %v2241 = vadd.f32 %v2200, %v2240
        %v2242 = vpop.f32.mrb[0].mxu0
        %v2243 = vadd.f32 %v2202, %v2242
        %v2244 = vpop.f32.mrb[0].mxu0
        %v2245 = vpop.f32.mrb[0].mxu0
        %2246 = vdwg.mxu0
        %2247 = vmatprep.subr.bf16.mxu0 %v1835
        %2248 = vmatpush1.bf16.msra.mxu0 %v1834
        %2249 = vmatprep.subr.bf16.mxu0 %v1843
        %2250 = vmatpush1.bf16.msra.mxu0 %v1842
        %2251 = vmatprep.subr.bf16.mxu0 %v1851
        %2252 = vmatpush1.bf16.msra.mxu0 %v1850
        %2253 = vmatprep.subr.bf16.mxu0 %v1859
        %2254 = vmatpush1.bf16.msra.mxu0 %v1858
        %2255 = vmatprep.subr.bf16.mxu0 %v1867
        %2256 = vmatpush1.bf16.msra.mxu0 %v1866
        %2257 = vmatprep.subr.bf16.mxu0 %v1875
        %2258 = vmatpush1.bf16.msra.mxu0 %v1874
        %2259 = vmatprep.subr.bf16.mxu0 %v1883
        %2260 = vmatpush1.bf16.msra.mxu0 %v1882
        %2261 = vmatprep.subr.bf16.mxu0 %v1891
        %2262 = vmatpush1.bf16.msra.mxu0 %v1890
        %2263 = vmatprep.subr.bf16.mxu0 %v1899
        %2264 = vmatpush1.bf16.msra.mxu0 %v1898
        %2265 = vmatprep.subr.bf16.mxu0 %v1907
        %2266 = vmatpush1.bf16.msra.mxu0 %v1906
        %2267 = vmatprep.subr.bf16.mxu0 %v1915
        %2268 = vmatpush1.bf16.msra.mxu0 %v1914
        %2269 = vmatprep.subr.bf16.mxu0 %v1923
        %2270 = vmatpush1.bf16.msra.mxu0 %v1922
        %2271 = vmatprep.subr.bf16.mxu0 %v1931
        %2272 = vmatpush1.bf16.msra.mxu0 %v1930
        %2273 = vmatprep.subr.bf16.mxu0 %v1939
        %2274 = vmatpush1.bf16.msra.mxu0 %v1938
        %2275 = vmatprep.subr.bf16.mxu0 %v1947
        %2276 = vmatpush1.bf16.msra.mxu0 %v1946
        %2277 = vmatprep.subr.bf16.mxu0 %v1955
        %2278 = vmatpush1.bf16.msra.mxu0 %v1954
        %2279 = vmatprep.mubr.bf16.mxu0 %v1191
        %2280 = vmatmul.mubr.bf16.gmra.mrb[0].mxu0 %v1190
        %v2281 = vpop.f32.mrb[0].mxu0
        %v2282 = vadd.f32 %v2241, %v2281
        %v2283 = vpop.f32.mrb[0].mxu0
        %v2284 = vadd.f32 %v2243, %v2283
        %v2285 = vpop.f32.mrb[0].mxu0
        %v2286 = vpop.f32.mrb[0].mxu0
        %2287 = vdwg.mxu0
        %2288 = vmatprep.subr.bf16.mxu0 %v1453
        %2289 = vmatpush1.bf16.msra.mxu0 %v1452
        %2290 = vmatprep.subr.bf16.mxu0 %v1461
        %2291 = vmatpush1.bf16.msra.mxu0 %v1460
        %2292 = vmatprep.subr.bf16.mxu0 %v1469
        %2293 = vmatpush1.bf16.msra.mxu0 %v1468
        %2294 = vmatprep.subr.bf16.mxu0 %v1477
        %2295 = vmatpush1.bf16.msra.mxu0 %v1476
        %2296 = vmatprep.subr.bf16.mxu0 %v1485
        %2297 = vmatpush1.bf16.msra.mxu0 %v1484
        %2298 = vmatprep.subr.bf16.mxu0 %v1493
        %2299 = vmatpush1.bf16.msra.mxu0 %v1492
        %2300 = vmatprep.subr.bf16.mxu0 %v1501
        %2301 = vmatpush1.bf16.msra.mxu0 %v1500
        %2302 = vmatprep.subr.bf16.mxu0 %v1509
        %2303 = vmatpush1.bf16.msra.mxu0 %v1508
        %2304 = vmatprep.subr.bf16.mxu0 %v1517
        %2305 = vmatpush1.bf16.msra.mxu0 %v1516
        %2306 = vmatprep.subr.bf16.mxu0 %v1525
        %2307 = vmatpush1.bf16.msra.mxu0 %v1524
        %2308 = vmatprep.subr.bf16.mxu0 %v1533
        %2309 = vmatpush1.bf16.msra.mxu0 %v1532
        %2310 = vmatprep.subr.bf16.mxu0 %v1541
        %2311 = vmatpush1.bf16.msra.mxu0 %v1540
        %2312 = vmatprep.subr.bf16.mxu0 %v1549
        %2313 = vmatpush1.bf16.msra.mxu0 %v1548
        %2314 = vmatprep.subr.bf16.mxu0 %v1557
        %2315 = vmatpush1.bf16.msra.mxu0 %v1556
        %2316 = vmatprep.subr.bf16.mxu0 %v1565
        %2317 = vmatpush1.bf16.msra.mxu0 %v1564
        %2318 = vmatprep.subr.bf16.mxu0 %v1573
        %2319 = vmatpush1.bf16.msra.mxu0 %v1572
        %2320 = vmatprep.mubr.bf16.mxu0 %v1185
        %2321 = vmatmul.mubr.bf16.gmra.mrb[0].mxu0 %v1184
        %v2322 = vpop.f32.mrb[0].mxu0
        %v2323 = vadd.f32 0.0, %v2322
        %v2324 = vpop.f32.mrb[0].mxu0
        %v2325 = vadd.f32 0.0, %v2324
        %v2326 = vpop.f32.mrb[0].mxu0
        %v2327 = vpop.f32.mrb[0].mxu0
        %2328 = vdwg.mxu0
        %2329 = vmatprep.subr.bf16.mxu0 %v1581
        %2330 = vmatpush1.bf16.msra.mxu0 %v1580
        %2331 = vmatprep.subr.bf16.mxu0 %v1589
        %2332 = vmatpush1.bf16.msra.mxu0 %v1588
        %2333 = vmatprep.subr.bf16.mxu0 %v1597
        %2334 = vmatpush1.bf16.msra.mxu0 %v1596
        %2335 = vmatprep.subr.bf16.mxu0 %v1605
        %2336 = vmatpush1.bf16.msra.mxu0 %v1604
        %2337 = vmatprep.subr.bf16.mxu0 %v1613
        %2338 = vmatpush1.bf16.msra.mxu0 %v1612
        %2339 = vmatprep.subr.bf16.mxu0 %v1621
        %2340 = vmatpush1.bf16.msra.mxu0 %v1620
        %2341 = vmatprep.subr.bf16.mxu0 %v1629
        %2342 = vmatpush1.bf16.msra.mxu0 %v1628
        %2343 = vmatprep.subr.bf16.mxu0 %v1637
        %2344 = vmatpush1.bf16.msra.mxu0 %v1636
        %2345 = vmatprep.subr.bf16.mxu0 %v1645
        %2346 = vmatpush1.bf16.msra.mxu0 %v1644
        %2347 = vmatprep.subr.bf16.mxu0 %v1653
        %2348 = vmatpush1.bf16.msra.mxu0 %v1652
        %2349 = vmatprep.subr.bf16.mxu0 %v1661
        %2350 = vmatpush1.bf16.msra.mxu0 %v1660
        %2351 = vmatprep.subr.bf16.mxu0 %v1669
        %2352 = vmatpush1.bf16.msra.mxu0 %v1668
        %2353 = vmatprep.subr.bf16.mxu0 %v1677
        %2354 = vmatpush1.bf16.msra.mxu0 %v1676
        %2355 = vmatprep.subr.bf16.mxu0 %v1685
        %2356 = vmatpush1.bf16.msra.mxu0 %v1684
        %2357 = vmatprep.subr.bf16.mxu0 %v1693
        %2358 = vmatpush1.bf16.msra.mxu0 %v1692
        %2359 = vmatprep.subr.bf16.mxu0 %v1701
        %2360 = vmatpush1.bf16.msra.mxu0 %v1700
        %2361 = vmatprep.mubr.bf16.mxu0 %v1187
        %2362 = vmatmul.mubr.bf16.gmra.mrb[0].mxu0 %v1186
        %v2363 = vpop.f32.mrb[0].mxu0
        %v2364 = vadd.f32 %v2323, %v2363
        %v2365 = vpop.f32.mrb[0].mxu0
        %v2366 = vadd.f32 %v2325, %v2365
        %v2367 = vpop.f32.mrb[0].mxu0
        %v2368 = vpop.f32.mrb[0].mxu0
        %2369 = vdwg.mxu0
        %2370 = vmatprep.subr.bf16.mxu0 %v1709
        %2371 = vmatpush1.bf16.msra.mxu0 %v1708
        %2372 = vmatprep.subr.bf16.mxu0 %v1717
        %2373 = vmatpush1.bf16.msra.mxu0 %v1716
        %2374 = vmatprep.subr.bf16.mxu0 %v1725
        %2375 = vmatpush1.bf16.msra.mxu0 %v1724
        %2376 = vmatprep.subr.bf16.mxu0 %v1733
        %2377 = vmatpush1.bf16.msra.mxu0 %v1732
        %2378 = vmatprep.subr.bf16.mxu0 %v1741
        %2379 = vmatpush1.bf16.msra.mxu0 %v1740
        %2380 = vmatprep.subr.bf16.mxu0 %v1749
        %2381 = vmatpush1.bf16.msra.mxu0 %v1748
        %2382 = vmatprep.subr.bf16.mxu0 %v1757
        %2383 = vmatpush1.bf16.msra.mxu0 %v1756
        %2384 = vmatprep.subr.bf16.mxu0 %v1765
        %2385 = vmatpush1.bf16.msra.mxu0 %v1764
        %2386 = vmatprep.subr.bf16.mxu0 %v1773
        %2387 = vmatpush1.bf16.msra.mxu0 %v1772
        %2388 = vmatprep.subr.bf16.mxu0 %v1781
        %2389 = vmatpush1.bf16.msra.mxu0 %v1780
        %2390 = vmatprep.subr.bf16.mxu0 %v1789
        %2391 = vmatpush1.bf16.msra.mxu0 %v1788
        %2392 = vmatprep.subr.bf16.mxu0 %v1797
        %2393 = vmatpush1.bf16.msra.mxu0 %v1796
        %2394 = vmatprep.subr.bf16.mxu0 %v1805
        %2395 = vmatpush1.bf16.msra.mxu0 %v1804
        %2396 = vmatprep.subr.bf16.mxu0 %v1813
        %2397 = vmatpush1.bf16.msra.mxu0 %v1812
        %2398 = vmatprep.subr.bf16.mxu0 %v1821
        %2399 = vmatpush1.bf16.msra.mxu0 %v1820
        %2400 = vmatprep.subr.bf16.mxu0 %v1829
        %2401 = vmatpush1.bf16.msra.mxu0 %v1828
        %2402 = vmatprep.mubr.bf16.mxu0 %v1189
        %2403 = vmatmul.mubr.bf16.gmra.mrb[0].mxu0 %v1188
        %v2404 = vpop.f32.mrb[0].mxu0
        %v2405 = vadd.f32 %v2364, %v2404
        %v2406 = vpop.f32.mrb[0].mxu0
        %v2407 = vadd.f32 %v2366, %v2406
        %v2408 = vpop.f32.mrb[0].mxu0
        %v2409 = vpop.f32.mrb[0].mxu0
        %2410 = vdwg.mxu0
        %2411 = vmatprep.subr.bf16.mxu0 %v1837
        %2412 = vmatpush1.bf16.msra.mxu0 %v1836
        %2413 = vmatprep.subr.bf16.mxu0 %v1845
        %2414 = vmatpush1.bf16.msra.mxu0 %v1844
        %2415 = vmatprep.subr.bf16.mxu0 %v1853
        %2416 = vmatpush1.bf16.msra.mxu0 %v1852
        %2417 = vmatprep.subr.bf16.mxu0 %v1861
        %2418 = vmatpush1.bf16.msra.mxu0 %v1860
        %2419 = vmatprep.subr.bf16.mxu0 %v1869
        %2420 = vmatpush1.bf16.msra.mxu0 %v1868
        %2421 = vmatprep.subr.bf16.mxu0 %v1877
        %2422 = vmatpush1.bf16.msra.mxu0 %v1876
        %2423 = vmatprep.subr.bf16.mxu0 %v1885
        %2424 = vmatpush1.bf16.msra.mxu0 %v1884
        %2425 = vmatprep.subr.bf16.mxu0 %v1893
        %2426 = vmatpush1.bf16.msra.mxu0 %v1892
        %2427 = vmatprep.subr.bf16.mxu0 %v1901
        %2428 = vmatpush1.bf16.msra.mxu0 %v1900
        %2429 = vmatprep.subr.bf16.mxu0 %v1909
        %2430 = vmatpush1.bf16.msra.mxu0 %v1908
        %2431 = vmatprep.subr.bf16.mxu0 %v1917
        %2432 = vmatpush1.bf16.msra.mxu0 %v1916
        %2433 = vmatprep.subr.bf16.mxu0 %v1925
        %2434 = vmatpush1.bf16.msra.mxu0 %v1924
        %2435 = vmatprep.subr.bf16.mxu0 %v1933
        %2436 = vmatpush1.bf16.msra.mxu0 %v1932
        %2437 = vmatprep.subr.bf16.mxu0 %v1941
        %2438 = vmatpush1.bf16.msra.mxu0 %v1940
        %2439 = vmatprep.subr.bf16.mxu0 %v1949
        %2440 = vmatpush1.bf16.msra.mxu0 %v1948
        %2441 = vmatprep.subr.bf16.mxu0 %v1957
        %2442 = vmatpush1.bf16.msra.mxu0 %v1956
        %2443 = vmatprep.mubr.bf16.mxu0 %v1191
        %2444 = vmatmul.mubr.bf16.gmra.mrb[0].mxu0 %v1190
        %v2445 = vpop.f32.mrb[0].mxu0
        %v2446 = vadd.f32 %v2405, %v2445
        %v2447 = vpop.f32.mrb[0].mxu0
        %v2448 = vadd.f32 %v2407, %v2447
        %v2449 = vpop.f32.mrb[0].mxu0
        %v2450 = vpop.f32.mrb[0].mxu0
        %2451 = vdwg.mxu0
        %2452 = vmatprep.subr.bf16.mxu0 %v1455
        %2453 = vmatpush1.bf16.msra.mxu0 %v1454
        %2454 = vmatprep.subr.bf16.mxu0 %v1463
        %2455 = vmatpush1.bf16.msra.mxu0 %v1462
        %2456 = vmatprep.subr.bf16.mxu0 %v1471
        %2457 = vmatpush1.bf16.msra.mxu0 %v1470
        %2458 = vmatprep.subr.bf16.mxu0 %v1479
        %2459 = vmatpush1.bf16.msra.mxu0 %v1478
        %2460 = vmatprep.subr.bf16.mxu0 %v1487
        %2461 = vmatpush1.bf16.msra.mxu0 %v1486
        %2462 = vmatprep.subr.bf16.mxu0 %v1495
        %2463 = vmatpush1.bf16.msra.mxu0 %v1494
        %2464 = vmatprep.subr.bf16.mxu0 %v1503
        %2465 = vmatpush1.bf16.msra.mxu0 %v1502
        %2466 = vmatprep.subr.bf16.mxu0 %v1511
        %2467 = vmatpush1.bf16.msra.mxu0 %v1510
        %2468 = vmatprep.subr.bf16.mxu0 %v1519
        %2469 = vmatpush1.bf16.msra.mxu0 %v1518
        %2470 = vmatprep.subr.bf16.mxu0 %v1527
        %2471 = vmatpush1.bf16.msra.mxu0 %v1526
        %2472 = vmatprep.subr.bf16.mxu0 %v1535
        %2473 = vmatpush1.bf16.msra.mxu0 %v1534
        %2474 = vmatprep.subr.bf16.mxu0 %v1543
        %2475 = vmatpush1.bf16.msra.mxu0 %v1542
        %2476 = vmatprep.subr.bf16.mxu0 %v1551
        %2477 = vmatpush1.bf16.msra.mxu0 %v1550
        %2478 = vmatprep.subr.bf16.mxu0 %v1559
        %2479 = vmatpush1.bf16.msra.mxu0 %v1558
        %2480 = vmatprep.subr.bf16.mxu0 %v1567
        %2481 = vmatpush1.bf16.msra.mxu0 %v1566
        %2482 = vmatprep.subr.bf16.mxu0 %v1575
        %2483 = vmatpush1.bf16.msra.mxu0 %v1574
        %2484 = vmatprep.mubr.bf16.mxu0 %v1185
        %2485 = vmatmul.mubr.bf16.gmra.mrb[0].mxu0 %v1184
        %v2486 = vpop.f32.mrb[0].mxu0
        %v2487 = vadd.f32 0.0, %v2486
        %v2488 = vpop.f32.mrb[0].mxu0
        %v2489 = vadd.f32 0.0, %v2488
        %v2490 = vpop.f32.mrb[0].mxu0
        %v2491 = vpop.f32.mrb[0].mxu0
        %2492 = vdwg.mxu0
        %2493 = vmatprep.subr.bf16.mxu0 %v1583
        %2494 = vmatpush1.bf16.msra.mxu0 %v1582
        %2495 = vmatprep.subr.bf16.mxu0 %v1591
        %2496 = vmatpush1.bf16.msra.mxu0 %v1590
        %2497 = vmatprep.subr.bf16.mxu0 %v1599
        %2498 = vmatpush1.bf16.msra.mxu0 %v1598
        %2499 = vmatprep.subr.bf16.mxu0 %v1607
        %2500 = vmatpush1.bf16.msra.mxu0 %v1606
        %2501 = vmatprep.subr.bf16.mxu0 %v1615
        %2502 = vmatpush1.bf16.msra.mxu0 %v1614
        %2503 = vmatprep.subr.bf16.mxu0 %v1623
        %2504 = vmatpush1.bf16.msra.mxu0 %v1622
        %2505 = vmatprep.subr.bf16.mxu0 %v1631
        %2506 = vmatpush1.bf16.msra.mxu0 %v1630
        %2507 = vmatprep.subr.bf16.mxu0 %v1639
        %2508 = vmatpush1.bf16.msra.mxu0 %v1638
        %2509 = vmatprep.subr.bf16.mxu0 %v1647
        %2510 = vmatpush1.bf16.msra.mxu0 %v1646
        %2511 = vmatprep.subr.bf16.mxu0 %v1655
        %2512 = vmatpush1.bf16.msra.mxu0 %v1654
        %2513 = vmatprep.subr.bf16.mxu0 %v1663
        %2514 = vmatpush1.bf16.msra.mxu0 %v1662
        %2515 = vmatprep.subr.bf16.mxu0 %v1671
        %2516 = vmatpush1.bf16.msra.mxu0 %v1670
        %2517 = vmatprep.subr.bf16.mxu0 %v1679
        %2518 = vmatpush1.bf16.msra.mxu0 %v1678
        %2519 = vmatprep.subr.bf16.mxu0 %v1687
        %2520 = vmatpush1.bf16.msra.mxu0 %v1686
        %2521 = vmatprep.subr.bf16.mxu0 %v1695
        %2522 = vmatpush1.bf16.msra.mxu0 %v1694
        %2523 = vmatprep.subr.bf16.mxu0 %v1703
        %2524 = vmatpush1.bf16.msra.mxu0 %v1702
        %2525 = vmatprep.mubr.bf16.mxu0 %v1187
        %2526 = vmatmul.mubr.bf16.gmra.mrb[0].mxu0 %v1186
        %v2527 = vpop.f32.mrb[0].mxu0
        %v2528 = vadd.f32 %v2487, %v2527
        %v2529 = vpop.f32.mrb[0].mxu0
        %v2530 = vadd.f32 %v2489, %v2529
        %v2531 = vpop.f32.mrb[0].mxu0
        %v2532 = vpop.f32.mrb[0].mxu0
        %2533 = vdwg.mxu0
        %2534 = vmatprep.subr.bf16.mxu0 %v1711
        %2535 = vmatpush1.bf16.msra.mxu0 %v1710
        %2536 = vmatprep.subr.bf16.mxu0 %v1719
        %2537 = vmatpush1.bf16.msra.mxu0 %v1718
        %2538 = vmatprep.subr.bf16.mxu0 %v1727
        %2539 = vmatpush1.bf16.msra.mxu0 %v1726
        %2540 = vmatprep.subr.bf16.mxu0 %v1735
        %2541 = vmatpush1.bf16.msra.mxu0 %v1734
        %2542 = vmatprep.subr.bf16.mxu0 %v1743
        %2543 = vmatpush1.bf16.msra.mxu0 %v1742
        %2544 = vmatprep.subr.bf16.mxu0 %v1751
        %2545 = vmatpush1.bf16.msra.mxu0 %v1750
        %2546 = vmatprep.subr.bf16.mxu0 %v1759
        %2547 = vmatpush1.bf16.msra.mxu0 %v1758
        %2548 = vmatprep.subr.bf16.mxu0 %v1767
        %2549 = vmatpush1.bf16.msra.mxu0 %v1766
        %2550 = vmatprep.subr.bf16.mxu0 %v1775
        %2551 = vmatpush1.bf16.msra.mxu0 %v1774
        %2552 = vmatprep.subr.bf16.mxu0 %v1783
        %2553 = vmatpush1.bf16.msra.mxu0 %v1782
        %2554 = vmatprep.subr.bf16.mxu0 %v1791
        %2555 = vmatpush1.bf16.msra.mxu0 %v1790
        %2556 = vmatprep.subr.bf16.mxu0 %v1799
        %2557 = vmatpush1.bf16.msra.mxu0 %v1798
        %2558 = vmatprep.subr.bf16.mxu0 %v1807
        %2559 = vmatpush1.bf16.msra.mxu0 %v1806
        %2560 = vmatprep.subr.bf16.mxu0 %v1815
        %2561 = vmatpush1.bf16.msra.mxu0 %v1814
        %2562 = vmatprep.subr.bf16.mxu0 %v1823
        %2563 = vmatpush1.bf16.msra.mxu0 %v1822
        %2564 = vmatprep.subr.bf16.mxu0 %v1831
        %2565 = vmatpush1.bf16.msra.mxu0 %v1830
        %2566 = vmatprep.mubr.bf16.mxu0 %v1189
        %2567 = vmatmul.mubr.bf16.gmra.mrb[0].mxu0 %v1188
        %v2568 = vpop.f32.mrb[0].mxu0
        %v2569 = vadd.f32 %v2528, %v2568
        %v2570 = vpop.f32.mrb[0].mxu0
        %v2571 = vadd.f32 %v2530, %v2570
        %v2572 = vpop.f32.mrb[0].mxu0
        %v2573 = vpop.f32.mrb[0].mxu0
        %2574 = vdwg.mxu0
        %2575 = vmatprep.subr.bf16.mxu0 %v1839
        %2576 = vmatpush1.bf16.msra.mxu0 %v1838
        %2577 = vmatprep.subr.bf16.mxu0 %v1847
        %2578 = vmatpush1.bf16.msra.mxu0 %v1846
        %2579 = vmatprep.subr.bf16.mxu0 %v1855
        %2580 = vmatpush1.bf16.msra.mxu0 %v1854
        %2581 = vmatprep.subr.bf16.mxu0 %v1863
        %2582 = vmatpush1.bf16.msra.mxu0 %v1862
        %2583 = vmatprep.subr.bf16.mxu0 %v1871
        %2584 = vmatpush1.bf16.msra.mxu0 %v1870
        %2585 = vmatprep.subr.bf16.mxu0 %v1879
        %2586 = vmatpush1.bf16.msra.mxu0 %v1878
        %2587 = vmatprep.subr.bf16.mxu0 %v1887
        %2588 = vmatpush1.bf16.msra.mxu0 %v1886
        %2589 = vmatprep.subr.bf16.mxu0 %v1895
        %2590 = vmatpush1.bf16.msra.mxu0 %v1894
        %2591 = vmatprep.subr.bf16.mxu0 %v1903
        %2592 = vmatpush1.bf16.msra.mxu0 %v1902
        %2593 = vmatprep.subr.bf16.mxu0 %v1911
        %2594 = vmatpush1.bf16.msra.mxu0 %v1910
        %2595 = vmatprep.subr.bf16.mxu0 %v1919
        %2596 = vmatpush1.bf16.msra.mxu0 %v1918
        %2597 = vmatprep.subr.bf16.mxu0 %v1927
        %2598 = vmatpush1.bf16.msra.mxu0 %v1926
        %2599 = vmatprep.subr.bf16.mxu0 %v1935
        %2600 = vmatpush1.bf16.msra.mxu0 %v1934
        %2601 = vmatprep.subr.bf16.mxu0 %v1943
        %2602 = vmatpush1.bf16.msra.mxu0 %v1942
        %2603 = vmatprep.subr.bf16.mxu0 %v1951
        %2604 = vmatpush1.bf16.msra.mxu0 %v1950
        %2605 = vmatprep.subr.bf16.mxu0 %v1959
        %2606 = vmatpush1.bf16.msra.mxu0 %v1958
        %2607 = vmatprep.mubr.bf16.mxu0 %v1191
        %2608 = vmatmul.mubr.bf16.gmra.mrb[0].mxu0 %v1190
        %v2609 = vpop.f32.mrb[0].mxu0
        %v2610 = vadd.f32 %v2569, %v2609
        %v2611 = vpop.f32.mrb[0].mxu0
        %v2612 = vadd.f32 %v2571, %v2611
        %v2613 = vpop.f32.mrb[0].mxu0
        %v2614 = vpop.f32.mrb[0].mxu0
        %2615 = vdwg.mxu0
        %2616 = vmatprep.subr.bf16.mxu0 %v661
        %2617 = vmatpush1.bf16.msra.mxu0 %v660
        %2618 = vmatprep.subr.bf16.mxu0 %v669
        %2619 = vmatpush1.bf16.msra.mxu0 %v668
        %2620 = vmatprep.subr.bf16.mxu0 %v677
        %2621 = vmatpush1.bf16.msra.mxu0 %v676
        %2622 = vmatprep.subr.bf16.mxu0 %v685
        %2623 = vmatpush1.bf16.msra.mxu0 %v684
        %2624 = vmatprep.subr.bf16.mxu0 %v693
        %2625 = vmatpush1.bf16.msra.mxu0 %v692
        %2626 = vmatprep.subr.bf16.mxu0 %v701
        %2627 = vmatpush1.bf16.msra.mxu0 %v700
        %2628 = vmatprep.subr.bf16.mxu0 %v709
        %2629 = vmatpush1.bf16.msra.mxu0 %v708
        %2630 = vmatprep.subr.bf16.mxu0 %v717
        %2631 = vmatpush1.bf16.msra.mxu0 %v716
        %2632 = vmatprep.subr.bf16.mxu0 %v725
        %2633 = vmatpush1.bf16.msra.mxu0 %v724
        %2634 = vmatprep.subr.bf16.mxu0 %v733
        %2635 = vmatpush1.bf16.msra.mxu0 %v732
        %2636 = vmatprep.subr.bf16.mxu0 %v741
        %2637 = vmatpush1.bf16.msra.mxu0 %v740
        %2638 = vmatprep.subr.bf16.mxu0 %v749
        %2639 = vmatpush1.bf16.msra.mxu0 %v748
        %2640 = vmatprep.subr.bf16.mxu0 %v757
        %2641 = vmatpush1.bf16.msra.mxu0 %v756
        %2642 = vmatprep.subr.bf16.mxu0 %v765
        %2643 = vmatpush1.bf16.msra.mxu0 %v764
        %2644 = vmatprep.subr.bf16.mxu0 %v773
        %2645 = vmatpush1.bf16.msra.mxu0 %v772
        %2646 = vmatprep.subr.bf16.mxu0 %v781
        %2647 = vmatpush1.bf16.msra.mxu0 %v780
        %2648 = vmatprep.mubr.bf16.mxu0 %v397
        %2649 = vmatmul.mubr.bf16.gmra.mrb[0].mxu0 %v396
        %v2650 = vpop.f32.mrb[0].mxu0
        %v2651 = vadd.f32 %v2118, %v2650
        %v2652 = vpop.f32.mrb[0].mxu0
        %v2653 = vadd.f32 %v2120, %v2652
        %v2654 = vpop.f32.mrb[0].mxu0
        %v2655 = vpop.f32.mrb[0].mxu0
        %2656 = vdwg.mxu0
        %2657 = vmatprep.subr.bf16.mxu0 %v789
        %2658 = vmatpush1.bf16.msra.mxu0 %v788
        %2659 = vmatprep.subr.bf16.mxu0 %v797
        %2660 = vmatpush1.bf16.msra.mxu0 %v796
        %2661 = vmatprep.subr.bf16.mxu0 %v805
        %2662 = vmatpush1.bf16.msra.mxu0 %v804
        %2663 = vmatprep.subr.bf16.mxu0 %v813
        %2664 = vmatpush1.bf16.msra.mxu0 %v812
        %2665 = vmatprep.subr.bf16.mxu0 %v821
        %2666 = vmatpush1.bf16.msra.mxu0 %v820
        %2667 = vmatprep.subr.bf16.mxu0 %v829
        %2668 = vmatpush1.bf16.msra.mxu0 %v828
        %2669 = vmatprep.subr.bf16.mxu0 %v837
        %2670 = vmatpush1.bf16.msra.mxu0 %v836
        %2671 = vmatprep.subr.bf16.mxu0 %v845
        %2672 = vmatpush1.bf16.msra.mxu0 %v844
        %2673 = vmatprep.subr.bf16.mxu0 %v853
        %2674 = vmatpush1.bf16.msra.mxu0 %v852
        %2675 = vmatprep.subr.bf16.mxu0 %v861
        %2676 = vmatpush1.bf16.msra.mxu0 %v860
        %2677 = vmatprep.subr.bf16.mxu0 %v869
        %2678 = vmatpush1.bf16.msra.mxu0 %v868
        %2679 = vmatprep.subr.bf16.mxu0 %v877
        %2680 = vmatpush1.bf16.msra.mxu0 %v876
        %2681 = vmatprep.subr.bf16.mxu0 %v885
        %2682 = vmatpush1.bf16.msra.mxu0 %v884
        %2683 = vmatprep.subr.bf16.mxu0 %v893
        %2684 = vmatpush1.bf16.msra.mxu0 %v892
        %2685 = vmatprep.subr.bf16.mxu0 %v901
        %2686 = vmatpush1.bf16.msra.mxu0 %v900
        %2687 = vmatprep.subr.bf16.mxu0 %v909
        %2688 = vmatpush1.bf16.msra.mxu0 %v908
        %2689 = vmatprep.mubr.bf16.mxu0 %v399
        %2690 = vmatmul.mubr.bf16.gmra.mrb[0].mxu0 %v398
        %v2691 = vpop.f32.mrb[0].mxu0
        %v2692 = vadd.f32 %v2651, %v2691
        %v2693 = vpop.f32.mrb[0].mxu0
        %v2694 = vadd.f32 %v2653, %v2693
        %v2695 = vpop.f32.mrb[0].mxu0
        %v2696 = vpop.f32.mrb[0].mxu0
        %2697 = vdwg.mxu0
        %2698 = vmatprep.subr.bf16.mxu0 %v917
        %2699 = vmatpush1.bf16.msra.mxu0 %v916
        %2700 = vmatprep.subr.bf16.mxu0 %v925
        %2701 = vmatpush1.bf16.msra.mxu0 %v924
        %2702 = vmatprep.subr.bf16.mxu0 %v933
        %2703 = vmatpush1.bf16.msra.mxu0 %v932
        %2704 = vmatprep.subr.bf16.mxu0 %v941
        %2705 = vmatpush1.bf16.msra.mxu0 %v940
        %2706 = vmatprep.subr.bf16.mxu0 %v949
        %2707 = vmatpush1.bf16.msra.mxu0 %v948
        %2708 = vmatprep.subr.bf16.mxu0 %v957
        %2709 = vmatpush1.bf16.msra.mxu0 %v956
        %2710 = vmatprep.subr.bf16.mxu0 %v965
        %2711 = vmatpush1.bf16.msra.mxu0 %v964
        %2712 = vmatprep.subr.bf16.mxu0 %v973
        %2713 = vmatpush1.bf16.msra.mxu0 %v972
        %2714 = vmatprep.subr.bf16.mxu0 %v981
        %2715 = vmatpush1.bf16.msra.mxu0 %v980
        %2716 = vmatprep.subr.bf16.mxu0 %v989
        %2717 = vmatpush1.bf16.msra.mxu0 %v988
        %2718 = vmatprep.subr.bf16.mxu0 %v997
        %2719 = vmatpush1.bf16.msra.mxu0 %v996
        %2720 = vmatprep.subr.bf16.mxu0 %v1005
        %2721 = vmatpush1.bf16.msra.mxu0 %v1004
        %2722 = vmatprep.subr.bf16.mxu0 %v1013
        %2723 = vmatpush1.bf16.msra.mxu0 %v1012
        %2724 = vmatprep.subr.bf16.mxu0 %v1021
        %2725 = vmatpush1.bf16.msra.mxu0 %v1020
        %2726 = vmatprep.subr.bf16.mxu0 %v1029
        %2727 = vmatpush1.bf16.msra.mxu0 %v1028
        %2728 = vmatprep.subr.bf16.mxu0 %v1037
        %2729 = vmatpush1.bf16.msra.mxu0 %v1036
        %2730 = vmatprep.mubr.bf16.mxu0 %v401
        %2731 = vmatmul.mubr.bf16.gmra.mrb[0].mxu0 %v400
        %v2732 = vpop.f32.mrb[0].mxu0
        %v2733 = vadd.f32 %v2692, %v2732
        %v2734 = vpop.f32.mrb[0].mxu0
        %v2735 = vadd.f32 %v2694, %v2734
        %v2736 = vpop.f32.mrb[0].mxu0
        %v2737 = vpop.f32.mrb[0].mxu0
        %2738 = vdwg.mxu0
        %2739 = vmatprep.subr.bf16.mxu0 %v1045
        %2740 = vmatpush1.bf16.msra.mxu0 %v1044
        %2741 = vmatprep.subr.bf16.mxu0 %v1053
        %2742 = vmatpush1.bf16.msra.mxu0 %v1052
        %2743 = vmatprep.subr.bf16.mxu0 %v1061
        %2744 = vmatpush1.bf16.msra.mxu0 %v1060
        %2745 = vmatprep.subr.bf16.mxu0 %v1069
        %2746 = vmatpush1.bf16.msra.mxu0 %v1068
        %2747 = vmatprep.subr.bf16.mxu0 %v1077
        %2748 = vmatpush1.bf16.msra.mxu0 %v1076
        %2749 = vmatprep.subr.bf16.mxu0 %v1085
        %2750 = vmatpush1.bf16.msra.mxu0 %v1084
        %2751 = vmatprep.subr.bf16.mxu0 %v1093
        %2752 = vmatpush1.bf16.msra.mxu0 %v1092
        %2753 = vmatprep.subr.bf16.mxu0 %v1101
        %2754 = vmatpush1.bf16.msra.mxu0 %v1100
        %2755 = vmatprep.subr.bf16.mxu0 %v1109
        %2756 = vmatpush1.bf16.msra.mxu0 %v1108
        %2757 = vmatprep.subr.bf16.mxu0 %v1117
        %2758 = vmatpush1.bf16.msra.mxu0 %v1116
        %2759 = vmatprep.subr.bf16.mxu0 %v1125
        %2760 = vmatpush1.bf16.msra.mxu0 %v1124
        %2761 = vmatprep.subr.bf16.mxu0 %v1133
        %2762 = vmatpush1.bf16.msra.mxu0 %v1132
        %2763 = vmatprep.subr.bf16.mxu0 %v1141
        %2764 = vmatpush1.bf16.msra.mxu0 %v1140
        %2765 = vmatprep.subr.bf16.mxu0 %v1149
        %2766 = vmatpush1.bf16.msra.mxu0 %v1148
        %2767 = vmatprep.subr.bf16.mxu0 %v1157
        %2768 = vmatpush1.bf16.msra.mxu0 %v1156
        %2769 = vmatprep.subr.bf16.mxu0 %v1165
        %2770 = vmatpush1.bf16.msra.mxu0 %v1164
        %2771 = vmatprep.mubr.bf16.mxu0 %v403
        %2772 = vmatmul.mubr.bf16.gmra.mrb[0].mxu0 %v402
        %v2773 = vpop.f32.mrb[0].mxu0
        %v2774 = vadd.f32 %v2733, %v2773
        %v2775 = vpop.f32.mrb[0].mxu0
        %v2776 = vadd.f32 %v2735, %v2775
        %v2777 = vpop.f32.mrb[0].mxu0
        %v2778 = vpop.f32.mrb[0].mxu0
        %2779 = vdwg.mxu0
        %2780 = vmatprep.subr.bf16.mxu0 %v663
        %2781 = vmatpush1.bf16.msra.mxu0 %v662
        %2782 = vmatprep.subr.bf16.mxu0 %v671
        %2783 = vmatpush1.bf16.msra.mxu0 %v670
        %2784 = vmatprep.subr.bf16.mxu0 %v679
        %2785 = vmatpush1.bf16.msra.mxu0 %v678
        %2786 = vmatprep.subr.bf16.mxu0 %v687
        %2787 = vmatpush1.bf16.msra.mxu0 %v686
        %2788 = vmatprep.subr.bf16.mxu0 %v695
        %2789 = vmatpush1.bf16.msra.mxu0 %v694
        %2790 = vmatprep.subr.bf16.mxu0 %v703
        %2791 = vmatpush1.bf16.msra.mxu0 %v702
        %2792 = vmatprep.subr.bf16.mxu0 %v711
        %2793 = vmatpush1.bf16.msra.mxu0 %v710
        %2794 = vmatprep.subr.bf16.mxu0 %v719
        %2795 = vmatpush1.bf16.msra.mxu0 %v718
        %2796 = vmatprep.subr.bf16.mxu0 %v727
        %2797 = vmatpush1.bf16.msra.mxu0 %v726
        %2798 = vmatprep.subr.bf16.mxu0 %v735
        %2799 = vmatpush1.bf16.msra.mxu0 %v734
        %2800 = vmatprep.subr.bf16.mxu0 %v743
        %2801 = vmatpush1.bf16.msra.mxu0 %v742
        %2802 = vmatprep.subr.bf16.mxu0 %v751
        %2803 = vmatpush1.bf16.msra.mxu0 %v750
        %2804 = vmatprep.subr.bf16.mxu0 %v759
        %2805 = vmatpush1.bf16.msra.mxu0 %v758
        %2806 = vmatprep.subr.bf16.mxu0 %v767
        %2807 = vmatpush1.bf16.msra.mxu0 %v766
        %2808 = vmatprep.subr.bf16.mxu0 %v775
        %2809 = vmatpush1.bf16.msra.mxu0 %v774
        %2810 = vmatprep.subr.bf16.mxu0 %v783
        %2811 = vmatpush1.bf16.msra.mxu0 %v782
        %2812 = vmatprep.mubr.bf16.mxu0 %v397
        %2813 = vmatmul.mubr.bf16.gmra.mrb[0].mxu0 %v396
        %v2814 = vpop.f32.mrb[0].mxu0
        %v2815 = vadd.f32 %v2282, %v2814
        %v2816 = vpop.f32.mrb[0].mxu0
        %v2817 = vadd.f32 %v2284, %v2816
        %v2818 = vpop.f32.mrb[0].mxu0
        %v2819 = vpop.f32.mrb[0].mxu0
        %2820 = vdwg.mxu0
        %2821 = vmatprep.subr.bf16.mxu0 %v791
        %2822 = vmatpush1.bf16.msra.mxu0 %v790
        %2823 = vmatprep.subr.bf16.mxu0 %v799
        %2824 = vmatpush1.bf16.msra.mxu0 %v798
        %2825 = vmatprep.subr.bf16.mxu0 %v807
        %2826 = vmatpush1.bf16.msra.mxu0 %v806
        %2827 = vmatprep.subr.bf16.mxu0 %v815
        %2828 = vmatpush1.bf16.msra.mxu0 %v814
        %2829 = vmatprep.subr.bf16.mxu0 %v823
        %2830 = vmatpush1.bf16.msra.mxu0 %v822
        %2831 = vmatprep.subr.bf16.mxu0 %v831
        %2832 = vmatpush1.bf16.msra.mxu0 %v830
        %2833 = vmatprep.subr.bf16.mxu0 %v839
        %2834 = vmatpush1.bf16.msra.mxu0 %v838
        %2835 = vmatprep.subr.bf16.mxu0 %v847
        %2836 = vmatpush1.bf16.msra.mxu0 %v846
        %2837 = vmatprep.subr.bf16.mxu0 %v855
        %2838 = vmatpush1.bf16.msra.mxu0 %v854
        %2839 = vmatprep.subr.bf16.mxu0 %v863
        %2840 = vmatpush1.bf16.msra.mxu0 %v862
        %2841 = vmatprep.subr.bf16.mxu0 %v871
        %2842 = vmatpush1.bf16.msra.mxu0 %v870
        %2843 = vmatprep.subr.bf16.mxu0 %v879
        %2844 = vmatpush1.bf16.msra.mxu0 %v878
        %2845 = vmatprep.subr.bf16.mxu0 %v887
        %2846 = vmatpush1.bf16.msra.mxu0 %v886
        %2847 = vmatprep.subr.bf16.mxu0 %v895
        %2848 = vmatpush1.bf16.msra.mxu0 %v894
        %2849 = vmatprep.subr.bf16.mxu0 %v903
        %2850 = vmatpush1.bf16.msra.mxu0 %v902
        %2851 = vmatprep.subr.bf16.mxu0 %v911
        %2852 = vmatpush1.bf16.msra.mxu0 %v910
        %2853 = vmatprep.mubr.bf16.mxu0 %v399
        %2854 = vmatmul.mubr.bf16.gmra.mrb[0].mxu0 %v398
        %v2855 = vpop.f32.mrb[0].mxu0
        %v2856 = vadd.f32 %v2815, %v2855
        %v2857 = vpop.f32.mrb[0].mxu0
        %v2858 = vadd.f32 %v2817, %v2857
        %v2859 = vpop.f32.mrb[0].mxu0
        %v2860 = vpop.f32.mrb[0].mxu0
        %2861 = vdwg.mxu0
        %2862 = vmatprep.subr.bf16.mxu0 %v919
        %2863 = vmatpush1.bf16.msra.mxu0 %v918
        %2864 = vmatprep.subr.bf16.mxu0 %v927
        %2865 = vmatpush1.bf16.msra.mxu0 %v926
        %2866 = vmatprep.subr.bf16.mxu0 %v935
        %2867 = vmatpush1.bf16.msra.mxu0 %v934
        %2868 = vmatprep.subr.bf16.mxu0 %v943
        %2869 = vmatpush1.bf16.msra.mxu0 %v942
        %2870 = vmatprep.subr.bf16.mxu0 %v951
        %2871 = vmatpush1.bf16.msra.mxu0 %v950
        %2872 = vmatprep.subr.bf16.mxu0 %v959
        %2873 = vmatpush1.bf16.msra.mxu0 %v958
        %2874 = vmatprep.subr.bf16.mxu0 %v967
        %2875 = vmatpush1.bf16.msra.mxu0 %v966
        %2876 = vmatprep.subr.bf16.mxu0 %v975
        %2877 = vmatpush1.bf16.msra.mxu0 %v974
        %2878 = vmatprep.subr.bf16.mxu0 %v983
        %2879 = vmatpush1.bf16.msra.mxu0 %v982
        %2880 = vmatprep.subr.bf16.mxu0 %v991
        %2881 = vmatpush1.bf16.msra.mxu0 %v990
        %2882 = vmatprep.subr.bf16.mxu0 %v999
        %2883 = vmatpush1.bf16.msra.mxu0 %v998
        %2884 = vmatprep.subr.bf16.mxu0 %v1007
        %2885 = vmatpush1.bf16.msra.mxu0 %v1006
        %2886 = vmatprep.subr.bf16.mxu0 %v1015
        %2887 = vmatpush1.bf16.msra.mxu0 %v1014
        %2888 = vmatprep.subr.bf16.mxu0 %v1023
        %2889 = vmatpush1.bf16.msra.mxu0 %v1022
        %2890 = vmatprep.subr.bf16.mxu0 %v1031
        %2891 = vmatpush1.bf16.msra.mxu0 %v1030
        %2892 = vmatprep.subr.bf16.mxu0 %v1039
        %2893 = vmatpush1.bf16.msra.mxu0 %v1038
        %2894 = vmatprep.mubr.bf16.mxu0 %v401
        %2895 = vmatmul.mubr.bf16.gmra.mrb[0].mxu0 %v400
        %v2896 = vpop.f32.mrb[0].mxu0
        %v2897 = vadd.f32 %v2856, %v2896
        %v2898 = vpop.f32.mrb[0].mxu0
        %v2899 = vadd.f32 %v2858, %v2898
        %v2900 = vpop.f32.mrb[0].mxu0
        %v2901 = vpop.f32.mrb[0].mxu0
        %2902 = vdwg.mxu0
        %2903 = vmatprep.subr.bf16.mxu0 %v1047
        %2904 = vmatpush1.bf16.msra.mxu0 %v1046
        %2905 = vmatprep.subr.bf16.mxu0 %v1055
        %2906 = vmatpush1.bf16.msra.mxu0 %v1054
        %2907 = vmatprep.subr.bf16.mxu0 %v1063
        %2908 = vmatpush1.bf16.msra.mxu0 %v1062
        %2909 = vmatprep.subr.bf16.mxu0 %v1071
        %2910 = vmatpush1.bf16.msra.mxu0 %v1070
        %2911 = vmatprep.subr.bf16.mxu0 %v1079
        %2912 = vmatpush1.bf16.msra.mxu0 %v1078
        %2913 = vmatprep.subr.bf16.mxu0 %v1087
        %2914 = vmatpush1.bf16.msra.mxu0 %v1086
        %2915 = vmatprep.subr.bf16.mxu0 %v1095
        %2916 = vmatpush1.bf16.msra.mxu0 %v1094
        %2917 = vmatprep.subr.bf16.mxu0 %v1103
        %2918 = vmatpush1.bf16.msra.mxu0 %v1102
        %2919 = vmatprep.subr.bf16.mxu0 %v1111
        %2920 = vmatpush1.bf16.msra.mxu0 %v1110
        %2921 = vmatprep.subr.bf16.mxu0 %v1119
        %2922 = vmatpush1.bf16.msra.mxu0 %v1118
        %2923 = vmatprep.subr.bf16.mxu0 %v1127
        %2924 = vmatpush1.bf16.msra.mxu0 %v1126
        %2925 = vmatprep.subr.bf16.mxu0 %v1135
        %2926 = vmatpush1.bf16.msra.mxu0 %v1134
        %2927 = vmatprep.subr.bf16.mxu0 %v1143
        %2928 = vmatpush1.bf16.msra.mxu0 %v1142
        %2929 = vmatprep.subr.bf16.mxu0 %v1151
        %2930 = vmatpush1.bf16.msra.mxu0 %v1150
        %2931 = vmatprep.subr.bf16.mxu0 %v1159
        %2932 = vmatpush1.bf16.msra.mxu0 %v1158
        %2933 = vmatprep.subr.bf16.mxu0 %v1167
        %2934 = vmatpush1.bf16.msra.mxu0 %v1166
        %2935 = vmatprep.mubr.bf16.mxu0 %v403
        %2936 = vmatmul.mubr.bf16.gmra.mrb[0].mxu0 %v402
        %v2937 = vpop.f32.mrb[0].mxu0
        %v2938 = vadd.f32 %v2897, %v2937
        %v2939 = vpop.f32.mrb[0].mxu0
        %v2940 = vadd.f32 %v2899, %v2939
        %v2941 = vpop.f32.mrb[0].mxu0
        %v2942 = vpop.f32.mrb[0].mxu0
        %2943 = vdwg.mxu0
        %2944 = vmatprep.subr.bf16.mxu0 %v665
        %2945 = vmatpush1.bf16.msra.mxu0 %v664
        %2946 = vmatprep.subr.bf16.mxu0 %v673
        %2947 = vmatpush1.bf16.msra.mxu0 %v672
        %2948 = vmatprep.subr.bf16.mxu0 %v681
        %2949 = vmatpush1.bf16.msra.mxu0 %v680
        %2950 = vmatprep.subr.bf16.mxu0 %v689
        %2951 = vmatpush1.bf16.msra.mxu0 %v688
        %2952 = vmatprep.subr.bf16.mxu0 %v697
        %2953 = vmatpush1.bf16.msra.mxu0 %v696
        %2954 = vmatprep.subr.bf16.mxu0 %v705
        %2955 = vmatpush1.bf16.msra.mxu0 %v704
        %2956 = vmatprep.subr.bf16.mxu0 %v713
        %2957 = vmatpush1.bf16.msra.mxu0 %v712
        %2958 = vmatprep.subr.bf16.mxu0 %v721
        %2959 = vmatpush1.bf16.msra.mxu0 %v720
        %2960 = vmatprep.subr.bf16.mxu0 %v729
        %2961 = vmatpush1.bf16.msra.mxu0 %v728
        %2962 = vmatprep.subr.bf16.mxu0 %v737
        %2963 = vmatpush1.bf16.msra.mxu0 %v736
        %2964 = vmatprep.subr.bf16.mxu0 %v745
        %2965 = vmatpush1.bf16.msra.mxu0 %v744
        %2966 = vmatprep.subr.bf16.mxu0 %v753
        %2967 = vmatpush1.bf16.msra.mxu0 %v752
        %2968 = vmatprep.subr.bf16.mxu0 %v761
        %2969 = vmatpush1.bf16.msra.mxu0 %v760
        %2970 = vmatprep.subr.bf16.mxu0 %v769
        %2971 = vmatpush1.bf16.msra.mxu0 %v768
        %2972 = vmatprep.subr.bf16.mxu0 %v777
        %2973 = vmatpush1.bf16.msra.mxu0 %v776
        %2974 = vmatprep.subr.bf16.mxu0 %v785
        %2975 = vmatpush1.bf16.msra.mxu0 %v784
        %2976 = vmatprep.mubr.bf16.mxu0 %v397
        %2977 = vmatmul.mubr.bf16.gmra.mrb[0].mxu0 %v396
        %v2978 = vpop.f32.mrb[0].mxu0
        %v2979 = vadd.f32 %v2446, %v2978
        %v2980 = vpop.f32.mrb[0].mxu0
        %v2981 = vadd.f32 %v2448, %v2980
        %v2982 = vpop.f32.mrb[0].mxu0
        %v2983 = vpop.f32.mrb[0].mxu0
        %2984 = vdwg.mxu0
        %2985 = vmatprep.subr.bf16.mxu0 %v793
        %2986 = vmatpush1.bf16.msra.mxu0 %v792
        %2987 = vmatprep.subr.bf16.mxu0 %v801
        %2988 = vmatpush1.bf16.msra.mxu0 %v800
        %2989 = vmatprep.subr.bf16.mxu0 %v809
        %2990 = vmatpush1.bf16.msra.mxu0 %v808
        %2991 = vmatprep.subr.bf16.mxu0 %v817
        %2992 = vmatpush1.bf16.msra.mxu0 %v816
        %2993 = vmatprep.subr.bf16.mxu0 %v825
        %2994 = vmatpush1.bf16.msra.mxu0 %v824
        %2995 = vmatprep.subr.bf16.mxu0 %v833
        %2996 = vmatpush1.bf16.msra.mxu0 %v832
        %2997 = vmatprep.subr.bf16.mxu0 %v841
        %2998 = vmatpush1.bf16.msra.mxu0 %v840
        %2999 = vmatprep.subr.bf16.mxu0 %v849
        %3000 = vmatpush1.bf16.msra.mxu0 %v848
        %3001 = vmatprep.subr.bf16.mxu0 %v857
        %3002 = vmatpush1.bf16.msra.mxu0 %v856
        %3003 = vmatprep.subr.bf16.mxu0 %v865
        %3004 = vmatpush1.bf16.msra.mxu0 %v864
        %3005 = vmatprep.subr.bf16.mxu0 %v873
        %3006 = vmatpush1.bf16.msra.mxu0 %v872
        %3007 = vmatprep.subr.bf16.mxu0 %v881
        %3008 = vmatpush1.bf16.msra.mxu0 %v880
        %3009 = vmatprep.subr.bf16.mxu0 %v889
        %3010 = vmatpush1.bf16.msra.mxu0 %v888
        %3011 = vmatprep.subr.bf16.mxu0 %v897
        %3012 = vmatpush1.bf16.msra.mxu0 %v896
        %3013 = vmatprep.subr.bf16.mxu0 %v905
        %3014 = vmatpush1.bf16.msra.mxu0 %v904
        %3015 = vmatprep.subr.bf16.mxu0 %v913
        %3016 = vmatpush1.bf16.msra.mxu0 %v912
        %3017 = vmatprep.mubr.bf16.mxu0 %v399
        %3018 = vmatmul.mubr.bf16.gmra.mrb[0].mxu0 %v398
        %v3019 = vpop.f32.mrb[0].mxu0
        %v3020 = vadd.f32 %v2979, %v3019
        %v3021 = vpop.f32.mrb[0].mxu0
        %v3022 = vadd.f32 %v2981, %v3021
        %v3023 = vpop.f32.mrb[0].mxu0
        %v3024 = vpop.f32.mrb[0].mxu0
        %3025 = vdwg.mxu0
        %3026 = vmatprep.subr.bf16.mxu0 %v921
        %3027 = vmatpush1.bf16.msra.mxu0 %v920
        %3028 = vmatprep.subr.bf16.mxu0 %v929
        %3029 = vmatpush1.bf16.msra.mxu0 %v928
        %3030 = vmatprep.subr.bf16.mxu0 %v937
        %3031 = vmatpush1.bf16.msra.mxu0 %v936
        %3032 = vmatprep.subr.bf16.mxu0 %v945
        %3033 = vmatpush1.bf16.msra.mxu0 %v944
        %3034 = vmatprep.subr.bf16.mxu0 %v953
        %3035 = vmatpush1.bf16.msra.mxu0 %v952
        %3036 = vmatprep.subr.bf16.mxu0 %v961
        %3037 = vmatpush1.bf16.msra.mxu0 %v960
        %3038 = vmatprep.subr.bf16.mxu0 %v969
        %3039 = vmatpush1.bf16.msra.mxu0 %v968
        %3040 = vmatprep.subr.bf16.mxu0 %v977
        %3041 = vmatpush1.bf16.msra.mxu0 %v976
        %3042 = vmatprep.subr.bf16.mxu0 %v985
        %3043 = vmatpush1.bf16.msra.mxu0 %v984
        %3044 = vmatprep.subr.bf16.mxu0 %v993
        %3045 = vmatpush1.bf16.msra.mxu0 %v992
        %3046 = vmatprep.subr.bf16.mxu0 %v1001
        %3047 = vmatpush1.bf16.msra.mxu0 %v1000
        %3048 = vmatprep.subr.bf16.mxu0 %v1009
        %3049 = vmatpush1.bf16.msra.mxu0 %v1008
        %3050 = vmatprep.subr.bf16.mxu0 %v1017
        %3051 = vmatpush1.bf16.msra.mxu0 %v1016
        %3052 = vmatprep.subr.bf16.mxu0 %v1025
        %3053 = vmatpush1.bf16.msra.mxu0 %v1024
        %3054 = vmatprep.subr.bf16.mxu0 %v1033
        %3055 = vmatpush1.bf16.msra.mxu0 %v1032
        %3056 = vmatprep.subr.bf16.mxu0 %v1041
        %3057 = vmatpush1.bf16.msra.mxu0 %v1040
        %3058 = vmatprep.mubr.bf16.mxu0 %v401
        %3059 = vmatmul.mubr.bf16.gmra.mrb[0].mxu0 %v400
        %v3060 = vpop.f32.mrb[0].mxu0
        %v3061 = vadd.f32 %v3020, %v3060
        %v3062 = vpop.f32.mrb[0].mxu0
        %v3063 = vadd.f32 %v3022, %v3062
        %v3064 = vpop.f32.mrb[0].mxu0
        %v3065 = vpop.f32.mrb[0].mxu0
        %3066 = vdwg.mxu0
        %3067 = vmatprep.subr.bf16.mxu0 %v1049
        %3068 = vmatpush1.bf16.msra.mxu0 %v1048
        %3069 = vmatprep.subr.bf16.mxu0 %v1057
        %3070 = vmatpush1.bf16.msra.mxu0 %v1056
        %3071 = vmatprep.subr.bf16.mxu0 %v1065
        %3072 = vmatpush1.bf16.msra.mxu0 %v1064
        %3073 = vmatprep.subr.bf16.mxu0 %v1073
        %3074 = vmatpush1.bf16.msra.mxu0 %v1072
        %3075 = vmatprep.subr.bf16.mxu0 %v1081
        %3076 = vmatpush1.bf16.msra.mxu0 %v1080
        %3077 = vmatprep.subr.bf16.mxu0 %v1089
        %3078 = vmatpush1.bf16.msra.mxu0 %v1088
        %3079 = vmatprep.subr.bf16.mxu0 %v1097
        %3080 = vmatpush1.bf16.msra.mxu0 %v1096
        %3081 = vmatprep.subr.bf16.mxu0 %v1105
        %3082 = vmatpush1.bf16.msra.mxu0 %v1104
        %3083 = vmatprep.subr.bf16.mxu0 %v1113
        %3084 = vmatpush1.bf16.msra.mxu0 %v1112
        %3085 = vmatprep.subr.bf16.mxu0 %v1121
        %3086 = vmatpush1.bf16.msra.mxu0 %v1120
        %3087 = vmatprep.subr.bf16.mxu0 %v1129
        %3088 = vmatpush1.bf16.msra.mxu0 %v1128
        %3089 = vmatprep.subr.bf16.mxu0 %v1137
        %3090 = vmatpush1.bf16.msra.mxu0 %v1136
        %3091 = vmatprep.subr.bf16.mxu0 %v1145
        %3092 = vmatpush1.bf16.msra.mxu0 %v1144
        %3093 = vmatprep.subr.bf16.mxu0 %v1153
        %3094 = vmatpush1.bf16.msra.mxu0 %v1152
        %3095 = vmatprep.subr.bf16.mxu0 %v1161
        %3096 = vmatpush1.bf16.msra.mxu0 %v1160
        %3097 = vmatprep.subr.bf16.mxu0 %v1169
        %3098 = vmatpush1.bf16.msra.mxu0 %v1168
        %3099 = vmatprep.mubr.bf16.mxu0 %v403
        %3100 = vmatmul.mubr.bf16.gmra.mrb[0].mxu0 %v402
        %v3101 = vpop.f32.mrb[0].mxu0
        %v3102 = vadd.f32 %v3061, %v3101
        %v3103 = vpop.f32.mrb[0].mxu0
        %v3104 = vadd.f32 %v3063, %v3103
        %v3105 = vpop.f32.mrb[0].mxu0
        %v3106 = vpop.f32.mrb[0].mxu0
        %3107 = vdwg.mxu0
        %3108 = vmatprep.subr.bf16.mxu0 %v667
        %3109 = vmatpush1.bf16.msra.mxu0 %v666
        %3110 = vmatprep.subr.bf16.mxu0 %v675
        %3111 = vmatpush1.bf16.msra.mxu0 %v674
        %3112 = vmatprep.subr.bf16.mxu0 %v683
        %3113 = vmatpush1.bf16.msra.mxu0 %v682
        %3114 = vmatprep.subr.bf16.mxu0 %v691
        %3115 = vmatpush1.bf16.msra.mxu0 %v690
        %3116 = vmatprep.subr.bf16.mxu0 %v699
        %3117 = vmatpush1.bf16.msra.mxu0 %v698
        %3118 = vmatprep.subr.bf16.mxu0 %v707
        %3119 = vmatpush1.bf16.msra.mxu0 %v706
        %3120 = vmatprep.subr.bf16.mxu0 %v715
        %3121 = vmatpush1.bf16.msra.mxu0 %v714
        %3122 = vmatprep.subr.bf16.mxu0 %v723
        %3123 = vmatpush1.bf16.msra.mxu0 %v722
        %3124 = vmatprep.subr.bf16.mxu0 %v731
        %3125 = vmatpush1.bf16.msra.mxu0 %v730
        %3126 = vmatprep.subr.bf16.mxu0 %v739
        %3127 = vmatpush1.bf16.msra.mxu0 %v738
        %3128 = vmatprep.subr.bf16.mxu0 %v747
        %3129 = vmatpush1.bf16.msra.mxu0 %v746
        %3130 = vmatprep.subr.bf16.mxu0 %v755
        %3131 = vmatpush1.bf16.msra.mxu0 %v754
        %3132 = vmatprep.subr.bf16.mxu0 %v763
        %3133 = vmatpush1.bf16.msra.mxu0 %v762
        %3134 = vmatprep.subr.bf16.mxu0 %v771
        %3135 = vmatpush1.bf16.msra.mxu0 %v770
        %3136 = vmatprep.subr.bf16.mxu0 %v779
        %3137 = vmatpush1.bf16.msra.mxu0 %v778
        %3138 = vmatprep.subr.bf16.mxu0 %v787
        %3139 = vmatpush1.bf16.msra.mxu0 %v786
        %3140 = vmatprep.mubr.bf16.mxu0 %v397
        %3141 = vmatmul.mubr.bf16.gmra.mrb[0].mxu0 %v396
        %v3142 = vpop.f32.mrb[0].mxu0
        %v3143 = vadd.f32 %v2610, %v3142
        %v3144 = vpop.f32.mrb[0].mxu0
        %v3145 = vadd.f32 %v2612, %v3144
        %v3146 = vpop.f32.mrb[0].mxu0
        %v3147 = vpop.f32.mrb[0].mxu0
        %3148 = vdwg.mxu0
        %3149 = vmatprep.subr.bf16.mxu0 %v795
        %3150 = vmatpush1.bf16.msra.mxu0 %v794
        %3151 = vmatprep.subr.bf16.mxu0 %v803
        %3152 = vmatpush1.bf16.msra.mxu0 %v802
        %3153 = vmatprep.subr.bf16.mxu0 %v811
        %3154 = vmatpush1.bf16.msra.mxu0 %v810
        %3155 = vmatprep.subr.bf16.mxu0 %v819
        %3156 = vmatpush1.bf16.msra.mxu0 %v818
        %3157 = vmatprep.subr.bf16.mxu0 %v827
        %3158 = vmatpush1.bf16.msra.mxu0 %v826
        %3159 = vmatprep.subr.bf16.mxu0 %v835
        %3160 = vmatpush1.bf16.msra.mxu0 %v834
        %3161 = vmatprep.subr.bf16.mxu0 %v843
        %3162 = vmatpush1.bf16.msra.mxu0 %v842
        %3163 = vmatprep.subr.bf16.mxu0 %v851
        %3164 = vmatpush1.bf16.msra.mxu0 %v850
        %3165 = vmatprep.subr.bf16.mxu0 %v859
        %3166 = vmatpush1.bf16.msra.mxu0 %v858
        %3167 = vmatprep.subr.bf16.mxu0 %v867
        %3168 = vmatpush1.bf16.msra.mxu0 %v866
        %3169 = vmatprep.subr.bf16.mxu0 %v875
        %3170 = vmatpush1.bf16.msra.mxu0 %v874
        %3171 = vmatprep.subr.bf16.mxu0 %v883
        %3172 = vmatpush1.bf16.msra.mxu0 %v882
        %3173 = vmatprep.subr.bf16.mxu0 %v891
        %3174 = vmatpush1.bf16.msra.mxu0 %v890
        %3175 = vmatprep.subr.bf16.mxu0 %v899
        %3176 = vmatpush1.bf16.msra.mxu0 %v898
        %3177 = vmatprep.subr.bf16.mxu0 %v907
        %3178 = vmatpush1.bf16.msra.mxu0 %v906
        %3179 = vmatprep.subr.bf16.mxu0 %v915
        %3180 = vmatpush1.bf16.msra.mxu0 %v914
        %3181 = vmatprep.mubr.bf16.mxu0 %v399
        %3182 = vmatmul.mubr.bf16.gmra.mrb[0].mxu0 %v398
        %v3183 = vpop.f32.mrb[0].mxu0
        %v3184 = vadd.f32 %v3143, %v3183
        %v3185 = vpop.f32.mrb[0].mxu0
        %v3186 = vadd.f32 %v3145, %v3185
        %v3187 = vpop.f32.mrb[0].mxu0
        %v3188 = vpop.f32.mrb[0].mxu0
        %3189 = vdwg.mxu0
        %3190 = vmatprep.subr.bf16.mxu0 %v923
        %3191 = vmatpush1.bf16.msra.mxu0 %v922
        %3192 = vmatprep.subr.bf16.mxu0 %v931
        %3193 = vmatpush1.bf16.msra.mxu0 %v930
        %3194 = vmatprep.subr.bf16.mxu0 %v939
        %3195 = vmatpush1.bf16.msra.mxu0 %v938
        %3196 = vmatprep.subr.bf16.mxu0 %v947
        %3197 = vmatpush1.bf16.msra.mxu0 %v946
        %3198 = vmatprep.subr.bf16.mxu0 %v955
        %3199 = vmatpush1.bf16.msra.mxu0 %v954
        %3200 = vmatprep.subr.bf16.mxu0 %v963
        %3201 = vmatpush1.bf16.msra.mxu0 %v962
        %3202 = vmatprep.subr.bf16.mxu0 %v971
        %3203 = vmatpush1.bf16.msra.mxu0 %v970
        %3204 = vmatprep.subr.bf16.mxu0 %v979
        %3205 = vmatpush1.bf16.msra.mxu0 %v978
        %3206 = vmatprep.subr.bf16.mxu0 %v987
        %3207 = vmatpush1.bf16.msra.mxu0 %v986
        %3208 = vmatprep.subr.bf16.mxu0 %v995
        %3209 = vmatpush1.bf16.msra.mxu0 %v994
        %3210 = vmatprep.subr.bf16.mxu0 %v1003
        %3211 = vmatpush1.bf16.msra.mxu0 %v1002
        %3212 = vmatprep.subr.bf16.mxu0 %v1011
        %3213 = vmatpush1.bf16.msra.mxu0 %v1010
        %3214 = vmatprep.subr.bf16.mxu0 %v1019
        %3215 = vmatpush1.bf16.msra.mxu0 %v1018
        %3216 = vmatprep.subr.bf16.mxu0 %v1027
        %3217 = vmatpush1.bf16.msra.mxu0 %v1026
        %3218 = vmatprep.subr.bf16.mxu0 %v1035
        %3219 = vmatpush1.bf16.msra.mxu0 %v1034
        %3220 = vmatprep.subr.bf16.mxu0 %v1043
        %3221 = vmatpush1.bf16.msra.mxu0 %v1042
        %3222 = vmatprep.mubr.bf16.mxu0 %v401
        %3223 = vmatmul.mubr.bf16.gmra.mrb[0].mxu0 %v400
        %v3224 = vpop.f32.mrb[0].mxu0
        %v3225 = vadd.f32 %v3184, %v3224
        %v3226 = vpop.f32.mrb[0].mxu0
        %v3227 = vadd.f32 %v3186, %v3226
        %v3228 = vpop.f32.mrb[0].mxu0
        %v3229 = vpop.f32.mrb[0].mxu0
        %3230 = vdwg.mxu0
        %3231 = vmatprep.subr.bf16.mxu0 %v1051
        %3232 = vmatpush1.bf16.msra.mxu0 %v1050
        %3233 = vmatprep.subr.bf16.mxu0 %v1059
        %3234 = vmatpush1.bf16.msra.mxu0 %v1058
        %3235 = vmatprep.subr.bf16.mxu0 %v1067
        %3236 = vmatpush1.bf16.msra.mxu0 %v1066
        %3237 = vmatprep.subr.bf16.mxu0 %v1075
        %3238 = vmatpush1.bf16.msra.mxu0 %v1074
        %3239 = vmatprep.subr.bf16.mxu0 %v1083
        %3240 = vmatpush1.bf16.msra.mxu0 %v1082
        %3241 = vmatprep.subr.bf16.mxu0 %v1091
        %3242 = vmatpush1.bf16.msra.mxu0 %v1090
        %3243 = vmatprep.subr.bf16.mxu0 %v1099
        %3244 = vmatpush1.bf16.msra.mxu0 %v1098
        %3245 = vmatprep.subr.bf16.mxu0 %v1107
        %3246 = vmatpush1.bf16.msra.mxu0 %v1106
        %3247 = vmatprep.subr.bf16.mxu0 %v1115
        %3248 = vmatpush1.bf16.msra.mxu0 %v1114
        %3249 = vmatprep.subr.bf16.mxu0 %v1123
        %3250 = vmatpush1.bf16.msra.mxu0 %v1122
        %3251 = vmatprep.subr.bf16.mxu0 %v1131
        %3252 = vmatpush1.bf16.msra.mxu0 %v1130
        %3253 = vmatprep.subr.bf16.mxu0 %v1139
        %3254 = vmatpush1.bf16.msra.mxu0 %v1138
        %3255 = vmatprep.subr.bf16.mxu0 %v1147
        %3256 = vmatpush1.bf16.msra.mxu0 %v1146
        %3257 = vmatprep.subr.bf16.mxu0 %v1155
        %3258 = vmatpush1.bf16.msra.mxu0 %v1154
        %3259 = vmatprep.subr.bf16.mxu0 %v1163
        %3260 = vmatpush1.bf16.msra.mxu0 %v1162
        %3261 = vmatprep.subr.bf16.mxu0 %v1171
        %3262 = vmatpush1.bf16.msra.mxu0 %v1170
        %3263 = vmatprep.mubr.bf16.mxu0 %v403
        %3264 = vmatmul.mubr.bf16.gmra.mrb[0].mxu0 %v402
        %v3265 = vpop.f32.mrb[0].mxu0
        %v3266 = vadd.f32 %v3225, %v3265
        %v3267 = vpop.f32.mrb[0].mxu0
        %v3268 = vadd.f32 %v3227, %v3267
        %v3269 = vpop.f32.mrb[0].mxu0
        %v3270 = vpop.f32.mrb[0].mxu0
        %3271 = vdwg.mxu0
        %v3272 = vld [vmem:[%s266] sm:$0xff]
        %v3274 = vlaneseq
        %v3275 = vshrl.u32 %v3274, 7
        %v3276 = vsub.s32 0, %v3275
        %v3277 = vrot.slane %v3272, %v3276
        %v3278 = vlaneseq
        %v3279 = vshrl.u32 %v3278, 7
        %v3280 = vsub.s32 1, %v3279
        %v3281 = vrot.slane %v3272, %v3280
        %v3282 = vlaneseq
        %v3283 = vshrl.u32 %v3282, 7
        %v3284 = vsub.s32 2, %v3283
        %v3285 = vrot.slane %v3272, %v3284
        %v3286 = vlaneseq
        %v3287 = vshrl.u32 %v3286, 7
        %v3288 = vsub.s32 3, %v3287
        %v3289 = vrot.slane %v3272, %v3288
        %v3290 = vlaneseq
        %v3291 = vshrl.u32 %v3290, 7
        %v3292 = vsub.s32 4, %v3291
        %v3293 = vrot.slane %v3272, %v3292
        %v3294 = vlaneseq
        %v3295 = vshrl.u32 %v3294, 7
        %v3296 = vsub.s32 5, %v3295
        %v3297 = vrot.slane %v3272, %v3296
        %v3298 = vlaneseq
        %v3299 = vshrl.u32 %v3298, 7
        %v3300 = vsub.s32 6, %v3299
        %v3301 = vrot.slane %v3272, %v3300
        %v3302 = vlaneseq
        %v3303 = vshrl.u32 %v3302, 7
        %v3304 = vsub.s32 7, %v3303
        %v3305 = vrot.slane %v3272, %v3304
        %v3314 = vmul.f32 %v2774, %v3277
        %v3315 = vmul.f32 %v2776, %v3281
        %v3316 = vmul.f32 %v2938, %v3285
        %v3317 = vmul.f32 %v2940, %v3289
        %v3318 = vmul.f32 %v3102, %v3293
        %v3319 = vmul.f32 %v3104, %v3297
        %v3320 = vmul.f32 %v3266, %v3301
        %v3321 = vmul.f32 %v3268, %v3305
        %v3322 = vld [vmem:[%s275] sm:$0xff]
        %v3324 = vlaneseq
        %v3325 = vshrl.u32 %v3324, 7
        %v3326 = vsub.s32 0, %v3325
        %v3327 = vrot.slane %v3322, %v3326
        %v3328 = vlaneseq
        %v3329 = vshrl.u32 %v3328, 7
        %v3330 = vsub.s32 1, %v3329
        %v3331 = vrot.slane %v3322, %v3330
        %v3332 = vlaneseq
        %v3333 = vshrl.u32 %v3332, 7
        %v3334 = vsub.s32 2, %v3333
        %v3335 = vrot.slane %v3322, %v3334
        %v3336 = vlaneseq
        %v3337 = vshrl.u32 %v3336, 7
        %v3338 = vsub.s32 3, %v3337
        %v3339 = vrot.slane %v3322, %v3338
        %v3340 = vlaneseq
        %v3341 = vshrl.u32 %v3340, 7
        %v3342 = vsub.s32 4, %v3341
        %v3343 = vrot.slane %v3322, %v3342
        %v3344 = vlaneseq
        %v3345 = vshrl.u32 %v3344, 7
        %v3346 = vsub.s32 5, %v3345
        %v3347 = vrot.slane %v3322, %v3346
        %v3348 = vlaneseq
        %v3349 = vshrl.u32 %v3348, 7
        %v3350 = vsub.s32 6, %v3349
        %v3351 = vrot.slane %v3322, %v3350
        %v3352 = vlaneseq
        %v3353 = vshrl.u32 %v3352, 7
        %v3354 = vsub.s32 7, %v3353
        %v3355 = vrot.slane %v3322, %v3354
        %v3364 = vadd.f32 %v3314, %v3327
        %v3365 = vadd.f32 %v3315, %v3331
        %v3366 = vadd.f32 %v3316, %v3335
        %v3367 = vadd.f32 %v3317, %v3339
        %v3368 = vadd.f32 %v3318, %v3343
        %v3369 = vadd.f32 %v3319, %v3347
        %v3370 = vadd.f32 %v3320, %v3351
        %v3371 = vadd.f32 %v3321, %v3355
        %v3372 = vtanh.pop %v3364
        %v3373 = vtanh.pop %v3365
        %v3374 = vtanh.pop %v3366
        %v3375 = vtanh.pop %v3367
        %v3376 = vtanh.pop %v3368
        %v3377 = vtanh.pop %v3369
        %v3378 = vtanh.pop %v3370
        %v3379 = vtanh.pop %v3371
        %s3380 = sadd.s32 %s384, %s26
        %s3381 = smul.u32 %s3380, 8
        %s3382 = smul.addr %s3381, 8
        %s3383 = scalar_lea.vmem [#allocation2], %s3382
        %3384 = vst [vmem:[%s3383] sm:$0xff] %v3372
        %3385 = vst [vmem:[%s3383 + $0x8] sm:$0xff] %v3373
        %3386 = vst [vmem:[%s3383 + $0x10] sm:$0xff] %v3374
        %3387 = vst [vmem:[%s3383 + $0x18] sm:$0xff] %v3375
        %3388 = vst [vmem:[%s3383 + $0x20] sm:$0xff] %v3376
        %3389 = vst [vmem:[%s3383 + $0x28] sm:$0xff] %v3377
        %3390 = vst [vmem:[%s3383 + $0x30] sm:$0xff] %v3378
        %3391 = vst [vmem:[%s3383 + $0x38] sm:$0xff] %v3379
        %p3392 = scmp.eq.s32.totalorder %s25, 6
        // Predicated region
        $region53: #{net_forward.1} parent=35 // pred_check
          %p3393 = pneg %p3392
        $region54: #{net_forward.1} parent=35 // pred_check_branch
          %3395 = sbr.rel (%p3393) target = $region56
        $region55: #{net_forward.1} parent=35 // pred_region
          %3396 = vst [vmem:[%s317] sm:$0xff] %v3364
          %3397 = vst [vmem:[%s317 + $0x8] sm:$0xff] %v3365
          %3398 = vst [vmem:[%s317 + $0x10] sm:$0xff] %v3366
          %3399 = vst [vmem:[%s317 + $0x18] sm:$0xff] %v3367
          %3400 = vst [vmem:[%s317 + $0x20] sm:$0xff] %v3368
          %3401 = vst [vmem:[%s317 + $0x28] sm:$0xff] %v3369
          %3402 = vst [vmem:[%s317 + $0x30] sm:$0xff] %v3370
          %3403 = vst [vmem:[%s317 + $0x38] sm:$0xff] %v3371
        $region56: #{net_forward.1} parent=35 // pred_fallthru
          _
        %s3404 = smul.u32 8, %s26
        %p3405 = scmp.lt.s32.totalorder %s3404, 15
        %s3406 = scalar_select %p3405, %s3404, 15
        %s3407 = smul.addr %s3406, 8
        %s3408 = scalar_lea.vmem %s4, %s3407
        // Predicated region
        $region57: #{net_forward.1} parent=35 // pred_check
          %p3409 = pneg %p156
        $region58: #{net_forward.1} parent=35 // pred_check_branch
          %3411 = sbr.rel (%p3409) target = $region60
        $region59: #{net_forward.1} parent=35 // pred_region
          %s3412 = smul.u32 8, %s26
        $region60: #{net_forward.1} parent=35 // pred_fallthru
          _
      $region36: #{net_forward.1} parent=5 // pred_fallthru
        _
      %p3413 = scmp.le.s32.totalorder 2, %s16
      // Predicated region
      $region61: #{net_forward.1} parent=5 // pred_check
        %p3414 = pneg %p3413
      $region62: #{net_forward.1} parent=5 // pred_check_branch
        %3416 = sbr.rel (%p3414) target = $region64
      $region63: #{net_forward.1} parent=5 // pred_region
        %s3417 = ssub.s32 %s16, 2
        // Predicated region
        $region65: #{net_forward.1} parent=63 // pred_check
          %p3418 = pneg %p162
        $region66: #{net_forward.1} parent=63 // pred_check_branch
          %3420 = sbr.rel (%p3418) target = $region68
        $region67: #{net_forward.1} parent=63 // pred_region
          %s3421 = smul.u32 8, %s28
          %p3422 = scmp.lt.s32.totalorder %s3421, 15
          %s3423 = scalar_select %p3422, %s3421, 15
          %s3424 = smul.addr %s3423, 8
          %s3425 = scalar_lea.vmem %s4, %s3424
        $region68: #{net_forward.1} parent=63 // pred_fallthru
          _
      $region64: #{net_forward.1} parent=5 // pred_fallthru
        _
    $region6: #{net_forward.1} parent=1 // loop_footer
      %s20 = sadd.s32 1, %s16
    $region7: #{net_forward.1} parent=1 // loop_footer_branch
      %15 = sbr.rel target = $region3
    $region8: #{net_forward.1} parent=1 // loop_exit
      _
    %3426 = vsyncpa [#allocation4], 1
    %s3427 = scalar_lea.sflag [#allocation4], 1
    %3428 = vsyncpa %s3427, 1
    %3429 = vsyncpa [#allocation6], 1
    %s3430 = scalar_lea.sflag [#allocation6], 1
    %3431 = vsyncpa %s3430, 1

</llo_original>
